<compile_context>
chip_gen: v7x
topology: tpu7x:2x2x1
jax: 0.10.0
libtpu: 0.0.40
codegen_flags: <defaults>
</compile_context>

<pallas_src>
import functools

import jax
import jax.numpy as jnp
import numpy as np
from jax.experimental import pallas as pl
from jax.experimental.pallas import tpu as pltpu

LANE_PAD = 128  # pad the 2-channel conv3 output up to a full lane block


# ----------------------------------------------------------------------------
# Kernel 1: ConvTranspose2d(512, 512, kernel=(1,4), stride=(1,4), bias=False)
# With stride == kernel this is a pure per-position matmul:
#   out[b, co, 4*w4 + k] = sum_ci  s2[b, ci, w4] * Wt[ci, co, k]
# We compute  s2_flat @ Wt_flat  with Wt_flat columns ordered (k, co); the
# (B*W4, 4*Cout) -> (B*W, Cout) interleave is then a free row-major reshape.
# ----------------------------------------------------------------------------
def _up2_kernel(s2_ref, wt_ref, o_ref):
    o_ref[...] = jnp.dot(s2_ref[...], wt_ref[...],
                         preferred_element_type=jnp.float32).astype(o_ref.dtype)


# ----------------------------------------------------------------------------
# im2col for a (1,3) conv with pad (0,1) along W, batch folded into rows.
# col[r, k*cin + c] = x[r + k - 1, c] within each batch's row range, zero outside.
# ----------------------------------------------------------------------------
def _fill_im2col(col_ref, srcs, cin, n_batch, w_len):
    """col_ref: (n_batch*w_len, 3*cin) scratch. srcs: list of (ref, channel_offset)."""
    bw = n_batch * w_len
    for src_ref, off in srcs:
        cw = src_ref.shape[-1]
        # tap k = 1 : x[w]
        col_ref[pl.ds(0, bw), pl.ds(cin + off, cw)] = src_ref[...]
        # tap k = 0 : x[w-1]
        col_ref[pl.ds(1, bw - 1), pl.ds(off, cw)] = src_ref[pl.ds(0, bw - 1), :]
        # tap k = 2 : x[w+1]
        col_ref[pl.ds(0, bw - 1), pl.ds(2 * cin + off, cw)] = src_ref[pl.ds(1, bw - 1), :]
    # zero the per-batch boundary rows of the shifted taps
    zrow = jnp.zeros((1, cin), dtype=col_ref.dtype)
    for b in range(n_batch):
        col_ref[pl.ds(b * w_len, 1), pl.ds(0, cin)] = zrow                      # w == 0
        col_ref[pl.ds((b + 1) * w_len - 1, 1), pl.ds(2 * cin, cin)] = zrow      # w == W-1


# ----------------------------------------------------------------------------
# Kernel 2: channel concat + three Conv2d(*, *, (1,3), stride 1, pad (0,1)) layers.
# Each conv is a single big-K matmul: (B*W, 3*Cin) @ (3*Cin, Cout), bf16 operands,
# f32 MXU accumulation.  conv3's Cout is pre-padded to 128 for a lane-dense store.
# ----------------------------------------------------------------------------
def _fusion_kernel(s1_ref, up2_ref, s3_ref, wf1_ref, wf2_ref, wf3_ref,
                   o_ref, col_a, col_b, h_buf, *, n_batch, w_len):
    C1 = s1_ref.shape[-1]
    C2 = up2_ref.shape[-1]
    Cf = C1 + C2 + s3_ref.shape[-1]
    Cm = h_buf.shape[-1]

    # ---- fusion: Conv2d(2048, 512, (1,3), pad (0,1)) on concat([s1, up2, s3], ch)
    _fill_im2col(col_a, [(s1_ref, 0), (up2_ref, C1), (s3_ref, C1 + C2)],
                 Cf, n_batch, w_len)
    h1 = jnp.dot(col_a[...], wf1_ref[...], preferred_element_type=jnp.float32)
    h_buf[...] = h1.astype(h_buf.dtype)

    # ---- fusion2: Conv2d(512, 512, (1,3), pad (0,1))
    _fill_im2col(col_b, [(h_buf, 0)], Cm, n_batch, w_len)
    h2 = jnp.dot(col_b[...], wf2_ref[...], preferred_element_type=jnp.float32)
    h_buf[...] = h2.astype(h_buf.dtype)

    # ---- fusion3: Conv2d(512, 2, (1,3), pad (0,1)), Cout padded to 128 lanes
    _fill_im2col(col_b, [(h_buf, 0)], Cm, n_batch, w_len)
    h3 = jnp.dot(col_b[...], wf3_ref[...], preferred_element_type=jnp.float32)
    o_ref[...] = h3


# ----------------------------------------------------------------------------
# One-time weight prepacking (hoisted out of the forward path).
# ----------------------------------------------------------------------------
def pack_fusion_params(params):
    bf16 = jnp.bfloat16
    w_up2 = params["up2"]                                   # (Cin, Cout, 1, 4)
    cin_u, cout_u = w_up2.shape[0], w_up2.shape[1]
    # columns ordered (k, co) so the stride-4 interleave is a contiguous reshape
    wt_flat = jnp.transpose(w_up2[:, :, 0, :], (0, 2, 1)).reshape(
        cin_u, 4 * cout_u).astype(bf16)

    def conv_w(w, pad_out_to=None):                         # (Cout, Cin, 1, 3) -> (3*Cin, Cout)
        co, ci = w.shape[0], w.shape[1]
        wk = jnp.transpose(w[:, :, 0, :], (2, 1, 0)).reshape(3 * ci, co)
        if pad_out_to is not None and pad_out_to > co:
            wk = jnp.pad(wk, ((0, 0), (0, pad_out_to - co)))
        return wk.astype(bf16)

    return {
        "wt_flat": wt_flat,
        "wf1": conv_w(params["fusion"]),
        "wf2": conv_w(params["fusion2"]),
        "wf3": conv_w(params["fusion3"], pad_out_to=LANE_PAD),
        "n_out": int(params["fusion3"].shape[0]),           # = 2
    }


# ----------------------------------------------------------------------------
# Wrapper: PyTorch-equivalent Fusion.forward (inputs NCHW with H == 1).
# ----------------------------------------------------------------------------
def fusion_forward(side_out1, side_out2, side_out3, packed):
    B, C1, _, W = side_out1.shape
    _, C2, _, W4 = side_out2.shape
    _, C3, _, _ = side_out3.shape
    assert W == 4 * W4, "up2 has stride (1,4): side_out1 width must be 4x side_out2"

    bf16 = jnp.bfloat16
    # NCHW (H == 1) -> (B*W, C) rows, bf16 for the MXU
    s1 = jnp.transpose(side_out1[:, :, 0, :], (0, 2, 1)).reshape(B * W, C1).astype(bf16)
    s2 = jnp.transpose(side_out2[:, :, 0, :], (0, 2, 1)).reshape(B * W4, C2).astype(bf16)
    s3 = jnp.transpose(side_out3[:, :, 0, :], (0, 2, 1)).reshape(B * W, C3).astype(bf16)

    wt_flat = packed["wt_flat"]
    Cu = wt_flat.shape[1] // 4

    # ConvTranspose2d(512,512,(1,4),(1,4)) as one grid-less bf16 matmul
    up2_raw = pl.pallas_call(
        _up2_kernel,
        out_shape=jax.ShapeDtypeStruct((B * W4, 4 * Cu), bf16),
    )(s2, wt_flat)
    xu = up2_raw.reshape(B * W, Cu)          # contiguous -> pure layout reshape

    wf1, wf2, wf3 = packed["wf1"], packed["wf2"], packed["wf3"]
    Cf = C1 + Cu + C3
    Cm = wf2.shape[1]
    Cop = wf3.shape[1]
    assert wf1.shape[0] == 3 * Cf and wf2.shape[0] == 3 * Cm and wf3.shape[0] == 3 * Cm

    out_pad = pl.pallas_call(
        functools.partial(_fusion_kernel, n_batch=B, w_len=W),
        out_shape=jax.ShapeDtypeStruct((B * W, Cop), jnp.float32),
        scratch_shapes=[pltpu.VMEM((B * W, 3 * Cf), bf16),   # im2col for conv1
                        pltpu.VMEM((B * W, 3 * Cm), bf16),   # im2col for conv2/conv3
                        pltpu.VMEM((B * W, Cm), bf16)],      # hidden activations
        compiler_params=pltpu.CompilerParams(vmem_limit_bytes=32 * 1024 * 1024),
    )(s1, xu, s3, wf1, wf2, wf3)

    n_out = packed["n_out"]
    # (B*W, 128)[:, :2] -> (B, W, 2) -> (B, 2, W)  ==  fuse.view(-1, num, local_l).squeeze(1)
    out = out_pad[:, :n_out].reshape(B, W, n_out)
    return jnp.transpose(out, (0, 2, 1))


# ----------------------------------------------------------------------------
# Pure-JAX reference (f32, HIGHEST precision) for correctness checking
# ----------------------------------------------------------------------------
def reference(side_out1, side_out2, side_out3, params):
    hi = jax.lax.Precision.HIGHEST
    w_up2 = params["up2"]                                   # (Cin, Cout, 1, 4)
    s2 = side_out2[:, :, 0, :]                              # (B, Cin, W4)
    up2 = jnp.einsum("bcw,cok->bowk", s2, w_up2[:, :, 0, :], precision=hi)
    B, Co2, W4, K = up2.shape
    up2 = up2.reshape(B, Co2, W4 * K)[:, :, None, :]        # NCHW

    fuse = jnp.concatenate([side_out1, up2, side_out3], axis=1)

    def conv1x3(x, w):                                      # x NCHW (H==1), w (Co,Ci,1,3)
        xw = x[:, :, 0, :]
        Wd = xw.shape[-1]
        xp = jnp.pad(xw, ((0, 0), (0, 0), (1, 1)))
        out = sum(jnp.einsum("bcw,oc->bow", xp[:, :, k:k + Wd], w[:, :, 0, k],
                             precision=hi) for k in range(3))
        return out[:, :, None, :]

    fuse = conv1x3(fuse, params["fusion"])
    fuse = conv1x3(fuse, params["fusion2"])
    fuse = conv1x3(fuse, params["fusion3"])
    return fuse[:, :, 0, :]                                 # (B, 2, W)


def init_params(key):
    ks = jax.random.split(key, 4)

    def he(k, shape, fan_in):
        return jax.random.normal(k, shape, jnp.float32) / np.sqrt(fan_in)

    return {
        # ConvTranspose2d(512, 512, (1,4), (1,4)) weight: (Cin, Cout, 1, 4)
        "up2": he(ks[0], (512, 512, 1, 4), 512),
        # Conv2d weights: (Cout, Cin, 1, 3)
        "fusion": he(ks[1], (512, 2048, 1, 3), 2048 * 3),
        "fusion2": he(ks[2], (512, 512, 1, 3), 512 * 3),
        "fusion3": he(ks[3], (2, 512, 1, 3), 512 * 3),
    }


if __name__ == "__main__":
    key = jax.random.PRNGKey(0)
    kp, k1, k2, k3 = jax.random.split(key, 4)
    params = init_params(kp)
    packed = pack_fusion_params(params)      # one-time weight prepack (hoisted)

    B, W = 2, 32                             # small spatial extent
    side_out1 = jax.random.normal(k1, (B, 512, 1, W), jnp.float32)
    side_out2 = jax.random.normal(k2, (B, 512, 1, W // 4), jnp.float32)
    side_out3 = jax.random.normal(k3, (B, 1024, 1, W), jnp.float32)

    out = fusion_forward(side_out1, side_out2, side_out3, packed)
    out = jax.block_until_ready(out)

    ref = reference(side_out1, side_out2, side_out3, params)
    # bf16 operands / f32 accumulation vs f32 HIGHEST reference -> loose tolerance
    np.testing.assert_allclose(np.asarray(out), np.asarray(ref), rtol=5e-2, atol=5e-2)
    print("KERNEL_OK")
</pallas_src>

<mosaic_0001>
module attributes {stable_mosaic.version = 11 : i64} {
  func.func @_up2_kernel(%arg0: memref<16x512xbf16, #tpu.memory_space<vmem>>, %arg1: memref<512x2048xbf16, #tpu.memory_space<vmem>>, %arg2: memref<16x2048xbf16, #tpu.memory_space<vmem>>) attributes {dimension_semantics = [], scalar_prefetch = 0 : i64, scratch_operands = 0 : i64, tpu.core_type = #tpu.core_type<tc>} {
    %c0 = arith.constant 0 : index
    %c0_0 = arith.constant 0 : index
    %0 = vector.load %arg0[%c0, %c0_0] : memref<16x512xbf16, #tpu.memory_space<vmem>>, vector<16x512xbf16>
    %c0_1 = arith.constant 0 : index
    %c0_2 = arith.constant 0 : index
    %1 = vector.load %arg1[%c0_1, %c0_2] : memref<512x2048xbf16, #tpu.memory_space<vmem>>, vector<512x2048xbf16>
    %cst = arith.constant dense<0.000000e+00> : vector<16x2048xf32>
    %2 = tpu.matmul %0, %1, %cst {dimension_numbers = #tpu.dot_dimension_numbers<[1], [0], [0], [1], [0, 0, 1, 1], [], []>} : vector<16x512xbf16>, vector<512x2048xbf16>, vector<16x2048xf32> -> vector<16x2048xf32>
    %3 = arith.truncf %2 : vector<16x2048xf32> to vector<16x2048xbf16>
    %c0_3 = arith.constant 0 : index
    %c0_4 = arith.constant 0 : index
    %4 = vector.load %arg2[%c0_3, %c0_4] : memref<16x2048xbf16, #tpu.memory_space<vmem>>, vector<16x2048xbf16>
    tpu.vector_store %arg2[%c0_3, %c0_4], %3 {strides = array<i32>} : memref<16x2048xbf16, #tpu.memory_space<vmem>>, vector<16x2048xbf16>,
    return
  }
}

</mosaic_0001>

<llo_original>
// kernel: tpu_custom_call.1
$region0: #{tpu_custom_call.1}
  #allocation0 [shape = 'u32[]', space=smem, size = 0x4, offset = 0x4, fixed_abs, tag = 'smem constant byte address 0x4 - core index']
  #allocation1 [shape = 'u32[144,128]{1,0:T(1,128)}', space=vmem, size = 0x12000, scoped, tag = 'internal scratch']
  %s0 = inlined_call_operand.hbm [shape: bf16[16,512], index: 0, kind: input, shape index: {}]
  %s1 = inlined_call_operand.hbm [shape: bf16[512,2048], index: 1, kind: input, shape index: {}]
  %s2 = inlined_call_operand.hbm [shape: bf16[16,2048], index: 2, kind: output, shape index: {}]
  %s3 = sld [smem:[#allocation0]]
  $region26: #{tpu_custom_call.1} parent=0
    _
  %s5 = ssub.s32 1, %s3
  %s6 = scalar_select 0, %s5, %s3
  $region1: #{tpu_custom_call.1} parent=0
    #allocation2 [shape = 'u8[16384]{0}', space=vmem, size = 0x4000, scoped, tag = 'input window, operand 0, single buffered']
    #allocation3 [shape = 's32[1]{0}', space=sflag, size = 0x4, scoped, tag = 'scoped memory for tpu_custom_call.1']
    #allocation4 [shape = 's32[1]{0}', space=sflag, size = 0x4, scoped, tag = 'scoped memory for tpu_custom_call.1']
    #allocation5 [shape = 'u8[2097152]{0}', space=vmem, size = 0x200000, scoped, tag = 'input window, operand 1, single buffered']
    #allocation6 [shape = 's32[1]{0}', space=sflag, size = 0x4, scoped, tag = 'scoped memory for tpu_custom_call.1']
    #allocation7 [shape = 'u8[65536]{0}', space=vmem, size = 0x10000, scoped, tag = 'output window, operand 0, single buffered']
    %7 = vsyncpa [#allocation3], 0
    %8 = vsyncpa [#allocation6], 0
    %9 = vsyncpa [#allocation4], 0
    // Predicated region
    $region2: #{tpu_custom_call.1} parent=1 // pred_check
      _
    $region3: #{tpu_custom_call.1} parent=1 // pred_check_branch
      %11 = sbr.rel (0) target = $region5
    $region4: #{tpu_custom_call.1} parent=1 // pred_region
      %s13 = ssub.s32 512, 512
      %14 = vsyncadd [#allocation3], %s13
      %s15 = sshll.u32 [#allocation2], 4
      %s16 = int_to_ptr.vmem [resolvable:$true] %s15
      %21 = dma.hbm_to_vmem [thread:$0]  %s0, 512, %s16, [#allocation3], 256, 256, 16
    $region5: #{tpu_custom_call.1} parent=1 // pred_fallthru
      _
    // Predicated region
    $region6: #{tpu_custom_call.1} parent=1 // pred_check
      _
    $region7: #{tpu_custom_call.1} parent=1 // pred_check_branch
      %23 = sbr.rel (0) target = $region9
    $region8: #{tpu_custom_call.1} parent=1 // pred_region
      %s25 = ssub.s32 65536, 65536
      %26 = vsyncadd [#allocation6], %s25
      %s27 = sshll.u32 [#allocation5], 4
      %s28 = int_to_ptr.vmem [resolvable:$true] %s27
      %33 = dma.hbm_to_vmem [thread:$0]  %s1, 65536, %s28, [#allocation6], 1024, 1024, 64
    $region9: #{tpu_custom_call.1} parent=1 // pred_fallthru
      _
    // Predicated region
    $region10: #{tpu_custom_call.1} parent=1 // pred_check
      _
    $region11: #{tpu_custom_call.1} parent=1 // pred_check_branch
      %35 = sbr.rel (0) target = $region13
    $region12: #{tpu_custom_call.1} parent=1 // pred_region
      %36 = dma.done [#allocation3], 512
    $region13: #{tpu_custom_call.1} parent=1 // pred_fallthru
      _
    // Predicated region
    $region14: #{tpu_custom_call.1} parent=1 // pred_check
      _
    $region15: #{tpu_custom_call.1} parent=1 // pred_check_branch
      %38 = sbr.rel (0) target = $region17
    $region16: #{tpu_custom_call.1} parent=1 // pred_region
      %39 = dma.done [#allocation6], 65536
    $region17: #{tpu_custom_call.1} parent=1 // pred_fallthru
      _
    %v40 = vld [vmem:[#allocation2] sm:$0xff]
    %v41 = vld [vmem:[#allocation2 + $0x8] sm:$0xff]
    %v42 = vld [vmem:[#allocation2 + $0x10] sm:$0xff]
    %v43 = vld [vmem:[#allocation2 + $0x18] sm:$0xff]
    %v44 = vld [vmem:[#allocation5] sm:$0xff]
    %v45 = vld [vmem:[#allocation5 + $0x8] sm:$0xff]
    %v46 = vld [vmem:[#allocation5 + $0x10] sm:$0xff]
    %v47 = vld [vmem:[#allocation5 + $0x18] sm:$0xff]
    %v48 = vld [vmem:[#allocation5 + $0x20] sm:$0xff]
    %v49 = vld [vmem:[#allocation5 + $0x28] sm:$0xff]
    %v50 = vld [vmem:[#allocation5 + $0x30] sm:$0xff]
    %v51 = vld [vmem:[#allocation5 + $0x38] sm:$0xff]
    %v52 = vld [vmem:[#allocation5 + $0x40] sm:$0xff]
    %v53 = vld [vmem:[#allocation5 + $0x48] sm:$0xff]
    %v54 = vld [vmem:[#allocation5 + $0x50] sm:$0xff]
    %v55 = vld [vmem:[#allocation5 + $0x58] sm:$0xff]
    %v56 = vld [vmem:[#allocation5 + $0x60] sm:$0xff]
    %v57 = vld [vmem:[#allocation5 + $0x68] sm:$0xff]
    %v58 = vld [vmem:[#allocation5 + $0x70] sm:$0xff]
    %v59 = vld [vmem:[#allocation5 + $0x78] sm:$0xff]
    %v60 = vld [vmem:[#allocation5 + $0x80] sm:$0xff]
    %v61 = vld [vmem:[#allocation5 + $0x88] sm:$0xff]
    %v62 = vld [vmem:[#allocation5 + $0x90] sm:$0xff]
    %v63 = vld [vmem:[#allocation5 + $0x98] sm:$0xff]
    %v64 = vld [vmem:[#allocation5 + $0xa0] sm:$0xff]
    %v65 = vld [vmem:[#allocation5 + $0xa8] sm:$0xff]
    %v66 = vld [vmem:[#allocation5 + $0xb0] sm:$0xff]
    %v67 = vld [vmem:[#allocation5 + $0xb8] sm:$0xff]
    %v68 = vld [vmem:[#allocation5 + $0xc0] sm:$0xff]
    %v69 = vld [vmem:[#allocation5 + $0xc8] sm:$0xff]
    %v70 = vld [vmem:[#allocation5 + $0xd0] sm:$0xff]
    %v71 = vld [vmem:[#allocation5 + $0xd8] sm:$0xff]
    %v72 = vld [vmem:[#allocation5 + $0xe0] sm:$0xff]
    %v73 = vld [vmem:[#allocation5 + $0xe8] sm:$0xff]
    %v74 = vld [vmem:[#allocation5 + $0xf0] sm:$0xff]
    %v75 = vld [vmem:[#allocation5 + $0xf8] sm:$0xff]
    %v76 = vld [vmem:[#allocation5 + $0x100] sm:$0xff]
    %v77 = vld [vmem:[#allocation5 + $0x108] sm:$0xff]
    %v78 = vld [vmem:[#allocation5 + $0x110] sm:$0xff]
    %v79 = vld [vmem:[#allocation5 + $0x118] sm:$0xff]
    %v80 = vld [vmem:[#allocation5 + $0x120] sm:$0xff]
    %v81 = vld [vmem:[#allocation5 + $0x128] sm:$0xff]
    %v82 = vld [vmem:[#allocation5 + $0x130] sm:$0xff]
    %v83 = vld [vmem:[#allocation5 + $0x138] sm:$0xff]
    %v84 = vld [vmem:[#allocation5 + $0x140] sm:$0xff]
    %v85 = vld [vmem:[#allocation5 + $0x148] sm:$0xff]
    %v86 = vld [vmem:[#allocation5 + $0x150] sm:$0xff]
    %v87 = vld [vmem:[#allocation5 + $0x158] sm:$0xff]
    %v88 = vld [vmem:[#allocation5 + $0x160] sm:$0xff]
    %v89 = vld [vmem:[#allocation5 + $0x168] sm:$0xff]
    %v90 = vld [vmem:[#allocation5 + $0x170] sm:$0xff]
    %v91 = vld [vmem:[#allocation5 + $0x178] sm:$0xff]
    %v92 = vld [vmem:[#allocation5 + $0x180] sm:$0xff]
    %v93 = vld [vmem:[#allocation5 + $0x188] sm:$0xff]
    %v94 = vld [vmem:[#allocation5 + $0x190] sm:$0xff]
    %v95 = vld [vmem:[#allocation5 + $0x198] sm:$0xff]
    %v96 = vld [vmem:[#allocation5 + $0x1a0] sm:$0xff]
    %v97 = vld [vmem:[#allocation5 + $0x1a8] sm:$0xff]
    %v98 = vld [vmem:[#allocation5 + $0x1b0] sm:$0xff]
    %v99 = vld [vmem:[#allocation5 + $0x1b8] sm:$0xff]
    %v100 = vld [vmem:[#allocation5 + $0x1c0] sm:$0xff]
    %v101 = vld [vmem:[#allocation5 + $0x1c8] sm:$0xff]
    %v102 = vld [vmem:[#allocation5 + $0x1d0] sm:$0xff]
    %v103 = vld [vmem:[#allocation5 + $0x1d8] sm:$0xff]
    %v104 = vld [vmem:[#allocation5 + $0x1e0] sm:$0xff]
    %v105 = vld [vmem:[#allocation5 + $0x1e8] sm:$0xff]
    %v106 = vld [vmem:[#allocation5 + $0x1f0] sm:$0xff]
    %v107 = vld [vmem:[#allocation5 + $0x1f8] sm:$0xff]
    %v108 = vld [vmem:[#allocation5 + $0x200] sm:$0xff]
    %v109 = vld [vmem:[#allocation5 + $0x208] sm:$0xff]
    %v110 = vld [vmem:[#allocation5 + $0x210] sm:$0xff]
    %v111 = vld [vmem:[#allocation5 + $0x218] sm:$0xff]
    %v112 = vld [vmem:[#allocation5 + $0x220] sm:$0xff]
    %v113 = vld [vmem:[#allocation5 + $0x228] sm:$0xff]
    %v114 = vld [vmem:[#allocation5 + $0x230] sm:$0xff]
    %v115 = vld [vmem:[#allocation5 + $0x238] sm:$0xff]
    %v116 = vld [vmem:[#allocation5 + $0x240] sm:$0xff]
    %v117 = vld [vmem:[#allocation5 + $0x248] sm:$0xff]
    %v118 = vld [vmem:[#allocation5 + $0x250] sm:$0xff]
    %v119 = vld [vmem:[#allocation5 + $0x258] sm:$0xff]
    %v120 = vld [vmem:[#allocation5 + $0x260] sm:$0xff]
    %v121 = vld [vmem:[#allocation5 + $0x268] sm:$0xff]
    %v122 = vld [vmem:[#allocation5 + $0x270] sm:$0xff]
    %v123 = vld [vmem:[#allocation5 + $0x278] sm:$0xff]
    %v124 = vld [vmem:[#allocation5 + $0x280] sm:$0xff]
    %v125 = vld [vmem:[#allocation5 + $0x288] sm:$0xff]
    %v126 = vld [vmem:[#allocation5 + $0x290] sm:$0xff]
    %v127 = vld [vmem:[#allocation5 + $0x298] sm:$0xff]
    %v128 = vld [vmem:[#allocation5 + $0x2a0] sm:$0xff]
    %v129 = vld [vmem:[#allocation5 + $0x2a8] sm:$0xff]
    %v130 = vld [vmem:[#allocation5 + $0x2b0] sm:$0xff]
    %v131 = vld [vmem:[#allocation5 + $0x2b8] sm:$0xff]
    %v132 = vld [vmem:[#allocation5 + $0x2c0] sm:$0xff]
    %v133 = vld [vmem:[#allocation5 + $0x2c8] sm:$0xff]
    %v134 = vld [vmem:[#allocation5 + $0x2d0] sm:$0xff]
    %v135 = vld [vmem:[#allocation5 + $0x2d8] sm:$0xff]
    %v136 = vld [vmem:[#allocation5 + $0x2e0] sm:$0xff]
    %v137 = vld [vmem:[#allocation5 + $0x2e8] sm:$0xff]
    %v138 = vld [vmem:[#allocation5 + $0x2f0] sm:$0xff]
    %v139 = vld [vmem:[#allocation5 + $0x2f8] sm:$0xff]
    %v140 = vld [vmem:[#allocation5 + $0x300] sm:$0xff]
    %v141 = vld [vmem:[#allocation5 + $0x308] sm:$0xff]
    %v142 = vld [vmem:[#allocation5 + $0x310] sm:$0xff]
    %v143 = vld [vmem:[#allocation5 + $0x318] sm:$0xff]
    %v144 = vld [vmem:[#allocation5 + $0x320] sm:$0xff]
    %v145 = vld [vmem:[#allocation5 + $0x328] sm:$0xff]
    %v146 = vld [vmem:[#allocation5 + $0x330] sm:$0xff]
    %v147 = vld [vmem:[#allocation5 + $0x338] sm:$0xff]
    %v148 = vld [vmem:[#allocation5 + $0x340] sm:$0xff]
    %v149 = vld [vmem:[#allocation5 + $0x348] sm:$0xff]
    %v150 = vld [vmem:[#allocation5 + $0x350] sm:$0xff]
    %v151 = vld [vmem:[#allocation5 + $0x358] sm:$0xff]
    %v152 = vld [vmem:[#allocation5 + $0x360] sm:$0xff]
    %v153 = vld [vmem:[#allocation5 + $0x368] sm:$0xff]
    %v154 = vld [vmem:[#allocation5 + $0x370] sm:$0xff]
    %v155 = vld [vmem:[#allocation5 + $0x378] sm:$0xff]
    %v156 = vld [vmem:[#allocation5 + $0x380] sm:$0xff]
    %v157 = vld [vmem:[#allocation5 + $0x388] sm:$0xff]
    %v158 = vld [vmem:[#allocation5 + $0x390] sm:$0xff]
    %v159 = vld [vmem:[#allocation5 + $0x398] sm:$0xff]
    %v160 = vld [vmem:[#allocation5 + $0x3a0] sm:$0xff]
    %v161 = vld [vmem:[#allocation5 + $0x3a8] sm:$0xff]
    %v162 = vld [vmem:[#allocation5 + $0x3b0] sm:$0xff]
    %v163 = vld [vmem:[#allocation5 + $0x3b8] sm:$0xff]
    %v164 = vld [vmem:[#allocation5 + $0x3c0] sm:$0xff]
    %v165 = vld [vmem:[#allocation5 + $0x3c8] sm:$0xff]
    %v166 = vld [vmem:[#allocation5 + $0x3d0] sm:$0xff]
    %v167 = vld [vmem:[#allocation5 + $0x3d8] sm:$0xff]
    %v168 = vld [vmem:[#allocation5 + $0x3e0] sm:$0xff]
    %v169 = vld [vmem:[#allocation5 + $0x3e8] sm:$0xff]
    %v170 = vld [vmem:[#allocation5 + $0x3f0] sm:$0xff]
    %v171 = vld [vmem:[#allocation5 + $0x3f8] sm:$0xff]
    %v172 = vld [vmem:[#allocation5 + $0x400] sm:$0xff]
    %v173 = vld [vmem:[#allocation5 + $0x408] sm:$0xff]
    %v174 = vld [vmem:[#allocation5 + $0x410] sm:$0xff]
    %v175 = vld [vmem:[#allocation5 + $0x418] sm:$0xff]
    %v176 = vld [vmem:[#allocation5 + $0x420] sm:$0xff]
    %v177 = vld [vmem:[#allocation5 + $0x428] sm:$0xff]
    %v178 = vld [vmem:[#allocation5 + $0x430] sm:$0xff]
    %v179 = vld [vmem:[#allocation5 + $0x438] sm:$0xff]
    %v180 = vld [vmem:[#allocation5 + $0x440] sm:$0xff]
    %v181 = vld [vmem:[#allocation5 + $0x448] sm:$0xff]
    %v182 = vld [vmem:[#allocation5 + $0x450] sm:$0xff]
    %v183 = vld [vmem:[#allocation5 + $0x458] sm:$0xff]
    %v184 = vld [vmem:[#allocation5 + $0x460] sm:$0xff]
    %v185 = vld [vmem:[#allocation5 + $0x468] sm:$0xff]
    %v186 = vld [vmem:[#allocation5 + $0x470] sm:$0xff]
    %v187 = vld [vmem:[#allocation5 + $0x478] sm:$0xff]
    %v188 = vld [vmem:[#allocation5 + $0x480] sm:$0xff]
    %v189 = vld [vmem:[#allocation5 + $0x488] sm:$0xff]
    %v190 = vld [vmem:[#allocation5 + $0x490] sm:$0xff]
    %v191 = vld [vmem:[#allocation5 + $0x498] sm:$0xff]
    %v192 = vld [vmem:[#allocation5 + $0x4a0] sm:$0xff]
    %v193 = vld [vmem:[#allocation5 + $0x4a8] sm:$0xff]
    %v194 = vld [vmem:[#allocation5 + $0x4b0] sm:$0xff]
    %v195 = vld [vmem:[#allocation5 + $0x4b8] sm:$0xff]
    %v196 = vld [vmem:[#allocation5 + $0x4c0] sm:$0xff]
    %v197 = vld [vmem:[#allocation5 + $0x4c8] sm:$0xff]
    %v198 = vld [vmem:[#allocation5 + $0x4d0] sm:$0xff]
    %v199 = vld [vmem:[#allocation5 + $0x4d8] sm:$0xff]
    %v200 = vld [vmem:[#allocation5 + $0x4e0] sm:$0xff]
    %v201 = vld [vmem:[#allocation5 + $0x4e8] sm:$0xff]
    %v202 = vld [vmem:[#allocation5 + $0x4f0] sm:$0xff]
    %v203 = vld [vmem:[#allocation5 + $0x4f8] sm:$0xff]
    %v204 = vld [vmem:[#allocation5 + $0x500] sm:$0xff]
    %v205 = vld [vmem:[#allocation5 + $0x508] sm:$0xff]
    %v206 = vld [vmem:[#allocation5 + $0x510] sm:$0xff]
    %v207 = vld [vmem:[#allocation5 + $0x518] sm:$0xff]
    %v208 = vld [vmem:[#allocation5 + $0x520] sm:$0xff]
    %v209 = vld [vmem:[#allocation5 + $0x528] sm:$0xff]
    %v210 = vld [vmem:[#allocation5 + $0x530] sm:$0xff]
    %v211 = vld [vmem:[#allocation5 + $0x538] sm:$0xff]
    %v212 = vld [vmem:[#allocation5 + $0x540] sm:$0xff]
    %v213 = vld [vmem:[#allocation5 + $0x548] sm:$0xff]
    %v214 = vld [vmem:[#allocation5 + $0x550] sm:$0xff]
    %v215 = vld [vmem:[#allocation5 + $0x558] sm:$0xff]
    %v216 = vld [vmem:[#allocation5 + $0x560] sm:$0xff]
    %v217 = vld [vmem:[#allocation5 + $0x568] sm:$0xff]
    %v218 = vld [vmem:[#allocation5 + $0x570] sm:$0xff]
    %v219 = vld [vmem:[#allocation5 + $0x578] sm:$0xff]
    %v220 = vld [vmem:[#allocation5 + $0x580] sm:$0xff]
    %v221 = vld [vmem:[#allocation5 + $0x588] sm:$0xff]
    %v222 = vld [vmem:[#allocation5 + $0x590] sm:$0xff]
    %v223 = vld [vmem:[#allocation5 + $0x598] sm:$0xff]
    %v224 = vld [vmem:[#allocation5 + $0x5a0] sm:$0xff]
    %v225 = vld [vmem:[#allocation5 + $0x5a8] sm:$0xff]
    %v226 = vld [vmem:[#allocation5 + $0x5b0] sm:$0xff]
    %v227 = vld [vmem:[#allocation5 + $0x5b8] sm:$0xff]
    %v228 = vld [vmem:[#allocation5 + $0x5c0] sm:$0xff]
    %v229 = vld [vmem:[#allocation5 + $0x5c8] sm:$0xff]
    %v230 = vld [vmem:[#allocation5 + $0x5d0] sm:$0xff]
    %v231 = vld [vmem:[#allocation5 + $0x5d8] sm:$0xff]
    %v232 = vld [vmem:[#allocation5 + $0x5e0] sm:$0xff]
    %v233 = vld [vmem:[#allocation5 + $0x5e8] sm:$0xff]
    %v234 = vld [vmem:[#allocation5 + $0x5f0] sm:$0xff]
    %v235 = vld [vmem:[#allocation5 + $0x5f8] sm:$0xff]
    %v236 = vld [vmem:[#allocation5 + $0x600] sm:$0xff]
    %v237 = vld [vmem:[#allocation5 + $0x608] sm:$0xff]
    %v238 = vld [vmem:[#allocation5 + $0x610] sm:$0xff]
    %v239 = vld [vmem:[#allocation5 + $0x618] sm:$0xff]
    %v240 = vld [vmem:[#allocation5 + $0x620] sm:$0xff]
    %v241 = vld [vmem:[#allocation5 + $0x628] sm:$0xff]
    %v242 = vld [vmem:[#allocation5 + $0x630] sm:$0xff]
    %v243 = vld [vmem:[#allocation5 + $0x638] sm:$0xff]
    %v244 = vld [vmem:[#allocation5 + $0x640] sm:$0xff]
    %v245 = vld [vmem:[#allocation5 + $0x648] sm:$0xff]
    %v246 = vld [vmem:[#allocation5 + $0x650] sm:$0xff]
    %v247 = vld [vmem:[#allocation5 + $0x658] sm:$0xff]
    %v248 = vld [vmem:[#allocation5 + $0x660] sm:$0xff]
    %v249 = vld [vmem:[#allocation5 + $0x668] sm:$0xff]
    %v250 = vld [vmem:[#allocation5 + $0x670] sm:$0xff]
    %v251 = vld [vmem:[#allocation5 + $0x678] sm:$0xff]
    %v252 = vld [vmem:[#allocation5 + $0x680] sm:$0xff]
    %v253 = vld [vmem:[#allocation5 + $0x688] sm:$0xff]
    %v254 = vld [vmem:[#allocation5 + $0x690] sm:$0xff]
    %v255 = vld [vmem:[#allocation5 + $0x698] sm:$0xff]
    %v256 = vld [vmem:[#allocation5 + $0x6a0] sm:$0xff]
    %v257 = vld [vmem:[#allocation5 + $0x6a8] sm:$0xff]
    %v258 = vld [vmem:[#allocation5 + $0x6b0] sm:$0xff]
    %v259 = vld [vmem:[#allocation5 + $0x6b8] sm:$0xff]
    %v260 = vld [vmem:[#allocation5 + $0x6c0] sm:$0xff]
    %v261 = vld [vmem:[#allocation5 + $0x6c8] sm:$0xff]
    %v262 = vld [vmem:[#allocation5 + $0x6d0] sm:$0xff]
    %v263 = vld [vmem:[#allocation5 + $0x6d8] sm:$0xff]
    %v264 = vld [vmem:[#allocation5 + $0x6e0] sm:$0xff]
    %v265 = vld [vmem:[#allocation5 + $0x6e8] sm:$0xff]
    %v266 = vld [vmem:[#allocation5 + $0x6f0] sm:$0xff]
    %v267 = vld [vmem:[#allocation5 + $0x6f8] sm:$0xff]
    %v268 = vld [vmem:[#allocation5 + $0x700] sm:$0xff]
    %v269 = vld [vmem:[#allocation5 + $0x708] sm:$0xff]
    %v270 = vld [vmem:[#allocation5 + $0x710] sm:$0xff]
    %v271 = vld [vmem:[#allocation5 + $0x718] sm:$0xff]
    %v272 = vld [vmem:[#allocation5 + $0x720] sm:$0xff]
    %v273 = vld [vmem:[#allocation5 + $0x728] sm:$0xff]
    %v274 = vld [vmem:[#allocation5 + $0x730] sm:$0xff]
    %v275 = vld [vmem:[#allocation5 + $0x738] sm:$0xff]
    %v276 = vld [vmem:[#allocation5 + $0x740] sm:$0xff]
    %v277 = vld [vmem:[#allocation5 + $0x748] sm:$0xff]
    %v278 = vld [vmem:[#allocation5 + $0x750] sm:$0xff]
    %v279 = vld [vmem:[#allocation5 + $0x758] sm:$0xff]
    %v280 = vld [vmem:[#allocation5 + $0x760] sm:$0xff]
    %v281 = vld [vmem:[#allocation5 + $0x768] sm:$0xff]
    %v282 = vld [vmem:[#allocation5 + $0x770] sm:$0xff]
    %v283 = vld [vmem:[#allocation5 + $0x778] sm:$0xff]
    %v284 = vld [vmem:[#allocation5 + $0x780] sm:$0xff]
    %v285 = vld [vmem:[#allocation5 + $0x788] sm:$0xff]
    %v286 = vld [vmem:[#allocation5 + $0x790] sm:$0xff]
    %v287 = vld [vmem:[#allocation5 + $0x798] sm:$0xff]
    %v288 = vld [vmem:[#allocation5 + $0x7a0] sm:$0xff]
    %v289 = vld [vmem:[#allocation5 + $0x7a8] sm:$0xff]
    %v290 = vld [vmem:[#allocation5 + $0x7b0] sm:$0xff]
    %v291 = vld [vmem:[#allocation5 + $0x7b8] sm:$0xff]
    %v292 = vld [vmem:[#allocation5 + $0x7c0] sm:$0xff]
    %v293 = vld [vmem:[#allocation5 + $0x7c8] sm:$0xff]
    %v294 = vld [vmem:[#allocation5 + $0x7d0] sm:$0xff]
    %v295 = vld [vmem:[#allocation5 + $0x7d8] sm:$0xff]
    %v296 = vld [vmem:[#allocation5 + $0x7e0] sm:$0xff]
    %v297 = vld [vmem:[#allocation5 + $0x7e8] sm:$0xff]
    %v298 = vld [vmem:[#allocation5 + $0x7f0] sm:$0xff]
    %v299 = vld [vmem:[#allocation5 + $0x7f8] sm:$0xff]
    %v300 = vld [vmem:[#allocation5 + $0x800] sm:$0xff]
    %v301 = vld [vmem:[#allocation5 + $0x808] sm:$0xff]
    %v302 = vld [vmem:[#allocation5 + $0x810] sm:$0xff]
    %v303 = vld [vmem:[#allocation5 + $0x818] sm:$0xff]
    %v304 = vld [vmem:[#allocation5 + $0x820] sm:$0xff]
    %v305 = vld [vmem:[#allocation5 + $0x828] sm:$0xff]
    %v306 = vld [vmem:[#allocation5 + $0x830] sm:$0xff]
    %v307 = vld [vmem:[#allocation5 + $0x838] sm:$0xff]
    %v308 = vld [vmem:[#allocation5 + $0x840] sm:$0xff]
    %v309 = vld [vmem:[#allocation5 + $0x848] sm:$0xff]
    %v310 = vld [vmem:[#allocation5 + $0x850] sm:$0xff]
    %v311 = vld [vmem:[#allocation5 + $0x858] sm:$0xff]
    %v312 = vld [vmem:[#allocation5 + $0x860] sm:$0xff]
    %v313 = vld [vmem:[#allocation5 + $0x868] sm:$0xff]
    %v314 = vld [vmem:[#allocation5 + $0x870] sm:$0xff]
    %v315 = vld [vmem:[#allocation5 + $0x878] sm:$0xff]
    %v316 = vld [vmem:[#allocation5 + $0x880] sm:$0xff]
    %v317 = vld [vmem:[#allocation5 + $0x888] sm:$0xff]
    %v318 = vld [vmem:[#allocation5 + $0x890] sm:$0xff]
    %v319 = vld [vmem:[#allocation5 + $0x898] sm:$0xff]
    %v320 = vld [vmem:[#allocation5 + $0x8a0] sm:$0xff]
    %v321 = vld [vmem:[#allocation5 + $0x8a8] sm:$0xff]
    %v322 = vld [vmem:[#allocation5 + $0x8b0] sm:$0xff]
    %v323 = vld [vmem:[#allocation5 + $0x8b8] sm:$0xff]
    %v324 = vld [vmem:[#allocation5 + $0x8c0] sm:$0xff]
    %v325 = vld [vmem:[#allocation5 + $0x8c8] sm:$0xff]
    %v326 = vld [vmem:[#allocation5 + $0x8d0] sm:$0xff]
    %v327 = vld [vmem:[#allocation5 + $0x8d8] sm:$0xff]
    %v328 = vld [vmem:[#allocation5 + $0x8e0] sm:$0xff]
    %v329 = vld [vmem:[#allocation5 + $0x8e8] sm:$0xff]
    %v330 = vld [vmem:[#allocation5 + $0x8f0] sm:$0xff]
    %v331 = vld [vmem:[#allocation5 + $0x8f8] sm:$0xff]
    %v332 = vld [vmem:[#allocation5 + $0x900] sm:$0xff]
    %v333 = vld [vmem:[#allocation5 + $0x908] sm:$0xff]
    %v334 = vld [vmem:[#allocation5 + $0x910] sm:$0xff]
    %v335 = vld [vmem:[#allocation5 + $0x918] sm:$0xff]
    %v336 = vld [vmem:[#allocation5 + $0x920] sm:$0xff]
    %v337 = vld [vmem:[#allocation5 + $0x928] sm:$0xff]
    %v338 = vld [vmem:[#allocation5 + $0x930] sm:$0xff]
    %v339 = vld [vmem:[#allocation5 + $0x938] sm:$0xff]
    %v340 = vld [vmem:[#allocation5 + $0x940] sm:$0xff]
    %v341 = vld [vmem:[#allocation5 + $0x948] sm:$0xff]
    %v342 = vld [vmem:[#allocation5 + $0x950] sm:$0xff]
    %v343 = vld [vmem:[#allocation5 + $0x958] sm:$0xff]
    %v344 = vld [vmem:[#allocation5 + $0x960] sm:$0xff]
    %v345 = vld [vmem:[#allocation5 + $0x968] sm:$0xff]
    %v346 = vld [vmem:[#allocation5 + $0x970] sm:$0xff]
    %v347 = vld [vmem:[#allocation5 + $0x978] sm:$0xff]
    %v348 = vld [vmem:[#allocation5 + $0x980] sm:$0xff]
    %v349 = vld [vmem:[#allocation5 + $0x988] sm:$0xff]
    %v350 = vld [vmem:[#allocation5 + $0x990] sm:$0xff]
    %v351 = vld [vmem:[#allocation5 + $0x998] sm:$0xff]
    %v352 = vld [vmem:[#allocation5 + $0x9a0] sm:$0xff]
    %v353 = vld [vmem:[#allocation5 + $0x9a8] sm:$0xff]
    %v354 = vld [vmem:[#allocation5 + $0x9b0] sm:$0xff]
    %v355 = vld [vmem:[#allocation5 + $0x9b8] sm:$0xff]
    %v356 = vld [vmem:[#allocation5 + $0x9c0] sm:$0xff]
    %v357 = vld [vmem:[#allocation5 + $0x9c8] sm:$0xff]
    %v358 = vld [vmem:[#allocation5 + $0x9d0] sm:$0xff]
    %v359 = vld [vmem:[#allocation5 + $0x9d8] sm:$0xff]
    %v360 = vld [vmem:[#allocation5 + $0x9e0] sm:$0xff]
    %v361 = vld [vmem:[#allocation5 + $0x9e8] sm:$0xff]
    %v362 = vld [vmem:[#allocation5 + $0x9f0] sm:$0xff]
    %v363 = vld [vmem:[#allocation5 + $0x9f8] sm:$0xff]
    %v364 = vld [vmem:[#allocation5 + $0xa00] sm:$0xff]
    %v365 = vld [vmem:[#allocation5 + $0xa08] sm:$0xff]
    %v366 = vld [vmem:[#allocation5 + $0xa10] sm:$0xff]
    %v367 = vld [vmem:[#allocation5 + $0xa18] sm:$0xff]
    %v368 = vld [vmem:[#allocation5 + $0xa20] sm:$0xff]
    %v369 = vld [vmem:[#allocation5 + $0xa28] sm:$0xff]
    %v370 = vld [vmem:[#allocation5 + $0xa30] sm:$0xff]
    %v371 = vld [vmem:[#allocation5 + $0xa38] sm:$0xff]
    %v372 = vld [vmem:[#allocation5 + $0xa40] sm:$0xff]
    %v373 = vld [vmem:[#allocation5 + $0xa48] sm:$0xff]
    %v374 = vld [vmem:[#allocation5 + $0xa50] sm:$0xff]
    %v375 = vld [vmem:[#allocation5 + $0xa58] sm:$0xff]
    %v376 = vld [vmem:[#allocation5 + $0xa60] sm:$0xff]
    %v377 = vld [vmem:[#allocation5 + $0xa68] sm:$0xff]
    %v378 = vld [vmem:[#allocation5 + $0xa70] sm:$0xff]
    %v379 = vld [vmem:[#allocation5 + $0xa78] sm:$0xff]
    %v380 = vld [vmem:[#allocation5 + $0xa80] sm:$0xff]
    %v381 = vld [vmem:[#allocation5 + $0xa88] sm:$0xff]
    %v382 = vld [vmem:[#allocation5 + $0xa90] sm:$0xff]
    %v383 = vld [vmem:[#allocation5 + $0xa98] sm:$0xff]
    %v384 = vld [vmem:[#allocation5 + $0xaa0] sm:$0xff]
    %v385 = vld [vmem:[#allocation5 + $0xaa8] sm:$0xff]
    %v386 = vld [vmem:[#allocation5 + $0xab0] sm:$0xff]
    %v387 = vld [vmem:[#allocation5 + $0xab8] sm:$0xff]
    %v388 = vld [vmem:[#allocation5 + $0xac0] sm:$0xff]
    %v389 = vld [vmem:[#allocation5 + $0xac8] sm:$0xff]
    %v390 = vld [vmem:[#allocation5 + $0xad0] sm:$0xff]
    %v391 = vld [vmem:[#allocation5 + $0xad8] sm:$0xff]
    %v392 = vld [vmem:[#allocation5 + $0xae0] sm:$0xff]
    %v393 = vld [vmem:[#allocation5 + $0xae8] sm:$0xff]
    %v394 = vld [vmem:[#allocation5 + $0xaf0] sm:$0xff]
    %v395 = vld [vmem:[#allocation5 + $0xaf8] sm:$0xff]
    %v396 = vld [vmem:[#allocation5 + $0xb00] sm:$0xff]
    %v397 = vld [vmem:[#allocation5 + $0xb08] sm:$0xff]
    %v398 = vld [vmem:[#allocation5 + $0xb10] sm:$0xff]
    %v399 = vld [vmem:[#allocation5 + $0xb18] sm:$0xff]
    %v400 = vld [vmem:[#allocation5 + $0xb20] sm:$0xff]
    %v401 = vld [vmem:[#allocation5 + $0xb28] sm:$0xff]
    %v402 = vld [vmem:[#allocation5 + $0xb30] sm:$0xff]
    %v403 = vld [vmem:[#allocation5 + $0xb38] sm:$0xff]
    %v404 = vld [vmem:[#allocation5 + $0xb40] sm:$0xff]
    %v405 = vld [vmem:[#allocation5 + $0xb48] sm:$0xff]
    %v406 = vld [vmem:[#allocation5 + $0xb50] sm:$0xff]
    %v407 = vld [vmem:[#allocation5 + $0xb58] sm:$0xff]
    %v408 = vld [vmem:[#allocation5 + $0xb60] sm:$0xff]
    %v409 = vld [vmem:[#allocation5 + $0xb68] sm:$0xff]
    %v410 = vld [vmem:[#allocation5 + $0xb70] sm:$0xff]
    %v411 = vld [vmem:[#allocation5 + $0xb78] sm:$0xff]
    %v412 = vld [vmem:[#allocation5 + $0xb80] sm:$0xff]
    %v413 = vld [vmem:[#allocation5 + $0xb88] sm:$0xff]
    %v414 = vld [vmem:[#allocation5 + $0xb90] sm:$0xff]
    %v415 = vld [vmem:[#allocation5 + $0xb98] sm:$0xff]
    %v416 = vld [vmem:[#allocation5 + $0xba0] sm:$0xff]
    %v417 = vld [vmem:[#allocation5 + $0xba8] sm:$0xff]
    %v418 = vld [vmem:[#allocation5 + $0xbb0] sm:$0xff]
    %v419 = vld [vmem:[#allocation5 + $0xbb8] sm:$0xff]
    %v420 = vld [vmem:[#allocation5 + $0xbc0] sm:$0xff]
    %v421 = vld [vmem:[#allocation5 + $0xbc8] sm:$0xff]
    %v422 = vld [vmem:[#allocation5 + $0xbd0] sm:$0xff]
    %v423 = vld [vmem:[#allocation5 + $0xbd8] sm:$0xff]
    %v424 = vld [vmem:[#allocation5 + $0xbe0] sm:$0xff]
    %v425 = vld [vmem:[#allocation5 + $0xbe8] sm:$0xff]
    %v426 = vld [vmem:[#allocation5 + $0xbf0] sm:$0xff]
    %v427 = vld [vmem:[#allocation5 + $0xbf8] sm:$0xff]
    %v428 = vld [vmem:[#allocation5 + $0xc00] sm:$0xff]
    %v429 = vld [vmem:[#allocation5 + $0xc08] sm:$0xff]
    %v430 = vld [vmem:[#allocation5 + $0xc10] sm:$0xff]
    %v431 = vld [vmem:[#allocation5 + $0xc18] sm:$0xff]
    %v432 = vld [vmem:[#allocation5 + $0xc20] sm:$0xff]
    %v433 = vld [vmem:[#allocation5 + $0xc28] sm:$0xff]
    %v434 = vld [vmem:[#allocation5 + $0xc30] sm:$0xff]
    %v435 = vld [vmem:[#allocation5 + $0xc38] sm:$0xff]
    %v436 = vld [vmem:[#allocation5 + $0xc40] sm:$0xff]
    %v437 = vld [vmem:[#allocation5 + $0xc48] sm:$0xff]
    %v438 = vld [vmem:[#allocation5 + $0xc50] sm:$0xff]
    %v439 = vld [vmem:[#allocation5 + $0xc58] sm:$0xff]
    %v440 = vld [vmem:[#allocation5 + $0xc60] sm:$0xff]
    %v441 = vld [vmem:[#allocation5 + $0xc68] sm:$0xff]
    %v442 = vld [vmem:[#allocation5 + $0xc70] sm:$0xff]
    %v443 = vld [vmem:[#allocation5 + $0xc78] sm:$0xff]
    %v444 = vld [vmem:[#allocation5 + $0xc80] sm:$0xff]
    %v445 = vld [vmem:[#allocation5 + $0xc88] sm:$0xff]
    %v446 = vld [vmem:[#allocation5 + $0xc90] sm:$0xff]
    %v447 = vld [vmem:[#allocation5 + $0xc98] sm:$0xff]
    %v448 = vld [vmem:[#allocation5 + $0xca0] sm:$0xff]
    %v449 = vld [vmem:[#allocation5 + $0xca8] sm:$0xff]
    %v450 = vld [vmem:[#allocation5 + $0xcb0] sm:$0xff]
    %v451 = vld [vmem:[#allocation5 + $0xcb8] sm:$0xff]
    %v452 = vld [vmem:[#allocation5 + $0xcc0] sm:$0xff]
    %v453 = vld [vmem:[#allocation5 + $0xcc8] sm:$0xff]
    %v454 = vld [vmem:[#allocation5 + $0xcd0] sm:$0xff]
    %v455 = vld [vmem:[#allocation5 + $0xcd8] sm:$0xff]
    %v456 = vld [vmem:[#allocation5 + $0xce0] sm:$0xff]
    %v457 = vld [vmem:[#allocation5 + $0xce8] sm:$0xff]
    %v458 = vld [vmem:[#allocation5 + $0xcf0] sm:$0xff]
    %v459 = vld [vmem:[#allocation5 + $0xcf8] sm:$0xff]
    %v460 = vld [vmem:[#allocation5 + $0xd00] sm:$0xff]
    %v461 = vld [vmem:[#allocation5 + $0xd08] sm:$0xff]
    %v462 = vld [vmem:[#allocation5 + $0xd10] sm:$0xff]
    %v463 = vld [vmem:[#allocation5 + $0xd18] sm:$0xff]
    %v464 = vld [vmem:[#allocation5 + $0xd20] sm:$0xff]
    %v465 = vld [vmem:[#allocation5 + $0xd28] sm:$0xff]
    %v466 = vld [vmem:[#allocation5 + $0xd30] sm:$0xff]
    %v467 = vld [vmem:[#allocation5 + $0xd38] sm:$0xff]
    %v468 = vld [vmem:[#allocation5 + $0xd40] sm:$0xff]
    %v469 = vld [vmem:[#allocation5 + $0xd48] sm:$0xff]
    %v470 = vld [vmem:[#allocation5 + $0xd50] sm:$0xff]
    %v471 = vld [vmem:[#allocation5 + $0xd58] sm:$0xff]
    %v472 = vld [vmem:[#allocation5 + $0xd60] sm:$0xff]
    %v473 = vld [vmem:[#allocation5 + $0xd68] sm:$0xff]
    %v474 = vld [vmem:[#allocation5 + $0xd70] sm:$0xff]
    %v475 = vld [vmem:[#allocation5 + $0xd78] sm:$0xff]
    %v476 = vld [vmem:[#allocation5 + $0xd80] sm:$0xff]
    %v477 = vld [vmem:[#allocation5 + $0xd88] sm:$0xff]
    %v478 = vld [vmem:[#allocation5 + $0xd90] sm:$0xff]
    %v479 = vld [vmem:[#allocation5 + $0xd98] sm:$0xff]
    %v480 = vld [vmem:[#allocation5 + $0xda0] sm:$0xff]
    %v481 = vld [vmem:[#allocation5 + $0xda8] sm:$0xff]
    %v482 = vld [vmem:[#allocation5 + $0xdb0] sm:$0xff]
    %v483 = vld [vmem:[#allocation5 + $0xdb8] sm:$0xff]
    %v484 = vld [vmem:[#allocation5 + $0xdc0] sm:$0xff]
    %v485 = vld [vmem:[#allocation5 + $0xdc8] sm:$0xff]
    %v486 = vld [vmem:[#allocation5 + $0xdd0] sm:$0xff]
    %v487 = vld [vmem:[#allocation5 + $0xdd8] sm:$0xff]
    %v488 = vld [vmem:[#allocation5 + $0xde0] sm:$0xff]
    %v489 = vld [vmem:[#allocation5 + $0xde8] sm:$0xff]
    %v490 = vld [vmem:[#allocation5 + $0xdf0] sm:$0xff]
    %v491 = vld [vmem:[#allocation5 + $0xdf8] sm:$0xff]
    %v492 = vld [vmem:[#allocation5 + $0xe00] sm:$0xff]
    %v493 = vld [vmem:[#allocation5 + $0xe08] sm:$0xff]
    %v494 = vld [vmem:[#allocation5 + $0xe10] sm:$0xff]
    %v495 = vld [vmem:[#allocation5 + $0xe18] sm:$0xff]
    %v496 = vld [vmem:[#allocation5 + $0xe20] sm:$0xff]
    %v497 = vld [vmem:[#allocation5 + $0xe28] sm:$0xff]
    %v498 = vld [vmem:[#allocation5 + $0xe30] sm:$0xff]
    %v499 = vld [vmem:[#allocation5 + $0xe38] sm:$0xff]
    %v500 = vld [vmem:[#allocation5 + $0xe40] sm:$0xff]
    %v501 = vld [vmem:[#allocation5 + $0xe48] sm:$0xff]
    %v502 = vld [vmem:[#allocation5 + $0xe50] sm:$0xff]
    %v503 = vld [vmem:[#allocation5 + $0xe58] sm:$0xff]
    %v504 = vld [vmem:[#allocation5 + $0xe60] sm:$0xff]
    %v505 = vld [vmem:[#allocation5 + $0xe68] sm:$0xff]
    %v506 = vld [vmem:[#allocation5 + $0xe70] sm:$0xff]
    %v507 = vld [vmem:[#allocation5 + $0xe78] sm:$0xff]
    %v508 = vld [vmem:[#allocation5 + $0xe80] sm:$0xff]
    %v509 = vld [vmem:[#allocation5 + $0xe88] sm:$0xff]
    %v510 = vld [vmem:[#allocation5 + $0xe90] sm:$0xff]
    %v511 = vld [vmem:[#allocation5 + $0xe98] sm:$0xff]
    %v512 = vld [vmem:[#allocation5 + $0xea0] sm:$0xff]
    %v513 = vld [vmem:[#allocation5 + $0xea8] sm:$0xff]
    %v514 = vld [vmem:[#allocation5 + $0xeb0] sm:$0xff]
    %v515 = vld [vmem:[#allocation5 + $0xeb8] sm:$0xff]
    %v516 = vld [vmem:[#allocation5 + $0xec0] sm:$0xff]
    %v517 = vld [vmem:[#allocation5 + $0xec8] sm:$0xff]
    %v518 = vld [vmem:[#allocation5 + $0xed0] sm:$0xff]
    %v519 = vld [vmem:[#allocation5 + $0xed8] sm:$0xff]
    %v520 = vld [vmem:[#allocation5 + $0xee0] sm:$0xff]
    %v521 = vld [vmem:[#allocation5 + $0xee8] sm:$0xff]
    %v522 = vld [vmem:[#allocation5 + $0xef0] sm:$0xff]
    %v523 = vld [vmem:[#allocation5 + $0xef8] sm:$0xff]
    %v524 = vld [vmem:[#allocation5 + $0xf00] sm:$0xff]
    %v525 = vld [vmem:[#allocation5 + $0xf08] sm:$0xff]
    %v526 = vld [vmem:[#allocation5 + $0xf10] sm:$0xff]
    %v527 = vld [vmem:[#allocation5 + $0xf18] sm:$0xff]
    %v528 = vld [vmem:[#allocation5 + $0xf20] sm:$0xff]
    %v529 = vld [vmem:[#allocation5 + $0xf28] sm:$0xff]
    %v530 = vld [vmem:[#allocation5 + $0xf30] sm:$0xff]
    %v531 = vld [vmem:[#allocation5 + $0xf38] sm:$0xff]
    %v532 = vld [vmem:[#allocation5 + $0xf40] sm:$0xff]
    %v533 = vld [vmem:[#allocation5 + $0xf48] sm:$0xff]
    %v534 = vld [vmem:[#allocation5 + $0xf50] sm:$0xff]
    %v535 = vld [vmem:[#allocation5 + $0xf58] sm:$0xff]
    %v536 = vld [vmem:[#allocation5 + $0xf60] sm:$0xff]
    %v537 = vld [vmem:[#allocation5 + $0xf68] sm:$0xff]
    %v538 = vld [vmem:[#allocation5 + $0xf70] sm:$0xff]
    %v539 = vld [vmem:[#allocation5 + $0xf78] sm:$0xff]
    %v540 = vld [vmem:[#allocation5 + $0xf80] sm:$0xff]
    %v541 = vld [vmem:[#allocation5 + $0xf88] sm:$0xff]
    %v542 = vld [vmem:[#allocation5 + $0xf90] sm:$0xff]
    %v543 = vld [vmem:[#allocation5 + $0xf98] sm:$0xff]
    %v544 = vld [vmem:[#allocation5 + $0xfa0] sm:$0xff]
    %v545 = vld [vmem:[#allocation5 + $0xfa8] sm:$0xff]
    %v546 = vld [vmem:[#allocation5 + $0xfb0] sm:$0xff]
    %v547 = vld [vmem:[#allocation5 + $0xfb8] sm:$0xff]
    %v548 = vld [vmem:[#allocation5 + $0xfc0] sm:$0xff]
    %v549 = vld [vmem:[#allocation5 + $0xfc8] sm:$0xff]
    %v550 = vld [vmem:[#allocation5 + $0xfd0] sm:$0xff]
    %v551 = vld [vmem:[#allocation5 + $0xfd8] sm:$0xff]
    %v552 = vld [vmem:[#allocation5 + $0xfe0] sm:$0xff]
    %v553 = vld [vmem:[#allocation5 + $0xfe8] sm:$0xff]
    %v554 = vld [vmem:[#allocation5 + $0xff0] sm:$0xff]
    %v555 = vld [vmem:[#allocation5 + $0xff8] sm:$0xff]
    %v560 = vunpack.c.l.b16 %v40
    %v561 = vunpack.c.h.b16 %v40
    %v562 = vunpack.c.l.b16 %v41
    %v563 = vunpack.c.h.b16 %v41
    %v564 = vunpack.c.l.b16 %v42
    %v565 = vunpack.c.h.b16 %v42
    %v566 = vunpack.c.l.b16 %v43
    %v567 = vunpack.c.h.b16 %v43
    %v568 = vpack.c.b16 %v564, %v560
    %v569 = vpack.c.b16 %v565, %v561
    %v570 = vpack.c.b16 %v566, %v562
    %v571 = vpack.c.b16 %v567, %v563
    %v1088 = vunpack.c.l.b16 %v44
    %v1089 = vunpack.c.h.b16 %v44
    %v1090 = vunpack.c.l.b16 %v45
    %v1091 = vunpack.c.h.b16 %v45
    %v1092 = vunpack.c.l.b16 %v46
    %v1093 = vunpack.c.h.b16 %v46
    %v1094 = vunpack.c.l.b16 %v47
    %v1095 = vunpack.c.h.b16 %v47
    %v1096 = vunpack.c.l.b16 %v48
    %v1097 = vunpack.c.h.b16 %v48
    %v1098 = vunpack.c.l.b16 %v49
    %v1099 = vunpack.c.h.b16 %v49
    %v1100 = vunpack.c.l.b16 %v50
    %v1101 = vunpack.c.h.b16 %v50
    %v1102 = vunpack.c.l.b16 %v51
    %v1103 = vunpack.c.h.b16 %v51
    %v1104 = vunpack.c.l.b16 %v52
    %v1105 = vunpack.c.h.b16 %v52
    %v1106 = vunpack.c.l.b16 %v53
    %v1107 = vunpack.c.h.b16 %v53
    %v1108 = vunpack.c.l.b16 %v54
    %v1109 = vunpack.c.h.b16 %v54
    %v1110 = vunpack.c.l.b16 %v55
    %v1111 = vunpack.c.h.b16 %v55
    %v1112 = vunpack.c.l.b16 %v56
    %v1113 = vunpack.c.h.b16 %v56
    %v1114 = vunpack.c.l.b16 %v57
    %v1115 = vunpack.c.h.b16 %v57
    %v1116 = vunpack.c.l.b16 %v58
    %v1117 = vunpack.c.h.b16 %v58
    %v1118 = vunpack.c.l.b16 %v59
    %v1119 = vunpack.c.h.b16 %v59
    %v1120 = vunpack.c.l.b16 %v60
    %v1121 = vunpack.c.h.b16 %v60
    %v1122 = vunpack.c.l.b16 %v61
    %v1123 = vunpack.c.h.b16 %v61
    %v1124 = vunpack.c.l.b16 %v62
    %v1125 = vunpack.c.h.b16 %v62
    %v1126 = vunpack.c.l.b16 %v63
    %v1127 = vunpack.c.h.b16 %v63
    %v1128 = vunpack.c.l.b16 %v64
    %v1129 = vunpack.c.h.b16 %v64
    %v1130 = vunpack.c.l.b16 %v65
    %v1131 = vunpack.c.h.b16 %v65
    %v1132 = vunpack.c.l.b16 %v66
    %v1133 = vunpack.c.h.b16 %v66
    %v1134 = vunpack.c.l.b16 %v67
    %v1135 = vunpack.c.h.b16 %v67
    %v1136 = vunpack.c.l.b16 %v68
    %v1137 = vunpack.c.h.b16 %v68
    %v1138 = vunpack.c.l.b16 %v69
    %v1139 = vunpack.c.h.b16 %v69
    %v1140 = vunpack.c.l.b16 %v70
    %v1141 = vunpack.c.h.b16 %v70
    %v1142 = vunpack.c.l.b16 %v71
    %v1143 = vunpack.c.h.b16 %v71
    %v1144 = vunpack.c.l.b16 %v72
    %v1145 = vunpack.c.h.b16 %v72
    %v1146 = vunpack.c.l.b16 %v73
    %v1147 = vunpack.c.h.b16 %v73
    %v1148 = vunpack.c.l.b16 %v74
    %v1149 = vunpack.c.h.b16 %v74
    %v1150 = vunpack.c.l.b16 %v75
    %v1151 = vunpack.c.h.b16 %v75
    %v1152 = vunpack.c.l.b16 %v76
    %v1153 = vunpack.c.h.b16 %v76
    %v1154 = vunpack.c.l.b16 %v77
    %v1155 = vunpack.c.h.b16 %v77
    %v1156 = vunpack.c.l.b16 %v78
    %v1157 = vunpack.c.h.b16 %v78
    %v1158 = vunpack.c.l.b16 %v79
    %v1159 = vunpack.c.h.b16 %v79
    %v1160 = vunpack.c.l.b16 %v80
    %v1161 = vunpack.c.h.b16 %v80
    %v1162 = vunpack.c.l.b16 %v81
    %v1163 = vunpack.c.h.b16 %v81
    %v1164 = vunpack.c.l.b16 %v82
    %v1165 = vunpack.c.h.b16 %v82
    %v1166 = vunpack.c.l.b16 %v83
    %v1167 = vunpack.c.h.b16 %v83
    %v1168 = vunpack.c.l.b16 %v84
    %v1169 = vunpack.c.h.b16 %v84
    %v1170 = vunpack.c.l.b16 %v85
    %v1171 = vunpack.c.h.b16 %v85
    %v1172 = vunpack.c.l.b16 %v86
    %v1173 = vunpack.c.h.b16 %v86
    %v1174 = vunpack.c.l.b16 %v87
    %v1175 = vunpack.c.h.b16 %v87
    %v1176 = vunpack.c.l.b16 %v88
    %v1177 = vunpack.c.h.b16 %v88
    %v1178 = vunpack.c.l.b16 %v89
    %v1179 = vunpack.c.h.b16 %v89
    %v1180 = vunpack.c.l.b16 %v90
    %v1181 = vunpack.c.h.b16 %v90
    %v1182 = vunpack.c.l.b16 %v91
    %v1183 = vunpack.c.h.b16 %v91
    %v1184 = vunpack.c.l.b16 %v92
    %v1185 = vunpack.c.h.b16 %v92
    %v1186 = vunpack.c.l.b16 %v93
    %v1187 = vunpack.c.h.b16 %v93
    %v1188 = vunpack.c.l.b16 %v94
    %v1189 = vunpack.c.h.b16 %v94
    %v1190 = vunpack.c.l.b16 %v95
    %v1191 = vunpack.c.h.b16 %v95
    %v1192 = vunpack.c.l.b16 %v96
    %v1193 = vunpack.c.h.b16 %v96
    %v1194 = vunpack.c.l.b16 %v97
    %v1195 = vunpack.c.h.b16 %v97
    %v1196 = vunpack.c.l.b16 %v98
    %v1197 = vunpack.c.h.b16 %v98
    %v1198 = vunpack.c.l.b16 %v99
    %v1199 = vunpack.c.h.b16 %v99
    %v1200 = vunpack.c.l.b16 %v100
    %v1201 = vunpack.c.h.b16 %v100
    %v1202 = vunpack.c.l.b16 %v101
    %v1203 = vunpack.c.h.b16 %v101
    %v1204 = vunpack.c.l.b16 %v102
    %v1205 = vunpack.c.h.b16 %v102
    %v1206 = vunpack.c.l.b16 %v103
    %v1207 = vunpack.c.h.b16 %v103
    %v1208 = vunpack.c.l.b16 %v104
    %v1209 = vunpack.c.h.b16 %v104
    %v1210 = vunpack.c.l.b16 %v105
    %v1211 = vunpack.c.h.b16 %v105
    %v1212 = vunpack.c.l.b16 %v106
    %v1213 = vunpack.c.h.b16 %v106
    %v1214 = vunpack.c.l.b16 %v107
    %v1215 = vunpack.c.h.b16 %v107
    %v1216 = vunpack.c.l.b16 %v108
    %v1217 = vunpack.c.h.b16 %v108
    %v1218 = vunpack.c.l.b16 %v109
    %v1219 = vunpack.c.h.b16 %v109
    %v1220 = vunpack.c.l.b16 %v110
    %v1221 = vunpack.c.h.b16 %v110
    %v1222 = vunpack.c.l.b16 %v111
    %v1223 = vunpack.c.h.b16 %v111
    %v1224 = vunpack.c.l.b16 %v112
    %v1225 = vunpack.c.h.b16 %v112
    %v1226 = vunpack.c.l.b16 %v113
    %v1227 = vunpack.c.h.b16 %v113
    %v1228 = vunpack.c.l.b16 %v114
    %v1229 = vunpack.c.h.b16 %v114
    %v1230 = vunpack.c.l.b16 %v115
    %v1231 = vunpack.c.h.b16 %v115
    %v1232 = vunpack.c.l.b16 %v116
    %v1233 = vunpack.c.h.b16 %v116
    %v1234 = vunpack.c.l.b16 %v117
    %v1235 = vunpack.c.h.b16 %v117
    %v1236 = vunpack.c.l.b16 %v118
    %v1237 = vunpack.c.h.b16 %v118
    %v1238 = vunpack.c.l.b16 %v119
    %v1239 = vunpack.c.h.b16 %v119
    %v1240 = vunpack.c.l.b16 %v120
    %v1241 = vunpack.c.h.b16 %v120
    %v1242 = vunpack.c.l.b16 %v121
    %v1243 = vunpack.c.h.b16 %v121
    %v1244 = vunpack.c.l.b16 %v122
    %v1245 = vunpack.c.h.b16 %v122
    %v1246 = vunpack.c.l.b16 %v123
    %v1247 = vunpack.c.h.b16 %v123
    %v1248 = vunpack.c.l.b16 %v124
    %v1249 = vunpack.c.h.b16 %v124
    %v1250 = vunpack.c.l.b16 %v125
    %v1251 = vunpack.c.h.b16 %v125
    %v1252 = vunpack.c.l.b16 %v126
    %v1253 = vunpack.c.h.b16 %v126
    %v1254 = vunpack.c.l.b16 %v127
    %v1255 = vunpack.c.h.b16 %v127
    %v1256 = vunpack.c.l.b16 %v128
    %v1257 = vunpack.c.h.b16 %v128
    %v1258 = vunpack.c.l.b16 %v129
    %v1259 = vunpack.c.h.b16 %v129
    %v1260 = vunpack.c.l.b16 %v130
    %v1261 = vunpack.c.h.b16 %v130
    %v1262 = vunpack.c.l.b16 %v131
    %v1263 = vunpack.c.h.b16 %v131
    %v1264 = vunpack.c.l.b16 %v132
    %v1265 = vunpack.c.h.b16 %v132
    %v1266 = vunpack.c.l.b16 %v133
    %v1267 = vunpack.c.h.b16 %v133
    %v1268 = vunpack.c.l.b16 %v134
    %v1269 = vunpack.c.h.b16 %v134
    %v1270 = vunpack.c.l.b16 %v135
    %v1271 = vunpack.c.h.b16 %v135
    %v1272 = vunpack.c.l.b16 %v136
    %v1273 = vunpack.c.h.b16 %v136
    %v1274 = vunpack.c.l.b16 %v137
    %v1275 = vunpack.c.h.b16 %v137
    %v1276 = vunpack.c.l.b16 %v138
    %v1277 = vunpack.c.h.b16 %v138
    %v1278 = vunpack.c.l.b16 %v139
    %v1279 = vunpack.c.h.b16 %v139
    %v1280 = vunpack.c.l.b16 %v140
    %v1281 = vunpack.c.h.b16 %v140
    %v1282 = vunpack.c.l.b16 %v141
    %v1283 = vunpack.c.h.b16 %v141
    %v1284 = vunpack.c.l.b16 %v142
    %v1285 = vunpack.c.h.b16 %v142
    %v1286 = vunpack.c.l.b16 %v143
    %v1287 = vunpack.c.h.b16 %v143
    %v1288 = vunpack.c.l.b16 %v144
    %v1289 = vunpack.c.h.b16 %v144
    %v1290 = vunpack.c.l.b16 %v145
    %v1291 = vunpack.c.h.b16 %v145
    %v1292 = vunpack.c.l.b16 %v146
    %v1293 = vunpack.c.h.b16 %v146
    %v1294 = vunpack.c.l.b16 %v147
    %v1295 = vunpack.c.h.b16 %v147
    %v1296 = vunpack.c.l.b16 %v148
    %v1297 = vunpack.c.h.b16 %v148
    %v1298 = vunpack.c.l.b16 %v149
    %v1299 = vunpack.c.h.b16 %v149
    %v1300 = vunpack.c.l.b16 %v150
    %v1301 = vunpack.c.h.b16 %v150
    %v1302 = vunpack.c.l.b16 %v151
    %v1303 = vunpack.c.h.b16 %v151
    %v1304 = vunpack.c.l.b16 %v152
    %v1305 = vunpack.c.h.b16 %v152
    %v1306 = vunpack.c.l.b16 %v153
    %v1307 = vunpack.c.h.b16 %v153
    %v1308 = vunpack.c.l.b16 %v154
    %v1309 = vunpack.c.h.b16 %v154
    %v1310 = vunpack.c.l.b16 %v155
    %v1311 = vunpack.c.h.b16 %v155
    %v1312 = vunpack.c.l.b16 %v156
    %v1313 = vunpack.c.h.b16 %v156
    %v1314 = vunpack.c.l.b16 %v157
    %v1315 = vunpack.c.h.b16 %v157
    %v1316 = vunpack.c.l.b16 %v158
    %v1317 = vunpack.c.h.b16 %v158
    %v1318 = vunpack.c.l.b16 %v159
    %v1319 = vunpack.c.h.b16 %v159
    %v1320 = vunpack.c.l.b16 %v160
    %v1321 = vunpack.c.h.b16 %v160
    %v1322 = vunpack.c.l.b16 %v161
    %v1323 = vunpack.c.h.b16 %v161
    %v1324 = vunpack.c.l.b16 %v162
    %v1325 = vunpack.c.h.b16 %v162
    %v1326 = vunpack.c.l.b16 %v163
    %v1327 = vunpack.c.h.b16 %v163
    %v1328 = vunpack.c.l.b16 %v164
    %v1329 = vunpack.c.h.b16 %v164
    %v1330 = vunpack.c.l.b16 %v165
    %v1331 = vunpack.c.h.b16 %v165
    %v1332 = vunpack.c.l.b16 %v166
    %v1333 = vunpack.c.h.b16 %v166
    %v1334 = vunpack.c.l.b16 %v167
    %v1335 = vunpack.c.h.b16 %v167
    %v1336 = vunpack.c.l.b16 %v168
    %v1337 = vunpack.c.h.b16 %v168
    %v1338 = vunpack.c.l.b16 %v169
    %v1339 = vunpack.c.h.b16 %v169
    %v1340 = vunpack.c.l.b16 %v170
    %v1341 = vunpack.c.h.b16 %v170
    %v1342 = vunpack.c.l.b16 %v171
    %v1343 = vunpack.c.h.b16 %v171
    %v1344 = vunpack.c.l.b16 %v172
    %v1345 = vunpack.c.h.b16 %v172
    %v1346 = vunpack.c.l.b16 %v173
    %v1347 = vunpack.c.h.b16 %v173
    %v1348 = vunpack.c.l.b16 %v174
    %v1349 = vunpack.c.h.b16 %v174
    %v1350 = vunpack.c.l.b16 %v175
    %v1351 = vunpack.c.h.b16 %v175
    %v1352 = vunpack.c.l.b16 %v176
    %v1353 = vunpack.c.h.b16 %v176
    %v1354 = vunpack.c.l.b16 %v177
    %v1355 = vunpack.c.h.b16 %v177
    %v1356 = vunpack.c.l.b16 %v178
    %v1357 = vunpack.c.h.b16 %v178
    %v1358 = vunpack.c.l.b16 %v179
    %v1359 = vunpack.c.h.b16 %v179
    %v1360 = vunpack.c.l.b16 %v180
    %v1361 = vunpack.c.h.b16 %v180
    %v1362 = vunpack.c.l.b16 %v181
    %v1363 = vunpack.c.h.b16 %v181
    %v1364 = vunpack.c.l.b16 %v182
    %v1365 = vunpack.c.h.b16 %v182
    %v1366 = vunpack.c.l.b16 %v183
    %v1367 = vunpack.c.h.b16 %v183
    %v1368 = vunpack.c.l.b16 %v184
    %v1369 = vunpack.c.h.b16 %v184
    %v1370 = vunpack.c.l.b16 %v185
    %v1371 = vunpack.c.h.b16 %v185
    %v1372 = vunpack.c.l.b16 %v186
    %v1373 = vunpack.c.h.b16 %v186
    %v1374 = vunpack.c.l.b16 %v187
    %v1375 = vunpack.c.h.b16 %v187
    %v1376 = vunpack.c.l.b16 %v188
    %v1377 = vunpack.c.h.b16 %v188
    %v1378 = vunpack.c.l.b16 %v189
    %v1379 = vunpack.c.h.b16 %v189
    %v1380 = vunpack.c.l.b16 %v190
    %v1381 = vunpack.c.h.b16 %v190
    %v1382 = vunpack.c.l.b16 %v191
    %v1383 = vunpack.c.h.b16 %v191
    %v1384 = vunpack.c.l.b16 %v192
    %v1385 = vunpack.c.h.b16 %v192
    %v1386 = vunpack.c.l.b16 %v193
    %v1387 = vunpack.c.h.b16 %v193
    %v1388 = vunpack.c.l.b16 %v194
    %v1389 = vunpack.c.h.b16 %v194
    %v1390 = vunpack.c.l.b16 %v195
    %v1391 = vunpack.c.h.b16 %v195
    %v1392 = vunpack.c.l.b16 %v196
    %v1393 = vunpack.c.h.b16 %v196
    %v1394 = vunpack.c.l.b16 %v197
    %v1395 = vunpack.c.h.b16 %v197
    %v1396 = vunpack.c.l.b16 %v198
    %v1397 = vunpack.c.h.b16 %v198
    %v1398 = vunpack.c.l.b16 %v199
    %v1399 = vunpack.c.h.b16 %v199
    %v1400 = vunpack.c.l.b16 %v200
    %v1401 = vunpack.c.h.b16 %v200
    %v1402 = vunpack.c.l.b16 %v201
    %v1403 = vunpack.c.h.b16 %v201
    %v1404 = vunpack.c.l.b16 %v202
    %v1405 = vunpack.c.h.b16 %v202
    %v1406 = vunpack.c.l.b16 %v203
    %v1407 = vunpack.c.h.b16 %v203
    %v1408 = vunpack.c.l.b16 %v204
    %v1409 = vunpack.c.h.b16 %v204
    %v1410 = vunpack.c.l.b16 %v205
    %v1411 = vunpack.c.h.b16 %v205
    %v1412 = vunpack.c.l.b16 %v206
    %v1413 = vunpack.c.h.b16 %v206
    %v1414 = vunpack.c.l.b16 %v207
    %v1415 = vunpack.c.h.b16 %v207
    %v1416 = vunpack.c.l.b16 %v208
    %v1417 = vunpack.c.h.b16 %v208
    %v1418 = vunpack.c.l.b16 %v209
    %v1419 = vunpack.c.h.b16 %v209
    %v1420 = vunpack.c.l.b16 %v210
    %v1421 = vunpack.c.h.b16 %v210
    %v1422 = vunpack.c.l.b16 %v211
    %v1423 = vunpack.c.h.b16 %v211
    %v1424 = vunpack.c.l.b16 %v212
    %v1425 = vunpack.c.h.b16 %v212
    %v1426 = vunpack.c.l.b16 %v213
    %v1427 = vunpack.c.h.b16 %v213
    %v1428 = vunpack.c.l.b16 %v214
    %v1429 = vunpack.c.h.b16 %v214
    %v1430 = vunpack.c.l.b16 %v215
    %v1431 = vunpack.c.h.b16 %v215
    %v1432 = vunpack.c.l.b16 %v216
    %v1433 = vunpack.c.h.b16 %v216
    %v1434 = vunpack.c.l.b16 %v217
    %v1435 = vunpack.c.h.b16 %v217
    %v1436 = vunpack.c.l.b16 %v218
    %v1437 = vunpack.c.h.b16 %v218
    %v1438 = vunpack.c.l.b16 %v219
    %v1439 = vunpack.c.h.b16 %v219
    %v1440 = vunpack.c.l.b16 %v220
    %v1441 = vunpack.c.h.b16 %v220
    %v1442 = vunpack.c.l.b16 %v221
    %v1443 = vunpack.c.h.b16 %v221
    %v1444 = vunpack.c.l.b16 %v222
    %v1445 = vunpack.c.h.b16 %v222
    %v1446 = vunpack.c.l.b16 %v223
    %v1447 = vunpack.c.h.b16 %v223
    %v1448 = vunpack.c.l.b16 %v224
    %v1449 = vunpack.c.h.b16 %v224
    %v1450 = vunpack.c.l.b16 %v225
    %v1451 = vunpack.c.h.b16 %v225
    %v1452 = vunpack.c.l.b16 %v226
    %v1453 = vunpack.c.h.b16 %v226
    %v1454 = vunpack.c.l.b16 %v227
    %v1455 = vunpack.c.h.b16 %v227
    %v1456 = vunpack.c.l.b16 %v228
    %v1457 = vunpack.c.h.b16 %v228
    %v1458 = vunpack.c.l.b16 %v229
    %v1459 = vunpack.c.h.b16 %v229
    %v1460 = vunpack.c.l.b16 %v230
    %v1461 = vunpack.c.h.b16 %v230
    %v1462 = vunpack.c.l.b16 %v231
    %v1463 = vunpack.c.h.b16 %v231
    %v1464 = vunpack.c.l.b16 %v232
    %v1465 = vunpack.c.h.b16 %v232
    %v1466 = vunpack.c.l.b16 %v233
    %v1467 = vunpack.c.h.b16 %v233
    %v1468 = vunpack.c.l.b16 %v234
    %v1469 = vunpack.c.h.b16 %v234
    %v1470 = vunpack.c.l.b16 %v235
    %v1471 = vunpack.c.h.b16 %v235
    %v1472 = vunpack.c.l.b16 %v236
    %v1473 = vunpack.c.h.b16 %v236
    %v1474 = vunpack.c.l.b16 %v237
    %v1475 = vunpack.c.h.b16 %v237
    %v1476 = vunpack.c.l.b16 %v238
    %v1477 = vunpack.c.h.b16 %v238
    %v1478 = vunpack.c.l.b16 %v239
    %v1479 = vunpack.c.h.b16 %v239
    %v1480 = vunpack.c.l.b16 %v240
    %v1481 = vunpack.c.h.b16 %v240
    %v1482 = vunpack.c.l.b16 %v241
    %v1483 = vunpack.c.h.b16 %v241
    %v1484 = vunpack.c.l.b16 %v242
    %v1485 = vunpack.c.h.b16 %v242
    %v1486 = vunpack.c.l.b16 %v243
    %v1487 = vunpack.c.h.b16 %v243
    %v1488 = vunpack.c.l.b16 %v244
    %v1489 = vunpack.c.h.b16 %v244
    %v1490 = vunpack.c.l.b16 %v245
    %v1491 = vunpack.c.h.b16 %v245
    %v1492 = vunpack.c.l.b16 %v246
    %v1493 = vunpack.c.h.b16 %v246
    %v1494 = vunpack.c.l.b16 %v247
    %v1495 = vunpack.c.h.b16 %v247
    %v1496 = vunpack.c.l.b16 %v248
    %v1497 = vunpack.c.h.b16 %v248
    %v1498 = vunpack.c.l.b16 %v249
    %v1499 = vunpack.c.h.b16 %v249
    %v1500 = vunpack.c.l.b16 %v250
    %v1501 = vunpack.c.h.b16 %v250
    %v1502 = vunpack.c.l.b16 %v251
    %v1503 = vunpack.c.h.b16 %v251
    %v1504 = vunpack.c.l.b16 %v252
    %v1505 = vunpack.c.h.b16 %v252
    %v1506 = vunpack.c.l.b16 %v253
    %v1507 = vunpack.c.h.b16 %v253
    %v1508 = vunpack.c.l.b16 %v254
    %v1509 = vunpack.c.h.b16 %v254
    %v1510 = vunpack.c.l.b16 %v255
    %v1511 = vunpack.c.h.b16 %v255
    %v1512 = vunpack.c.l.b16 %v256
    %v1513 = vunpack.c.h.b16 %v256
    %v1514 = vunpack.c.l.b16 %v257
    %v1515 = vunpack.c.h.b16 %v257
    %v1516 = vunpack.c.l.b16 %v258
    %v1517 = vunpack.c.h.b16 %v258
    %v1518 = vunpack.c.l.b16 %v259
    %v1519 = vunpack.c.h.b16 %v259
    %v1520 = vunpack.c.l.b16 %v260
    %v1521 = vunpack.c.h.b16 %v260
    %v1522 = vunpack.c.l.b16 %v261
    %v1523 = vunpack.c.h.b16 %v261
    %v1524 = vunpack.c.l.b16 %v262
    %v1525 = vunpack.c.h.b16 %v262
    %v1526 = vunpack.c.l.b16 %v263
    %v1527 = vunpack.c.h.b16 %v263
    %v1528 = vunpack.c.l.b16 %v264
    %v1529 = vunpack.c.h.b16 %v264
    %v1530 = vunpack.c.l.b16 %v265
    %v1531 = vunpack.c.h.b16 %v265
    %v1532 = vunpack.c.l.b16 %v266
    %v1533 = vunpack.c.h.b16 %v266
    %v1534 = vunpack.c.l.b16 %v267
    %v1535 = vunpack.c.h.b16 %v267
    %v1536 = vunpack.c.l.b16 %v268
    %v1537 = vunpack.c.h.b16 %v268
    %v1538 = vunpack.c.l.b16 %v269
    %v1539 = vunpack.c.h.b16 %v269
    %v1540 = vunpack.c.l.b16 %v270
    %v1541 = vunpack.c.h.b16 %v270
    %v1542 = vunpack.c.l.b16 %v271
    %v1543 = vunpack.c.h.b16 %v271
    %v1544 = vunpack.c.l.b16 %v272
    %v1545 = vunpack.c.h.b16 %v272
    %v1546 = vunpack.c.l.b16 %v273
    %v1547 = vunpack.c.h.b16 %v273
    %v1548 = vunpack.c.l.b16 %v274
    %v1549 = vunpack.c.h.b16 %v274
    %v1550 = vunpack.c.l.b16 %v275
    %v1551 = vunpack.c.h.b16 %v275
    %v1552 = vunpack.c.l.b16 %v276
    %v1553 = vunpack.c.h.b16 %v276
    %v1554 = vunpack.c.l.b16 %v277
    %v1555 = vunpack.c.h.b16 %v277
    %v1556 = vunpack.c.l.b16 %v278
    %v1557 = vunpack.c.h.b16 %v278
    %v1558 = vunpack.c.l.b16 %v279
    %v1559 = vunpack.c.h.b16 %v279
    %v1560 = vunpack.c.l.b16 %v280
    %v1561 = vunpack.c.h.b16 %v280
    %v1562 = vunpack.c.l.b16 %v281
    %v1563 = vunpack.c.h.b16 %v281
    %v1564 = vunpack.c.l.b16 %v282
    %v1565 = vunpack.c.h.b16 %v282
    %v1566 = vunpack.c.l.b16 %v283
    %v1567 = vunpack.c.h.b16 %v283
    %v1568 = vunpack.c.l.b16 %v284
    %v1569 = vunpack.c.h.b16 %v284
    %v1570 = vunpack.c.l.b16 %v285
    %v1571 = vunpack.c.h.b16 %v285
    %v1572 = vunpack.c.l.b16 %v286
    %v1573 = vunpack.c.h.b16 %v286
    %v1574 = vunpack.c.l.b16 %v287
    %v1575 = vunpack.c.h.b16 %v287
    %v1576 = vunpack.c.l.b16 %v288
    %v1577 = vunpack.c.h.b16 %v288
    %v1578 = vunpack.c.l.b16 %v289
    %v1579 = vunpack.c.h.b16 %v289
    %v1580 = vunpack.c.l.b16 %v290
    %v1581 = vunpack.c.h.b16 %v290
    %v1582 = vunpack.c.l.b16 %v291
    %v1583 = vunpack.c.h.b16 %v291
    %v1584 = vunpack.c.l.b16 %v292
    %v1585 = vunpack.c.h.b16 %v292
    %v1586 = vunpack.c.l.b16 %v293
    %v1587 = vunpack.c.h.b16 %v293
    %v1588 = vunpack.c.l.b16 %v294
    %v1589 = vunpack.c.h.b16 %v294
    %v1590 = vunpack.c.l.b16 %v295
    %v1591 = vunpack.c.h.b16 %v295
    %v1592 = vunpack.c.l.b16 %v296
    %v1593 = vunpack.c.h.b16 %v296
    %v1594 = vunpack.c.l.b16 %v297
    %v1595 = vunpack.c.h.b16 %v297
    %v1596 = vunpack.c.l.b16 %v298
    %v1597 = vunpack.c.h.b16 %v298
    %v1598 = vunpack.c.l.b16 %v299
    %v1599 = vunpack.c.h.b16 %v299
    %v1600 = vunpack.c.l.b16 %v300
    %v1601 = vunpack.c.h.b16 %v300
    %v1602 = vunpack.c.l.b16 %v301
    %v1603 = vunpack.c.h.b16 %v301
    %v1604 = vunpack.c.l.b16 %v302
    %v1605 = vunpack.c.h.b16 %v302
    %v1606 = vunpack.c.l.b16 %v303
    %v1607 = vunpack.c.h.b16 %v303
    %v1608 = vunpack.c.l.b16 %v304
    %v1609 = vunpack.c.h.b16 %v304
    %v1610 = vunpack.c.l.b16 %v305
    %v1611 = vunpack.c.h.b16 %v305
    %v1612 = vunpack.c.l.b16 %v306
    %v1613 = vunpack.c.h.b16 %v306
    %v1614 = vunpack.c.l.b16 %v307
    %v1615 = vunpack.c.h.b16 %v307
    %v1616 = vunpack.c.l.b16 %v308
    %v1617 = vunpack.c.h.b16 %v308
    %v1618 = vunpack.c.l.b16 %v309
    %v1619 = vunpack.c.h.b16 %v309
    %v1620 = vunpack.c.l.b16 %v310
    %v1621 = vunpack.c.h.b16 %v310
    %v1622 = vunpack.c.l.b16 %v311
    %v1623 = vunpack.c.h.b16 %v311
    %v1624 = vunpack.c.l.b16 %v312
    %v1625 = vunpack.c.h.b16 %v312
    %v1626 = vunpack.c.l.b16 %v313
    %v1627 = vunpack.c.h.b16 %v313
    %v1628 = vunpack.c.l.b16 %v314
    %v1629 = vunpack.c.h.b16 %v314
    %v1630 = vunpack.c.l.b16 %v315
    %v1631 = vunpack.c.h.b16 %v315
    %v1632 = vunpack.c.l.b16 %v316
    %v1633 = vunpack.c.h.b16 %v316
    %v1634 = vunpack.c.l.b16 %v317
    %v1635 = vunpack.c.h.b16 %v317
    %v1636 = vunpack.c.l.b16 %v318
    %v1637 = vunpack.c.h.b16 %v318
    %v1638 = vunpack.c.l.b16 %v319
    %v1639 = vunpack.c.h.b16 %v319
    %v1640 = vunpack.c.l.b16 %v320
    %v1641 = vunpack.c.h.b16 %v320
    %v1642 = vunpack.c.l.b16 %v321
    %v1643 = vunpack.c.h.b16 %v321
    %v1644 = vunpack.c.l.b16 %v322
    %v1645 = vunpack.c.h.b16 %v322
    %v1646 = vunpack.c.l.b16 %v323
    %v1647 = vunpack.c.h.b16 %v323
    %v1648 = vunpack.c.l.b16 %v324
    %v1649 = vunpack.c.h.b16 %v324
    %v1650 = vunpack.c.l.b16 %v325
    %v1651 = vunpack.c.h.b16 %v325
    %v1652 = vunpack.c.l.b16 %v326
    %v1653 = vunpack.c.h.b16 %v326
    %v1654 = vunpack.c.l.b16 %v327
    %v1655 = vunpack.c.h.b16 %v327
    %v1656 = vunpack.c.l.b16 %v328
    %v1657 = vunpack.c.h.b16 %v328
    %v1658 = vunpack.c.l.b16 %v329
    %v1659 = vunpack.c.h.b16 %v329
    %v1660 = vunpack.c.l.b16 %v330
    %v1661 = vunpack.c.h.b16 %v330
    %v1662 = vunpack.c.l.b16 %v331
    %v1663 = vunpack.c.h.b16 %v331
    %v1664 = vunpack.c.l.b16 %v332
    %v1665 = vunpack.c.h.b16 %v332
    %v1666 = vunpack.c.l.b16 %v333
    %v1667 = vunpack.c.h.b16 %v333
    %v1668 = vunpack.c.l.b16 %v334
    %v1669 = vunpack.c.h.b16 %v334
    %v1670 = vunpack.c.l.b16 %v335
    %v1671 = vunpack.c.h.b16 %v335
    %v1672 = vunpack.c.l.b16 %v336
    %v1673 = vunpack.c.h.b16 %v336
    %v1674 = vunpack.c.l.b16 %v337
    %v1675 = vunpack.c.h.b16 %v337
    %v1676 = vunpack.c.l.b16 %v338
    %v1677 = vunpack.c.h.b16 %v338
    %v1678 = vunpack.c.l.b16 %v339
    %v1679 = vunpack.c.h.b16 %v339
    %v1680 = vunpack.c.l.b16 %v340
    %v1681 = vunpack.c.h.b16 %v340
    %v1682 = vunpack.c.l.b16 %v341
    %v1683 = vunpack.c.h.b16 %v341
    %v1684 = vunpack.c.l.b16 %v342
    %v1685 = vunpack.c.h.b16 %v342
    %v1686 = vunpack.c.l.b16 %v343
    %v1687 = vunpack.c.h.b16 %v343
    %v1688 = vunpack.c.l.b16 %v344
    %v1689 = vunpack.c.h.b16 %v344
    %v1690 = vunpack.c.l.b16 %v345
    %v1691 = vunpack.c.h.b16 %v345
    %v1692 = vunpack.c.l.b16 %v346
    %v1693 = vunpack.c.h.b16 %v346
    %v1694 = vunpack.c.l.b16 %v347
    %v1695 = vunpack.c.h.b16 %v347
    %v1696 = vunpack.c.l.b16 %v348
    %v1697 = vunpack.c.h.b16 %v348
    %v1698 = vunpack.c.l.b16 %v349
    %v1699 = vunpack.c.h.b16 %v349
    %v1700 = vunpack.c.l.b16 %v350
    %v1701 = vunpack.c.h.b16 %v350
    %v1702 = vunpack.c.l.b16 %v351
    %v1703 = vunpack.c.h.b16 %v351
    %v1704 = vunpack.c.l.b16 %v352
    %v1705 = vunpack.c.h.b16 %v352
    %v1706 = vunpack.c.l.b16 %v353
    %v1707 = vunpack.c.h.b16 %v353
    %v1708 = vunpack.c.l.b16 %v354
    %v1709 = vunpack.c.h.b16 %v354
    %v1710 = vunpack.c.l.b16 %v355
    %v1711 = vunpack.c.h.b16 %v355
    %v1712 = vunpack.c.l.b16 %v356
    %v1713 = vunpack.c.h.b16 %v356
    %v1714 = vunpack.c.l.b16 %v357
    %v1715 = vunpack.c.h.b16 %v357
    %v1716 = vunpack.c.l.b16 %v358
    %v1717 = vunpack.c.h.b16 %v358
    %v1718 = vunpack.c.l.b16 %v359
    %v1719 = vunpack.c.h.b16 %v359
    %v1720 = vunpack.c.l.b16 %v360
    %v1721 = vunpack.c.h.b16 %v360
    %v1722 = vunpack.c.l.b16 %v361
    %v1723 = vunpack.c.h.b16 %v361
    %v1724 = vunpack.c.l.b16 %v362
    %v1725 = vunpack.c.h.b16 %v362
    %v1726 = vunpack.c.l.b16 %v363
    %v1727 = vunpack.c.h.b16 %v363
    %v1728 = vunpack.c.l.b16 %v364
    %v1729 = vunpack.c.h.b16 %v364
    %v1730 = vunpack.c.l.b16 %v365
    %v1731 = vunpack.c.h.b16 %v365
    %v1732 = vunpack.c.l.b16 %v366
    %v1733 = vunpack.c.h.b16 %v366
    %v1734 = vunpack.c.l.b16 %v367
    %v1735 = vunpack.c.h.b16 %v367
    %v1736 = vunpack.c.l.b16 %v368
    %v1737 = vunpack.c.h.b16 %v368
    %v1738 = vunpack.c.l.b16 %v369
    %v1739 = vunpack.c.h.b16 %v369
    %v1740 = vunpack.c.l.b16 %v370
    %v1741 = vunpack.c.h.b16 %v370
    %v1742 = vunpack.c.l.b16 %v371
    %v1743 = vunpack.c.h.b16 %v371
    %v1744 = vunpack.c.l.b16 %v372
    %v1745 = vunpack.c.h.b16 %v372
    %v1746 = vunpack.c.l.b16 %v373
    %v1747 = vunpack.c.h.b16 %v373
    %v1748 = vunpack.c.l.b16 %v374
    %v1749 = vunpack.c.h.b16 %v374
    %v1750 = vunpack.c.l.b16 %v375
    %v1751 = vunpack.c.h.b16 %v375
    %v1752 = vunpack.c.l.b16 %v376
    %v1753 = vunpack.c.h.b16 %v376
    %v1754 = vunpack.c.l.b16 %v377
    %v1755 = vunpack.c.h.b16 %v377
    %v1756 = vunpack.c.l.b16 %v378
    %v1757 = vunpack.c.h.b16 %v378
    %v1758 = vunpack.c.l.b16 %v379
    %v1759 = vunpack.c.h.b16 %v379
    %v1760 = vunpack.c.l.b16 %v380
    %v1761 = vunpack.c.h.b16 %v380
    %v1762 = vunpack.c.l.b16 %v381
    %v1763 = vunpack.c.h.b16 %v381
    %v1764 = vunpack.c.l.b16 %v382
    %v1765 = vunpack.c.h.b16 %v382
    %v1766 = vunpack.c.l.b16 %v383
    %v1767 = vunpack.c.h.b16 %v383
    %v1768 = vunpack.c.l.b16 %v384
    %v1769 = vunpack.c.h.b16 %v384
    %v1770 = vunpack.c.l.b16 %v385
    %v1771 = vunpack.c.h.b16 %v385
    %v1772 = vunpack.c.l.b16 %v386
    %v1773 = vunpack.c.h.b16 %v386
    %v1774 = vunpack.c.l.b16 %v387
    %v1775 = vunpack.c.h.b16 %v387
    %v1776 = vunpack.c.l.b16 %v388
    %v1777 = vunpack.c.h.b16 %v388
    %v1778 = vunpack.c.l.b16 %v389
    %v1779 = vunpack.c.h.b16 %v389
    %v1780 = vunpack.c.l.b16 %v390
    %v1781 = vunpack.c.h.b16 %v390
    %v1782 = vunpack.c.l.b16 %v391
    %v1783 = vunpack.c.h.b16 %v391
    %v1784 = vunpack.c.l.b16 %v392
    %v1785 = vunpack.c.h.b16 %v392
    %v1786 = vunpack.c.l.b16 %v393
    %v1787 = vunpack.c.h.b16 %v393
    %v1788 = vunpack.c.l.b16 %v394
    %v1789 = vunpack.c.h.b16 %v394
    %v1790 = vunpack.c.l.b16 %v395
    %v1791 = vunpack.c.h.b16 %v395
    %v1792 = vunpack.c.l.b16 %v396
    %v1793 = vunpack.c.h.b16 %v396
    %v1794 = vunpack.c.l.b16 %v397
    %v1795 = vunpack.c.h.b16 %v397
    %v1796 = vunpack.c.l.b16 %v398
    %v1797 = vunpack.c.h.b16 %v398
    %v1798 = vunpack.c.l.b16 %v399
    %v1799 = vunpack.c.h.b16 %v399
    %v1800 = vunpack.c.l.b16 %v400
    %v1801 = vunpack.c.h.b16 %v400
    %v1802 = vunpack.c.l.b16 %v401
    %v1803 = vunpack.c.h.b16 %v401
    %v1804 = vunpack.c.l.b16 %v402
    %v1805 = vunpack.c.h.b16 %v402
    %v1806 = vunpack.c.l.b16 %v403
    %v1807 = vunpack.c.h.b16 %v403
    %v1808 = vunpack.c.l.b16 %v404
    %v1809 = vunpack.c.h.b16 %v404
    %v1810 = vunpack.c.l.b16 %v405
    %v1811 = vunpack.c.h.b16 %v405
    %v1812 = vunpack.c.l.b16 %v406
    %v1813 = vunpack.c.h.b16 %v406
    %v1814 = vunpack.c.l.b16 %v407
    %v1815 = vunpack.c.h.b16 %v407
    %v1816 = vunpack.c.l.b16 %v408
    %v1817 = vunpack.c.h.b16 %v408
    %v1818 = vunpack.c.l.b16 %v409
    %v1819 = vunpack.c.h.b16 %v409
    %v1820 = vunpack.c.l.b16 %v410
    %v1821 = vunpack.c.h.b16 %v410
    %v1822 = vunpack.c.l.b16 %v411
    %v1823 = vunpack.c.h.b16 %v411
    %v1824 = vunpack.c.l.b16 %v412
    %v1825 = vunpack.c.h.b16 %v412
    %v1826 = vunpack.c.l.b16 %v413
    %v1827 = vunpack.c.h.b16 %v413
    %v1828 = vunpack.c.l.b16 %v414
    %v1829 = vunpack.c.h.b16 %v414
    %v1830 = vunpack.c.l.b16 %v415
    %v1831 = vunpack.c.h.b16 %v415
    %v1832 = vunpack.c.l.b16 %v416
    %v1833 = vunpack.c.h.b16 %v416
    %v1834 = vunpack.c.l.b16 %v417
    %v1835 = vunpack.c.h.b16 %v417
    %v1836 = vunpack.c.l.b16 %v418
    %v1837 = vunpack.c.h.b16 %v418
    %v1838 = vunpack.c.l.b16 %v419
    %v1839 = vunpack.c.h.b16 %v419
    %v1840 = vunpack.c.l.b16 %v420
    %v1841 = vunpack.c.h.b16 %v420
    %v1842 = vunpack.c.l.b16 %v421
    %v1843 = vunpack.c.h.b16 %v421
    %v1844 = vunpack.c.l.b16 %v422
    %v1845 = vunpack.c.h.b16 %v422
    %v1846 = vunpack.c.l.b16 %v423
    %v1847 = vunpack.c.h.b16 %v423
    %v1848 = vunpack.c.l.b16 %v424
    %v1849 = vunpack.c.h.b16 %v424
    %v1850 = vunpack.c.l.b16 %v425
    %v1851 = vunpack.c.h.b16 %v425
    %v1852 = vunpack.c.l.b16 %v426
    %v1853 = vunpack.c.h.b16 %v426
    %v1854 = vunpack.c.l.b16 %v427
    %v1855 = vunpack.c.h.b16 %v427
    %v1856 = vunpack.c.l.b16 %v428
    %v1857 = vunpack.c.h.b16 %v428
    %v1858 = vunpack.c.l.b16 %v429
    %v1859 = vunpack.c.h.b16 %v429
    %v1860 = vunpack.c.l.b16 %v430
    %v1861 = vunpack.c.h.b16 %v430
    %v1862 = vunpack.c.l.b16 %v431
    %v1863 = vunpack.c.h.b16 %v431
    %v1864 = vunpack.c.l.b16 %v432
    %v1865 = vunpack.c.h.b16 %v432
    %v1866 = vunpack.c.l.b16 %v433
    %v1867 = vunpack.c.h.b16 %v433
    %v1868 = vunpack.c.l.b16 %v434
    %v1869 = vunpack.c.h.b16 %v434
    %v1870 = vunpack.c.l.b16 %v435
    %v1871 = vunpack.c.h.b16 %v435
    %v1872 = vunpack.c.l.b16 %v436
    %v1873 = vunpack.c.h.b16 %v436
    %v1874 = vunpack.c.l.b16 %v437
    %v1875 = vunpack.c.h.b16 %v437
    %v1876 = vunpack.c.l.b16 %v438
    %v1877 = vunpack.c.h.b16 %v438
    %v1878 = vunpack.c.l.b16 %v439
    %v1879 = vunpack.c.h.b16 %v439
    %v1880 = vunpack.c.l.b16 %v440
    %v1881 = vunpack.c.h.b16 %v440
    %v1882 = vunpack.c.l.b16 %v441
    %v1883 = vunpack.c.h.b16 %v441
    %v1884 = vunpack.c.l.b16 %v442
    %v1885 = vunpack.c.h.b16 %v442
    %v1886 = vunpack.c.l.b16 %v443
    %v1887 = vunpack.c.h.b16 %v443
    %v1888 = vunpack.c.l.b16 %v444
    %v1889 = vunpack.c.h.b16 %v444
    %v1890 = vunpack.c.l.b16 %v445
    %v1891 = vunpack.c.h.b16 %v445
    %v1892 = vunpack.c.l.b16 %v446
    %v1893 = vunpack.c.h.b16 %v446
    %v1894 = vunpack.c.l.b16 %v447
    %v1895 = vunpack.c.h.b16 %v447
    %v1896 = vunpack.c.l.b16 %v448
    %v1897 = vunpack.c.h.b16 %v448
    %v1898 = vunpack.c.l.b16 %v449
    %v1899 = vunpack.c.h.b16 %v449
    %v1900 = vunpack.c.l.b16 %v450
    %v1901 = vunpack.c.h.b16 %v450
    %v1902 = vunpack.c.l.b16 %v451
    %v1903 = vunpack.c.h.b16 %v451
    %v1904 = vunpack.c.l.b16 %v452
    %v1905 = vunpack.c.h.b16 %v452
    %v1906 = vunpack.c.l.b16 %v453
    %v1907 = vunpack.c.h.b16 %v453
    %v1908 = vunpack.c.l.b16 %v454
    %v1909 = vunpack.c.h.b16 %v454
    %v1910 = vunpack.c.l.b16 %v455
    %v1911 = vunpack.c.h.b16 %v455
    %v1912 = vunpack.c.l.b16 %v456
    %v1913 = vunpack.c.h.b16 %v456
    %v1914 = vunpack.c.l.b16 %v457
    %v1915 = vunpack.c.h.b16 %v457
    %v1916 = vunpack.c.l.b16 %v458
    %v1917 = vunpack.c.h.b16 %v458
    %v1918 = vunpack.c.l.b16 %v459
    %v1919 = vunpack.c.h.b16 %v459
    %v1920 = vunpack.c.l.b16 %v460
    %v1921 = vunpack.c.h.b16 %v460
    %v1922 = vunpack.c.l.b16 %v461
    %v1923 = vunpack.c.h.b16 %v461
    %v1924 = vunpack.c.l.b16 %v462
    %v1925 = vunpack.c.h.b16 %v462
    %v1926 = vunpack.c.l.b16 %v463
    %v1927 = vunpack.c.h.b16 %v463
    %v1928 = vunpack.c.l.b16 %v464
    %v1929 = vunpack.c.h.b16 %v464
    %v1930 = vunpack.c.l.b16 %v465
    %v1931 = vunpack.c.h.b16 %v465
    %v1932 = vunpack.c.l.b16 %v466
    %v1933 = vunpack.c.h.b16 %v466
    %v1934 = vunpack.c.l.b16 %v467
    %v1935 = vunpack.c.h.b16 %v467
    %v1936 = vunpack.c.l.b16 %v468
    %v1937 = vunpack.c.h.b16 %v468
    %v1938 = vunpack.c.l.b16 %v469
    %v1939 = vunpack.c.h.b16 %v469
    %v1940 = vunpack.c.l.b16 %v470
    %v1941 = vunpack.c.h.b16 %v470
    %v1942 = vunpack.c.l.b16 %v471
    %v1943 = vunpack.c.h.b16 %v471
    %v1944 = vunpack.c.l.b16 %v472
    %v1945 = vunpack.c.h.b16 %v472
    %v1946 = vunpack.c.l.b16 %v473
    %v1947 = vunpack.c.h.b16 %v473
    %v1948 = vunpack.c.l.b16 %v474
    %v1949 = vunpack.c.h.b16 %v474
    %v1950 = vunpack.c.l.b16 %v475
    %v1951 = vunpack.c.h.b16 %v475
    %v1952 = vunpack.c.l.b16 %v476
    %v1953 = vunpack.c.h.b16 %v476
    %v1954 = vunpack.c.l.b16 %v477
    %v1955 = vunpack.c.h.b16 %v477
    %v1956 = vunpack.c.l.b16 %v478
    %v1957 = vunpack.c.h.b16 %v478
    %v1958 = vunpack.c.l.b16 %v479
    %v1959 = vunpack.c.h.b16 %v479
    %v1960 = vunpack.c.l.b16 %v480
    %v1961 = vunpack.c.h.b16 %v480
    %v1962 = vunpack.c.l.b16 %v481
    %v1963 = vunpack.c.h.b16 %v481
    %v1964 = vunpack.c.l.b16 %v482
    %v1965 = vunpack.c.h.b16 %v482
    %v1966 = vunpack.c.l.b16 %v483
    %v1967 = vunpack.c.h.b16 %v483
    %v1968 = vunpack.c.l.b16 %v484
    %v1969 = vunpack.c.h.b16 %v484
    %v1970 = vunpack.c.l.b16 %v485
    %v1971 = vunpack.c.h.b16 %v485
    %v1972 = vunpack.c.l.b16 %v486
    %v1973 = vunpack.c.h.b16 %v486
    %v1974 = vunpack.c.l.b16 %v487
    %v1975 = vunpack.c.h.b16 %v487
    %v1976 = vunpack.c.l.b16 %v488
    %v1977 = vunpack.c.h.b16 %v488
    %v1978 = vunpack.c.l.b16 %v489
    %v1979 = vunpack.c.h.b16 %v489
    %v1980 = vunpack.c.l.b16 %v490
    %v1981 = vunpack.c.h.b16 %v490
    %v1982 = vunpack.c.l.b16 %v491
    %v1983 = vunpack.c.h.b16 %v491
    %v1984 = vunpack.c.l.b16 %v492
    %v1985 = vunpack.c.h.b16 %v492
    %v1986 = vunpack.c.l.b16 %v493
    %v1987 = vunpack.c.h.b16 %v493
    %v1988 = vunpack.c.l.b16 %v494
    %v1989 = vunpack.c.h.b16 %v494
    %v1990 = vunpack.c.l.b16 %v495
    %v1991 = vunpack.c.h.b16 %v495
    %v1992 = vunpack.c.l.b16 %v496
    %v1993 = vunpack.c.h.b16 %v496
    %v1994 = vunpack.c.l.b16 %v497
    %v1995 = vunpack.c.h.b16 %v497
    %v1996 = vunpack.c.l.b16 %v498
    %v1997 = vunpack.c.h.b16 %v498
    %v1998 = vunpack.c.l.b16 %v499
    %v1999 = vunpack.c.h.b16 %v499
    %v2000 = vunpack.c.l.b16 %v500
    %v2001 = vunpack.c.h.b16 %v500
    %v2002 = vunpack.c.l.b16 %v501
    %v2003 = vunpack.c.h.b16 %v501
    %v2004 = vunpack.c.l.b16 %v502
    %v2005 = vunpack.c.h.b16 %v502
    %v2006 = vunpack.c.l.b16 %v503
    %v2007 = vunpack.c.h.b16 %v503
    %v2008 = vunpack.c.l.b16 %v504
    %v2009 = vunpack.c.h.b16 %v504
    %v2010 = vunpack.c.l.b16 %v505
    %v2011 = vunpack.c.h.b16 %v505
    %v2012 = vunpack.c.l.b16 %v506
    %v2013 = vunpack.c.h.b16 %v506
    %v2014 = vunpack.c.l.b16 %v507
    %v2015 = vunpack.c.h.b16 %v507
    %v2016 = vunpack.c.l.b16 %v508
    %v2017 = vunpack.c.h.b16 %v508
    %v2018 = vunpack.c.l.b16 %v509
    %v2019 = vunpack.c.h.b16 %v509
    %v2020 = vunpack.c.l.b16 %v510
    %v2021 = vunpack.c.h.b16 %v510
    %v2022 = vunpack.c.l.b16 %v511
    %v2023 = vunpack.c.h.b16 %v511
    %v2024 = vunpack.c.l.b16 %v512
    %v2025 = vunpack.c.h.b16 %v512
    %v2026 = vunpack.c.l.b16 %v513
    %v2027 = vunpack.c.h.b16 %v513
    %v2028 = vunpack.c.l.b16 %v514
    %v2029 = vunpack.c.h.b16 %v514
    %v2030 = vunpack.c.l.b16 %v515
    %v2031 = vunpack.c.h.b16 %v515
    %v2032 = vunpack.c.l.b16 %v516
    %v2033 = vunpack.c.h.b16 %v516
    %v2034 = vunpack.c.l.b16 %v517
    %v2035 = vunpack.c.h.b16 %v517
    %v2036 = vunpack.c.l.b16 %v518
    %v2037 = vunpack.c.h.b16 %v518
    %v2038 = vunpack.c.l.b16 %v519
    %v2039 = vunpack.c.h.b16 %v519
    %v2040 = vunpack.c.l.b16 %v520
    %v2041 = vunpack.c.h.b16 %v520
    %v2042 = vunpack.c.l.b16 %v521
    %v2043 = vunpack.c.h.b16 %v521
    %v2044 = vunpack.c.l.b16 %v522
    %v2045 = vunpack.c.h.b16 %v522
    %v2046 = vunpack.c.l.b16 %v523
    %v2047 = vunpack.c.h.b16 %v523
    %v2048 = vunpack.c.l.b16 %v524
    %v2049 = vunpack.c.h.b16 %v524
    %v2050 = vunpack.c.l.b16 %v525
    %v2051 = vunpack.c.h.b16 %v525
    %v2052 = vunpack.c.l.b16 %v526
    %v2053 = vunpack.c.h.b16 %v526
    %v2054 = vunpack.c.l.b16 %v527
    %v2055 = vunpack.c.h.b16 %v527
    %v2056 = vunpack.c.l.b16 %v528
    %v2057 = vunpack.c.h.b16 %v528
    %v2058 = vunpack.c.l.b16 %v529
    %v2059 = vunpack.c.h.b16 %v529
    %v2060 = vunpack.c.l.b16 %v530
    %v2061 = vunpack.c.h.b16 %v530
    %v2062 = vunpack.c.l.b16 %v531
    %v2063 = vunpack.c.h.b16 %v531
    %v2064 = vunpack.c.l.b16 %v532
    %v2065 = vunpack.c.h.b16 %v532
    %v2066 = vunpack.c.l.b16 %v533
    %v2067 = vunpack.c.h.b16 %v533
    %v2068 = vunpack.c.l.b16 %v534
    %v2069 = vunpack.c.h.b16 %v534
    %v2070 = vunpack.c.l.b16 %v535
    %v2071 = vunpack.c.h.b16 %v535
    %v2072 = vunpack.c.l.b16 %v536
    %v2073 = vunpack.c.h.b16 %v536
    %v2074 = vunpack.c.l.b16 %v537
    %v2075 = vunpack.c.h.b16 %v537
    %v2076 = vunpack.c.l.b16 %v538
    %v2077 = vunpack.c.h.b16 %v538
    %v2078 = vunpack.c.l.b16 %v539
    %v2079 = vunpack.c.h.b16 %v539
    %v2080 = vunpack.c.l.b16 %v540
    %v2081 = vunpack.c.h.b16 %v540
    %v2082 = vunpack.c.l.b16 %v541
    %v2083 = vunpack.c.h.b16 %v541
    %v2084 = vunpack.c.l.b16 %v542
    %v2085 = vunpack.c.h.b16 %v542
    %v2086 = vunpack.c.l.b16 %v543
    %v2087 = vunpack.c.h.b16 %v543
    %v2088 = vunpack.c.l.b16 %v544
    %v2089 = vunpack.c.h.b16 %v544
    %v2090 = vunpack.c.l.b16 %v545
    %v2091 = vunpack.c.h.b16 %v545
    %v2092 = vunpack.c.l.b16 %v546
    %v2093 = vunpack.c.h.b16 %v546
    %v2094 = vunpack.c.l.b16 %v547
    %v2095 = vunpack.c.h.b16 %v547
    %v2096 = vunpack.c.l.b16 %v548
    %v2097 = vunpack.c.h.b16 %v548
    %v2098 = vunpack.c.l.b16 %v549
    %v2099 = vunpack.c.h.b16 %v549
    %v2100 = vunpack.c.l.b16 %v550
    %v2101 = vunpack.c.h.b16 %v550
    %v2102 = vunpack.c.l.b16 %v551
    %v2103 = vunpack.c.h.b16 %v551
    %v2104 = vunpack.c.l.b16 %v552
    %v2105 = vunpack.c.h.b16 %v552
    %v2106 = vunpack.c.l.b16 %v553
    %v2107 = vunpack.c.h.b16 %v553
    %v2108 = vunpack.c.l.b16 %v554
    %v2109 = vunpack.c.h.b16 %v554
    %v2110 = vunpack.c.l.b16 %v555
    %v2111 = vunpack.c.h.b16 %v555
    %v2112 = vpack.c.b16 %v1104, %v1088
    %v2113 = vpack.c.b16 %v1105, %v1089
    %v2114 = vpack.c.b16 %v1106, %v1090
    %v2115 = vpack.c.b16 %v1107, %v1091
    %v2116 = vpack.c.b16 %v1108, %v1092
    %v2117 = vpack.c.b16 %v1109, %v1093
    %v2118 = vpack.c.b16 %v1110, %v1094
    %v2119 = vpack.c.b16 %v1111, %v1095
    %v2120 = vpack.c.b16 %v1112, %v1096
    %v2121 = vpack.c.b16 %v1113, %v1097
    %v2122 = vpack.c.b16 %v1114, %v1098
    %v2123 = vpack.c.b16 %v1115, %v1099
    %v2124 = vpack.c.b16 %v1116, %v1100
    %v2125 = vpack.c.b16 %v1117, %v1101
    %v2126 = vpack.c.b16 %v1118, %v1102
    %v2127 = vpack.c.b16 %v1119, %v1103
    %v2128 = vpack.c.b16 %v1136, %v1120
    %v2129 = vpack.c.b16 %v1137, %v1121
    %v2130 = vpack.c.b16 %v1138, %v1122
    %v2131 = vpack.c.b16 %v1139, %v1123
    %v2132 = vpack.c.b16 %v1140, %v1124
    %v2133 = vpack.c.b16 %v1141, %v1125
    %v2134 = vpack.c.b16 %v1142, %v1126
    %v2135 = vpack.c.b16 %v1143, %v1127
    %v2136 = vpack.c.b16 %v1144, %v1128
    %v2137 = vpack.c.b16 %v1145, %v1129
    %v2138 = vpack.c.b16 %v1146, %v1130
    %v2139 = vpack.c.b16 %v1147, %v1131
    %v2140 = vpack.c.b16 %v1148, %v1132
    %v2141 = vpack.c.b16 %v1149, %v1133
    %v2142 = vpack.c.b16 %v1150, %v1134
    %v2143 = vpack.c.b16 %v1151, %v1135
    %v2144 = vpack.c.b16 %v1168, %v1152
    %v2145 = vpack.c.b16 %v1169, %v1153
    %v2146 = vpack.c.b16 %v1170, %v1154
    %v2147 = vpack.c.b16 %v1171, %v1155
    %v2148 = vpack.c.b16 %v1172, %v1156
    %v2149 = vpack.c.b16 %v1173, %v1157
    %v2150 = vpack.c.b16 %v1174, %v1158
    %v2151 = vpack.c.b16 %v1175, %v1159
    %v2152 = vpack.c.b16 %v1176, %v1160
    %v2153 = vpack.c.b16 %v1177, %v1161
    %v2154 = vpack.c.b16 %v1178, %v1162
    %v2155 = vpack.c.b16 %v1179, %v1163
    %v2156 = vpack.c.b16 %v1180, %v1164
    %v2157 = vpack.c.b16 %v1181, %v1165
    %v2158 = vpack.c.b16 %v1182, %v1166
    %v2159 = vpack.c.b16 %v1183, %v1167
    %v2160 = vpack.c.b16 %v1200, %v1184
    %v2161 = vpack.c.b16 %v1201, %v1185
    %v2162 = vpack.c.b16 %v1202, %v1186
    %v2163 = vpack.c.b16 %v1203, %v1187
    %v2164 = vpack.c.b16 %v1204, %v1188
    %v2165 = vpack.c.b16 %v1205, %v1189
    %v2166 = vpack.c.b16 %v1206, %v1190
    %v2167 = vpack.c.b16 %v1207, %v1191
    %v2168 = vpack.c.b16 %v1208, %v1192
    %v2169 = vpack.c.b16 %v1209, %v1193
    %v2170 = vpack.c.b16 %v1210, %v1194
    %v2171 = vpack.c.b16 %v1211, %v1195
    %v2172 = vpack.c.b16 %v1212, %v1196
    %v2173 = vpack.c.b16 %v1213, %v1197
    %v2174 = vpack.c.b16 %v1214, %v1198
    %v2175 = vpack.c.b16 %v1215, %v1199
    %v2176 = vpack.c.b16 %v1232, %v1216
    %v2177 = vpack.c.b16 %v1233, %v1217
    %v2178 = vpack.c.b16 %v1234, %v1218
    %v2179 = vpack.c.b16 %v1235, %v1219
    %v2180 = vpack.c.b16 %v1236, %v1220
    %v2181 = vpack.c.b16 %v1237, %v1221
    %v2182 = vpack.c.b16 %v1238, %v1222
    %v2183 = vpack.c.b16 %v1239, %v1223
    %v2184 = vpack.c.b16 %v1240, %v1224
    %v2185 = vpack.c.b16 %v1241, %v1225
    %v2186 = vpack.c.b16 %v1242, %v1226
    %v2187 = vpack.c.b16 %v1243, %v1227
    %v2188 = vpack.c.b16 %v1244, %v1228
    %v2189 = vpack.c.b16 %v1245, %v1229
    %v2190 = vpack.c.b16 %v1246, %v1230
    %v2191 = vpack.c.b16 %v1247, %v1231
    %v2192 = vpack.c.b16 %v1264, %v1248
    %v2193 = vpack.c.b16 %v1265, %v1249
    %v2194 = vpack.c.b16 %v1266, %v1250
    %v2195 = vpack.c.b16 %v1267, %v1251
    %v2196 = vpack.c.b16 %v1268, %v1252
    %v2197 = vpack.c.b16 %v1269, %v1253
    %v2198 = vpack.c.b16 %v1270, %v1254
    %v2199 = vpack.c.b16 %v1271, %v1255
    %v2200 = vpack.c.b16 %v1272, %v1256
    %v2201 = vpack.c.b16 %v1273, %v1257
    %v2202 = vpack.c.b16 %v1274, %v1258
    %v2203 = vpack.c.b16 %v1275, %v1259
    %v2204 = vpack.c.b16 %v1276, %v1260
    %v2205 = vpack.c.b16 %v1277, %v1261
    %v2206 = vpack.c.b16 %v1278, %v1262
    %v2207 = vpack.c.b16 %v1279, %v1263
    %v2208 = vpack.c.b16 %v1296, %v1280
    %v2209 = vpack.c.b16 %v1297, %v1281
    %v2210 = vpack.c.b16 %v1298, %v1282
    %v2211 = vpack.c.b16 %v1299, %v1283
    %v2212 = vpack.c.b16 %v1300, %v1284
    %v2213 = vpack.c.b16 %v1301, %v1285
    %v2214 = vpack.c.b16 %v1302, %v1286
    %v2215 = vpack.c.b16 %v1303, %v1287
    %v2216 = vpack.c.b16 %v1304, %v1288
    %v2217 = vpack.c.b16 %v1305, %v1289
    %v2218 = vpack.c.b16 %v1306, %v1290
    %v2219 = vpack.c.b16 %v1307, %v1291
    %v2220 = vpack.c.b16 %v1308, %v1292
    %v2221 = vpack.c.b16 %v1309, %v1293
    %v2222 = vpack.c.b16 %v1310, %v1294
    %v2223 = vpack.c.b16 %v1311, %v1295
    %v2224 = vpack.c.b16 %v1328, %v1312
    %v2225 = vpack.c.b16 %v1329, %v1313
    %v2226 = vpack.c.b16 %v1330, %v1314
    %v2227 = vpack.c.b16 %v1331, %v1315
    %v2228 = vpack.c.b16 %v1332, %v1316
    %v2229 = vpack.c.b16 %v1333, %v1317
    %v2230 = vpack.c.b16 %v1334, %v1318
    %v2231 = vpack.c.b16 %v1335, %v1319
    %v2232 = vpack.c.b16 %v1336, %v1320
    %v2233 = vpack.c.b16 %v1337, %v1321
    %v2234 = vpack.c.b16 %v1338, %v1322
    %v2235 = vpack.c.b16 %v1339, %v1323
    %v2236 = vpack.c.b16 %v1340, %v1324
    %v2237 = vpack.c.b16 %v1341, %v1325
    %v2238 = vpack.c.b16 %v1342, %v1326
    %v2239 = vpack.c.b16 %v1343, %v1327
    %v2240 = vpack.c.b16 %v1360, %v1344
    %v2241 = vpack.c.b16 %v1361, %v1345
    %v2242 = vpack.c.b16 %v1362, %v1346
    %v2243 = vpack.c.b16 %v1363, %v1347
    %v2244 = vpack.c.b16 %v1364, %v1348
    %v2245 = vpack.c.b16 %v1365, %v1349
    %v2246 = vpack.c.b16 %v1366, %v1350
    %v2247 = vpack.c.b16 %v1367, %v1351
    %v2248 = vpack.c.b16 %v1368, %v1352
    %v2249 = vpack.c.b16 %v1369, %v1353
    %v2250 = vpack.c.b16 %v1370, %v1354
    %v2251 = vpack.c.b16 %v1371, %v1355
    %v2252 = vpack.c.b16 %v1372, %v1356
    %v2253 = vpack.c.b16 %v1373, %v1357
    %v2254 = vpack.c.b16 %v1374, %v1358
    %v2255 = vpack.c.b16 %v1375, %v1359
    %v2256 = vpack.c.b16 %v1392, %v1376
    %v2257 = vpack.c.b16 %v1393, %v1377
    %v2258 = vpack.c.b16 %v1394, %v1378
    %v2259 = vpack.c.b16 %v1395, %v1379
    %v2260 = vpack.c.b16 %v1396, %v1380
    %v2261 = vpack.c.b16 %v1397, %v1381
    %v2262 = vpack.c.b16 %v1398, %v1382
    %v2263 = vpack.c.b16 %v1399, %v1383
    %v2264 = vpack.c.b16 %v1400, %v1384
    %v2265 = vpack.c.b16 %v1401, %v1385
    %v2266 = vpack.c.b16 %v1402, %v1386
    %v2267 = vpack.c.b16 %v1403, %v1387
    %v2268 = vpack.c.b16 %v1404, %v1388
    %v2269 = vpack.c.b16 %v1405, %v1389
    %v2270 = vpack.c.b16 %v1406, %v1390
    %v2271 = vpack.c.b16 %v1407, %v1391
    %v2272 = vpack.c.b16 %v1424, %v1408
    %v2273 = vpack.c.b16 %v1425, %v1409
    %v2274 = vpack.c.b16 %v1426, %v1410
    %v2275 = vpack.c.b16 %v1427, %v1411
    %v2276 = vpack.c.b16 %v1428, %v1412
    %v2277 = vpack.c.b16 %v1429, %v1413
    %v2278 = vpack.c.b16 %v1430, %v1414
    %v2279 = vpack.c.b16 %v1431, %v1415
    %v2280 = vpack.c.b16 %v1432, %v1416
    %v2281 = vpack.c.b16 %v1433, %v1417
    %v2282 = vpack.c.b16 %v1434, %v1418
    %v2283 = vpack.c.b16 %v1435, %v1419
    %v2284 = vpack.c.b16 %v1436, %v1420
    %v2285 = vpack.c.b16 %v1437, %v1421
    %v2286 = vpack.c.b16 %v1438, %v1422
    %v2287 = vpack.c.b16 %v1439, %v1423
    %v2288 = vpack.c.b16 %v1456, %v1440
    %v2289 = vpack.c.b16 %v1457, %v1441
    %v2290 = vpack.c.b16 %v1458, %v1442
    %v2291 = vpack.c.b16 %v1459, %v1443
    %v2292 = vpack.c.b16 %v1460, %v1444
    %v2293 = vpack.c.b16 %v1461, %v1445
    %v2294 = vpack.c.b16 %v1462, %v1446
    %v2295 = vpack.c.b16 %v1463, %v1447
    %v2296 = vpack.c.b16 %v1464, %v1448
    %v2297 = vpack.c.b16 %v1465, %v1449
    %v2298 = vpack.c.b16 %v1466, %v1450
    %v2299 = vpack.c.b16 %v1467, %v1451
    %v2300 = vpack.c.b16 %v1468, %v1452
    %v2301 = vpack.c.b16 %v1469, %v1453
    %v2302 = vpack.c.b16 %v1470, %v1454
    %v2303 = vpack.c.b16 %v1471, %v1455
    %v2304 = vpack.c.b16 %v1488, %v1472
    %v2305 = vpack.c.b16 %v1489, %v1473
    %v2306 = vpack.c.b16 %v1490, %v1474
    %v2307 = vpack.c.b16 %v1491, %v1475
    %v2308 = vpack.c.b16 %v1492, %v1476
    %v2309 = vpack.c.b16 %v1493, %v1477
    %v2310 = vpack.c.b16 %v1494, %v1478
    %v2311 = vpack.c.b16 %v1495, %v1479
    %v2312 = vpack.c.b16 %v1496, %v1480
    %v2313 = vpack.c.b16 %v1497, %v1481
    %v2314 = vpack.c.b16 %v1498, %v1482
    %v2315 = vpack.c.b16 %v1499, %v1483
    %v2316 = vpack.c.b16 %v1500, %v1484
    %v2317 = vpack.c.b16 %v1501, %v1485
    %v2318 = vpack.c.b16 %v1502, %v1486
    %v2319 = vpack.c.b16 %v1503, %v1487
    %v2320 = vpack.c.b16 %v1520, %v1504
    %v2321 = vpack.c.b16 %v1521, %v1505
    %v2322 = vpack.c.b16 %v1522, %v1506
    %v2323 = vpack.c.b16 %v1523, %v1507
    %v2324 = vpack.c.b16 %v1524, %v1508
    %v2325 = vpack.c.b16 %v1525, %v1509
    %v2326 = vpack.c.b16 %v1526, %v1510
    %v2327 = vpack.c.b16 %v1527, %v1511
    %v2328 = vpack.c.b16 %v1528, %v1512
    %v2329 = vpack.c.b16 %v1529, %v1513
    %v2330 = vpack.c.b16 %v1530, %v1514
    %v2331 = vpack.c.b16 %v1531, %v1515
    %v2332 = vpack.c.b16 %v1532, %v1516
    %v2333 = vpack.c.b16 %v1533, %v1517
    %v2334 = vpack.c.b16 %v1534, %v1518
    %v2335 = vpack.c.b16 %v1535, %v1519
    %v2336 = vpack.c.b16 %v1552, %v1536
    %v2337 = vpack.c.b16 %v1553, %v1537
    %v2338 = vpack.c.b16 %v1554, %v1538
    %v2339 = vpack.c.b16 %v1555, %v1539
    %v2340 = vpack.c.b16 %v1556, %v1540
    %v2341 = vpack.c.b16 %v1557, %v1541
    %v2342 = vpack.c.b16 %v1558, %v1542
    %v2343 = vpack.c.b16 %v1559, %v1543
    %v2344 = vpack.c.b16 %v1560, %v1544
    %v2345 = vpack.c.b16 %v1561, %v1545
    %v2346 = vpack.c.b16 %v1562, %v1546
    %v2347 = vpack.c.b16 %v1563, %v1547
    %v2348 = vpack.c.b16 %v1564, %v1548
    %v2349 = vpack.c.b16 %v1565, %v1549
    %v2350 = vpack.c.b16 %v1566, %v1550
    %v2351 = vpack.c.b16 %v1567, %v1551
    %v2352 = vpack.c.b16 %v1584, %v1568
    %v2353 = vpack.c.b16 %v1585, %v1569
    %v2354 = vpack.c.b16 %v1586, %v1570
    %v2355 = vpack.c.b16 %v1587, %v1571
    %v2356 = vpack.c.b16 %v1588, %v1572
    %v2357 = vpack.c.b16 %v1589, %v1573
    %v2358 = vpack.c.b16 %v1590, %v1574
    %v2359 = vpack.c.b16 %v1591, %v1575
    %v2360 = vpack.c.b16 %v1592, %v1576
    %v2361 = vpack.c.b16 %v1593, %v1577
    %v2362 = vpack.c.b16 %v1594, %v1578
    %v2363 = vpack.c.b16 %v1595, %v1579
    %v2364 = vpack.c.b16 %v1596, %v1580
    %v2365 = vpack.c.b16 %v1597, %v1581
    %v2366 = vpack.c.b16 %v1598, %v1582
    %v2367 = vpack.c.b16 %v1599, %v1583
    %v2368 = vpack.c.b16 %v1616, %v1600
    %v2369 = vpack.c.b16 %v1617, %v1601
    %v2370 = vpack.c.b16 %v1618, %v1602
    %v2371 = vpack.c.b16 %v1619, %v1603
    %v2372 = vpack.c.b16 %v1620, %v1604
    %v2373 = vpack.c.b16 %v1621, %v1605
    %v2374 = vpack.c.b16 %v1622, %v1606
    %v2375 = vpack.c.b16 %v1623, %v1607
    %v2376 = vpack.c.b16 %v1624, %v1608
    %v2377 = vpack.c.b16 %v1625, %v1609
    %v2378 = vpack.c.b16 %v1626, %v1610
    %v2379 = vpack.c.b16 %v1627, %v1611
    %v2380 = vpack.c.b16 %v1628, %v1612
    %v2381 = vpack.c.b16 %v1629, %v1613
    %v2382 = vpack.c.b16 %v1630, %v1614
    %v2383 = vpack.c.b16 %v1631, %v1615
    %v2384 = vpack.c.b16 %v1648, %v1632
    %v2385 = vpack.c.b16 %v1649, %v1633
    %v2386 = vpack.c.b16 %v1650, %v1634
    %v2387 = vpack.c.b16 %v1651, %v1635
    %v2388 = vpack.c.b16 %v1652, %v1636
    %v2389 = vpack.c.b16 %v1653, %v1637
    %v2390 = vpack.c.b16 %v1654, %v1638
    %v2391 = vpack.c.b16 %v1655, %v1639
    %v2392 = vpack.c.b16 %v1656, %v1640
    %v2393 = vpack.c.b16 %v1657, %v1641
    %v2394 = vpack.c.b16 %v1658, %v1642
    %v2395 = vpack.c.b16 %v1659, %v1643
    %v2396 = vpack.c.b16 %v1660, %v1644
    %v2397 = vpack.c.b16 %v1661, %v1645
    %v2398 = vpack.c.b16 %v1662, %v1646
    %v2399 = vpack.c.b16 %v1663, %v1647
    %v2400 = vpack.c.b16 %v1680, %v1664
    %v2401 = vpack.c.b16 %v1681, %v1665
    %v2402 = vpack.c.b16 %v1682, %v1666
    %v2403 = vpack.c.b16 %v1683, %v1667
    %v2404 = vpack.c.b16 %v1684, %v1668
    %v2405 = vpack.c.b16 %v1685, %v1669
    %v2406 = vpack.c.b16 %v1686, %v1670
    %v2407 = vpack.c.b16 %v1687, %v1671
    %v2408 = vpack.c.b16 %v1688, %v1672
    %v2409 = vpack.c.b16 %v1689, %v1673
    %v2410 = vpack.c.b16 %v1690, %v1674
    %v2411 = vpack.c.b16 %v1691, %v1675
    %v2412 = vpack.c.b16 %v1692, %v1676
    %v2413 = vpack.c.b16 %v1693, %v1677
    %v2414 = vpack.c.b16 %v1694, %v1678
    %v2415 = vpack.c.b16 %v1695, %v1679
    %v2416 = vpack.c.b16 %v1712, %v1696
    %v2417 = vpack.c.b16 %v1713, %v1697
    %v2418 = vpack.c.b16 %v1714, %v1698
    %v2419 = vpack.c.b16 %v1715, %v1699
    %v2420 = vpack.c.b16 %v1716, %v1700
    %v2421 = vpack.c.b16 %v1717, %v1701
    %v2422 = vpack.c.b16 %v1718, %v1702
    %v2423 = vpack.c.b16 %v1719, %v1703
    %v2424 = vpack.c.b16 %v1720, %v1704
    %v2425 = vpack.c.b16 %v1721, %v1705
    %v2426 = vpack.c.b16 %v1722, %v1706
    %v2427 = vpack.c.b16 %v1723, %v1707
    %v2428 = vpack.c.b16 %v1724, %v1708
    %v2429 = vpack.c.b16 %v1725, %v1709
    %v2430 = vpack.c.b16 %v1726, %v1710
    %v2431 = vpack.c.b16 %v1727, %v1711
    %v2432 = vpack.c.b16 %v1744, %v1728
    %v2433 = vpack.c.b16 %v1745, %v1729
    %v2434 = vpack.c.b16 %v1746, %v1730
    %v2435 = vpack.c.b16 %v1747, %v1731
    %v2436 = vpack.c.b16 %v1748, %v1732
    %v2437 = vpack.c.b16 %v1749, %v1733
    %v2438 = vpack.c.b16 %v1750, %v1734
    %v2439 = vpack.c.b16 %v1751, %v1735
    %v2440 = vpack.c.b16 %v1752, %v1736
    %v2441 = vpack.c.b16 %v1753, %v1737
    %v2442 = vpack.c.b16 %v1754, %v1738
    %v2443 = vpack.c.b16 %v1755, %v1739
    %v2444 = vpack.c.b16 %v1756, %v1740
    %v2445 = vpack.c.b16 %v1757, %v1741
    %v2446 = vpack.c.b16 %v1758, %v1742
    %v2447 = vpack.c.b16 %v1759, %v1743
    %v2448 = vpack.c.b16 %v1776, %v1760
    %v2449 = vpack.c.b16 %v1777, %v1761
    %v2450 = vpack.c.b16 %v1778, %v1762
    %v2451 = vpack.c.b16 %v1779, %v1763
    %v2452 = vpack.c.b16 %v1780, %v1764
    %v2453 = vpack.c.b16 %v1781, %v1765
    %v2454 = vpack.c.b16 %v1782, %v1766
    %v2455 = vpack.c.b16 %v1783, %v1767
    %v2456 = vpack.c.b16 %v1784, %v1768
    %v2457 = vpack.c.b16 %v1785, %v1769
    %v2458 = vpack.c.b16 %v1786, %v1770
    %v2459 = vpack.c.b16 %v1787, %v1771
    %v2460 = vpack.c.b16 %v1788, %v1772
    %v2461 = vpack.c.b16 %v1789, %v1773
    %v2462 = vpack.c.b16 %v1790, %v1774
    %v2463 = vpack.c.b16 %v1791, %v1775
    %v2464 = vpack.c.b16 %v1808, %v1792
    %v2465 = vpack.c.b16 %v1809, %v1793
    %v2466 = vpack.c.b16 %v1810, %v1794
    %v2467 = vpack.c.b16 %v1811, %v1795
    %v2468 = vpack.c.b16 %v1812, %v1796
    %v2469 = vpack.c.b16 %v1813, %v1797
    %v2470 = vpack.c.b16 %v1814, %v1798
    %v2471 = vpack.c.b16 %v1815, %v1799
    %v2472 = vpack.c.b16 %v1816, %v1800
    %v2473 = vpack.c.b16 %v1817, %v1801
    %v2474 = vpack.c.b16 %v1818, %v1802
    %v2475 = vpack.c.b16 %v1819, %v1803
    %v2476 = vpack.c.b16 %v1820, %v1804
    %v2477 = vpack.c.b16 %v1821, %v1805
    %v2478 = vpack.c.b16 %v1822, %v1806
    %v2479 = vpack.c.b16 %v1823, %v1807
    %v2480 = vpack.c.b16 %v1840, %v1824
    %v2481 = vpack.c.b16 %v1841, %v1825
    %v2482 = vpack.c.b16 %v1842, %v1826
    %v2483 = vpack.c.b16 %v1843, %v1827
    %v2484 = vpack.c.b16 %v1844, %v1828
    %v2485 = vpack.c.b16 %v1845, %v1829
    %v2486 = vpack.c.b16 %v1846, %v1830
    %v2487 = vpack.c.b16 %v1847, %v1831
    %v2488 = vpack.c.b16 %v1848, %v1832
    %v2489 = vpack.c.b16 %v1849, %v1833
    %v2490 = vpack.c.b16 %v1850, %v1834
    %v2491 = vpack.c.b16 %v1851, %v1835
    %v2492 = vpack.c.b16 %v1852, %v1836
    %v2493 = vpack.c.b16 %v1853, %v1837
    %v2494 = vpack.c.b16 %v1854, %v1838
    %v2495 = vpack.c.b16 %v1855, %v1839
    %v2496 = vpack.c.b16 %v1872, %v1856
    %v2497 = vpack.c.b16 %v1873, %v1857
    %v2498 = vpack.c.b16 %v1874, %v1858
    %v2499 = vpack.c.b16 %v1875, %v1859
    %v2500 = vpack.c.b16 %v1876, %v1860
    %v2501 = vpack.c.b16 %v1877, %v1861
    %v2502 = vpack.c.b16 %v1878, %v1862
    %v2503 = vpack.c.b16 %v1879, %v1863
    %v2504 = vpack.c.b16 %v1880, %v1864
    %v2505 = vpack.c.b16 %v1881, %v1865
    %v2506 = vpack.c.b16 %v1882, %v1866
    %v2507 = vpack.c.b16 %v1883, %v1867
    %v2508 = vpack.c.b16 %v1884, %v1868
    %v2509 = vpack.c.b16 %v1885, %v1869
    %v2510 = vpack.c.b16 %v1886, %v1870
    %v2511 = vpack.c.b16 %v1887, %v1871
    %v2512 = vpack.c.b16 %v1904, %v1888
    %v2513 = vpack.c.b16 %v1905, %v1889
    %v2514 = vpack.c.b16 %v1906, %v1890
    %v2515 = vpack.c.b16 %v1907, %v1891
    %v2516 = vpack.c.b16 %v1908, %v1892
    %v2517 = vpack.c.b16 %v1909, %v1893
    %v2518 = vpack.c.b16 %v1910, %v1894
    %v2519 = vpack.c.b16 %v1911, %v1895
    %v2520 = vpack.c.b16 %v1912, %v1896
    %v2521 = vpack.c.b16 %v1913, %v1897
    %v2522 = vpack.c.b16 %v1914, %v1898
    %v2523 = vpack.c.b16 %v1915, %v1899
    %v2524 = vpack.c.b16 %v1916, %v1900
    %v2525 = vpack.c.b16 %v1917, %v1901
    %v2526 = vpack.c.b16 %v1918, %v1902
    %v2527 = vpack.c.b16 %v1919, %v1903
    %v2528 = vpack.c.b16 %v1936, %v1920
    %v2529 = vpack.c.b16 %v1937, %v1921
    %v2530 = vpack.c.b16 %v1938, %v1922
    %v2531 = vpack.c.b16 %v1939, %v1923
    %v2532 = vpack.c.b16 %v1940, %v1924
    %v2533 = vpack.c.b16 %v1941, %v1925
    %v2534 = vpack.c.b16 %v1942, %v1926
    %v2535 = vpack.c.b16 %v1943, %v1927
    %v2536 = vpack.c.b16 %v1944, %v1928
    %v2537 = vpack.c.b16 %v1945, %v1929
    %v2538 = vpack.c.b16 %v1946, %v1930
    %v2539 = vpack.c.b16 %v1947, %v1931
    %v2540 = vpack.c.b16 %v1948, %v1932
    %v2541 = vpack.c.b16 %v1949, %v1933
    %v2542 = vpack.c.b16 %v1950, %v1934
    %v2543 = vpack.c.b16 %v1951, %v1935
    %v2544 = vpack.c.b16 %v1968, %v1952
    %v2545 = vpack.c.b16 %v1969, %v1953
    %v2546 = vpack.c.b16 %v1970, %v1954
    %v2547 = vpack.c.b16 %v1971, %v1955
    %v2548 = vpack.c.b16 %v1972, %v1956
    %v2549 = vpack.c.b16 %v1973, %v1957
    %v2550 = vpack.c.b16 %v1974, %v1958
    %v2551 = vpack.c.b16 %v1975, %v1959
    %v2552 = vpack.c.b16 %v1976, %v1960
    %v2553 = vpack.c.b16 %v1977, %v1961
    %v2554 = vpack.c.b16 %v1978, %v1962
    %v2555 = vpack.c.b16 %v1979, %v1963
    %v2556 = vpack.c.b16 %v1980, %v1964
    %v2557 = vpack.c.b16 %v1981, %v1965
    %v2558 = vpack.c.b16 %v1982, %v1966
    %v2559 = vpack.c.b16 %v1983, %v1967
    %v2560 = vpack.c.b16 %v2000, %v1984
    %v2561 = vpack.c.b16 %v2001, %v1985
    %v2562 = vpack.c.b16 %v2002, %v1986
    %v2563 = vpack.c.b16 %v2003, %v1987
    %v2564 = vpack.c.b16 %v2004, %v1988
    %v2565 = vpack.c.b16 %v2005, %v1989
    %v2566 = vpack.c.b16 %v2006, %v1990
    %v2567 = vpack.c.b16 %v2007, %v1991
    %v2568 = vpack.c.b16 %v2008, %v1992
    %v2569 = vpack.c.b16 %v2009, %v1993
    %v2570 = vpack.c.b16 %v2010, %v1994
    %v2571 = vpack.c.b16 %v2011, %v1995
    %v2572 = vpack.c.b16 %v2012, %v1996
    %v2573 = vpack.c.b16 %v2013, %v1997
    %v2574 = vpack.c.b16 %v2014, %v1998
    %v2575 = vpack.c.b16 %v2015, %v1999
    %v2576 = vpack.c.b16 %v2032, %v2016
    %v2577 = vpack.c.b16 %v2033, %v2017
    %v2578 = vpack.c.b16 %v2034, %v2018
    %v2579 = vpack.c.b16 %v2035, %v2019
    %v2580 = vpack.c.b16 %v2036, %v2020
    %v2581 = vpack.c.b16 %v2037, %v2021
    %v2582 = vpack.c.b16 %v2038, %v2022
    %v2583 = vpack.c.b16 %v2039, %v2023
    %v2584 = vpack.c.b16 %v2040, %v2024
    %v2585 = vpack.c.b16 %v2041, %v2025
    %v2586 = vpack.c.b16 %v2042, %v2026
    %v2587 = vpack.c.b16 %v2043, %v2027
    %v2588 = vpack.c.b16 %v2044, %v2028
    %v2589 = vpack.c.b16 %v2045, %v2029
    %v2590 = vpack.c.b16 %v2046, %v2030
    %v2591 = vpack.c.b16 %v2047, %v2031
    %v2592 = vpack.c.b16 %v2064, %v2048
    %v2593 = vpack.c.b16 %v2065, %v2049
    %v2594 = vpack.c.b16 %v2066, %v2050
    %v2595 = vpack.c.b16 %v2067, %v2051
    %v2596 = vpack.c.b16 %v2068, %v2052
    %v2597 = vpack.c.b16 %v2069, %v2053
    %v2598 = vpack.c.b16 %v2070, %v2054
    %v2599 = vpack.c.b16 %v2071, %v2055
    %v2600 = vpack.c.b16 %v2072, %v2056
    %v2601 = vpack.c.b16 %v2073, %v2057
    %v2602 = vpack.c.b16 %v2074, %v2058
    %v2603 = vpack.c.b16 %v2075, %v2059
    %v2604 = vpack.c.b16 %v2076, %v2060
    %v2605 = vpack.c.b16 %v2077, %v2061
    %v2606 = vpack.c.b16 %v2078, %v2062
    %v2607 = vpack.c.b16 %v2079, %v2063
    %v2608 = vpack.c.b16 %v2096, %v2080
    %v2609 = vpack.c.b16 %v2097, %v2081
    %v2610 = vpack.c.b16 %v2098, %v2082
    %v2611 = vpack.c.b16 %v2099, %v2083
    %v2612 = vpack.c.b16 %v2100, %v2084
    %v2613 = vpack.c.b16 %v2101, %v2085
    %v2614 = vpack.c.b16 %v2102, %v2086
    %v2615 = vpack.c.b16 %v2103, %v2087
    %v2616 = vpack.c.b16 %v2104, %v2088
    %v2617 = vpack.c.b16 %v2105, %v2089
    %v2618 = vpack.c.b16 %v2106, %v2090
    %v2619 = vpack.c.b16 %v2107, %v2091
    %v2620 = vpack.c.b16 %v2108, %v2092
    %v2621 = vpack.c.b16 %v2109, %v2093
    %v2622 = vpack.c.b16 %v2110, %v2094
    %v2623 = vpack.c.b16 %v2111, %v2095
    %3136 = vmatprep.subr.bf16.mxu0 %v2113
    %3137 = vmatpush1.bf16.msra.mxu0 %v2112
    %3138 = vmatprep.subr.bf16.mxu0 %v2129
    %3139 = vmatpush1.bf16.msra.mxu0 %v2128
    %3140 = vmatprep.subr.bf16.mxu0 %v2145
    %3141 = vmatpush1.bf16.msra.mxu0 %v2144
    %3142 = vmatprep.subr.bf16.mxu0 %v2161
    %3143 = vmatpush1.bf16.msra.mxu0 %v2160
    %3144 = vmatprep.subr.bf16.mxu0 %v2177
    %3145 = vmatpush1.bf16.msra.mxu0 %v2176
    %3146 = vmatprep.subr.bf16.mxu0 %v2193
    %3147 = vmatpush1.bf16.msra.mxu0 %v2192
    %3148 = vmatprep.subr.bf16.mxu0 %v2209
    %3149 = vmatpush1.bf16.msra.mxu0 %v2208
    %3150 = vmatprep.subr.bf16.mxu0 %v2225
    %3151 = vmatpush1.bf16.msra.mxu0 %v2224
    %3152 = vmatprep.subr.bf16.mxu0 %v2241
    %3153 = vmatpush1.bf16.msra.mxu0 %v2240
    %3154 = vmatprep.subr.bf16.mxu0 %v2257
    %3155 = vmatpush1.bf16.msra.mxu0 %v2256
    %3156 = vmatprep.subr.bf16.mxu0 %v2273
    %3157 = vmatpush1.bf16.msra.mxu0 %v2272
    %3158 = vmatprep.subr.bf16.mxu0 %v2289
    %3159 = vmatpush1.bf16.msra.mxu0 %v2288
    %3160 = vmatprep.subr.bf16.mxu0 %v2305
    %3161 = vmatpush1.bf16.msra.mxu0 %v2304
    %3162 = vmatprep.subr.bf16.mxu0 %v2321
    %3163 = vmatpush1.bf16.msra.mxu0 %v2320
    %3164 = vmatprep.subr.bf16.mxu0 %v2337
    %3165 = vmatpush1.bf16.msra.mxu0 %v2336
    %3166 = vmatprep.subr.bf16.mxu0 %v2353
    %3167 = vmatpush1.bf16.msra.mxu0 %v2352
    %3168 = vmatprep.mubr.bf16.mxu0 %v569
    %3169 = vmatmul.mubr.bf16.gmra.mrb[0].mxu0 %v568
    %v3170 = vpop.f32.mrb[0].mxu0
    %v3171 = vadd.f32 0.0, %v3170
    %v3172 = vpop.f32.mrb[0].mxu0
    %v3173 = vadd.f32 0.0, %v3172
    %v3174 = vpop.f32.mrb[0].mxu0
    %v3175 = vadd.f32 0.0, %v3174
    %v3176 = vpop.f32.mrb[0].mxu0
    %v3177 = vadd.f32 0.0, %v3176
    %3178 = vdwg.mxu0
    %3179 = vmatprep.subr.bf16.mxu0 %v2369
    %3180 = vmatpush1.bf16.msra.mxu0 %v2368
    %3181 = vmatprep.subr.bf16.mxu0 %v2385
    %3182 = vmatpush1.bf16.msra.mxu0 %v2384
    %3183 = vmatprep.subr.bf16.mxu0 %v2401
    %3184 = vmatpush1.bf16.msra.mxu0 %v2400
    %3185 = vmatprep.subr.bf16.mxu0 %v2417
    %3186 = vmatpush1.bf16.msra.mxu0 %v2416
    %3187 = vmatprep.subr.bf16.mxu0 %v2433
    %3188 = vmatpush1.bf16.msra.mxu0 %v2432
    %3189 = vmatprep.subr.bf16.mxu0 %v2449
    %3190 = vmatpush1.bf16.msra.mxu0 %v2448
    %3191 = vmatprep.subr.bf16.mxu0 %v2465
    %3192 = vmatpush1.bf16.msra.mxu0 %v2464
    %3193 = vmatprep.subr.bf16.mxu0 %v2481
    %3194 = vmatpush1.bf16.msra.mxu0 %v2480
    %3195 = vmatprep.subr.bf16.mxu0 %v2497
    %3196 = vmatpush1.bf16.msra.mxu0 %v2496
    %3197 = vmatprep.subr.bf16.mxu0 %v2513
    %3198 = vmatpush1.bf16.msra.mxu0 %v2512
    %3199 = vmatprep.subr.bf16.mxu0 %v2529
    %3200 = vmatpush1.bf16.msra.mxu0 %v2528
    %3201 = vmatprep.subr.bf16.mxu0 %v2545
    %3202 = vmatpush1.bf16.msra.mxu0 %v2544
    %3203 = vmatprep.subr.bf16.mxu0 %v2561
    %3204 = vmatpush1.bf16.msra.mxu0 %v2560
    %3205 = vmatprep.subr.bf16.mxu0 %v2577
    %3206 = vmatpush1.bf16.msra.mxu0 %v2576
    %3207 = vmatprep.subr.bf16.mxu0 %v2593
    %3208 = vmatpush1.bf16.msra.mxu0 %v2592
    %3209 = vmatprep.subr.bf16.mxu0 %v2609
    %3210 = vmatpush1.bf16.msra.mxu0 %v2608
    %3211 = vmatprep.mubr.bf16.mxu0 %v571
    %3212 = vmatmul.mubr.bf16.gmra.mrb[0].mxu0 %v570
    %v3213 = vpop.f32.mrb[0].mxu0
    %v3214 = vadd.f32 %v3171, %v3213
    %v3215 = vpop.f32.mrb[0].mxu0
    %v3216 = vadd.f32 %v3173, %v3215
    %v3217 = vpop.f32.mrb[0].mxu0
    %v3218 = vadd.f32 %v3175, %v3217
    %v3219 = vpop.f32.mrb[0].mxu0
    %v3220 = vadd.f32 %v3177, %v3219
    %3221 = vdwg.mxu0
    %3222 = vmatprep.subr.bf16.mxu0 %v2115
    %3223 = vmatpush1.bf16.msra.mxu0 %v2114
    %3224 = vmatprep.subr.bf16.mxu0 %v2131
    %3225 = vmatpush1.bf16.msra.mxu0 %v2130
    %3226 = vmatprep.subr.bf16.mxu0 %v2147
    %3227 = vmatpush1.bf16.msra.mxu0 %v2146
    %3228 = vmatprep.subr.bf16.mxu0 %v2163
    %3229 = vmatpush1.bf16.msra.mxu0 %v2162
    %3230 = vmatprep.subr.bf16.mxu0 %v2179
    %3231 = vmatpush1.bf16.msra.mxu0 %v2178
    %3232 = vmatprep.subr.bf16.mxu0 %v2195
    %3233 = vmatpush1.bf16.msra.mxu0 %v2194
    %3234 = vmatprep.subr.bf16.mxu0 %v2211
    %3235 = vmatpush1.bf16.msra.mxu0 %v2210
    %3236 = vmatprep.subr.bf16.mxu0 %v2227
    %3237 = vmatpush1.bf16.msra.mxu0 %v2226
    %3238 = vmatprep.subr.bf16.mxu0 %v2243
    %3239 = vmatpush1.bf16.msra.mxu0 %v2242
    %3240 = vmatprep.subr.bf16.mxu0 %v2259
    %3241 = vmatpush1.bf16.msra.mxu0 %v2258
    %3242 = vmatprep.subr.bf16.mxu0 %v2275
    %3243 = vmatpush1.bf16.msra.mxu0 %v2274
    %3244 = vmatprep.subr.bf16.mxu0 %v2291
    %3245 = vmatpush1.bf16.msra.mxu0 %v2290
    %3246 = vmatprep.subr.bf16.mxu0 %v2307
    %3247 = vmatpush1.bf16.msra.mxu0 %v2306
    %3248 = vmatprep.subr.bf16.mxu0 %v2323
    %3249 = vmatpush1.bf16.msra.mxu0 %v2322
    %3250 = vmatprep.subr.bf16.mxu0 %v2339
    %3251 = vmatpush1.bf16.msra.mxu0 %v2338
    %3252 = vmatprep.subr.bf16.mxu0 %v2355
    %3253 = vmatpush1.bf16.msra.mxu0 %v2354
    %3254 = vmatprep.mubr.bf16.mxu0 %v569
    %3255 = vmatmul.mubr.bf16.gmra.mrb[0].mxu0 %v568
    %v3256 = vpop.f32.mrb[0].mxu0
    %v3257 = vadd.f32 0.0, %v3256
    %v3258 = vpop.f32.mrb[0].mxu0
    %v3259 = vadd.f32 0.0, %v3258
    %v3260 = vpop.f32.mrb[0].mxu0
    %v3261 = vadd.f32 0.0, %v3260
    %v3262 = vpop.f32.mrb[0].mxu0
    %v3263 = vadd.f32 0.0, %v3262
    %3264 = vdwg.mxu0
    %3265 = vmatprep.subr.bf16.mxu0 %v2371
    %3266 = vmatpush1.bf16.msra.mxu0 %v2370
    %3267 = vmatprep.subr.bf16.mxu0 %v2387
    %3268 = vmatpush1.bf16.msra.mxu0 %v2386
    %3269 = vmatprep.subr.bf16.mxu0 %v2403
    %3270 = vmatpush1.bf16.msra.mxu0 %v2402
    %3271 = vmatprep.subr.bf16.mxu0 %v2419
    %3272 = vmatpush1.bf16.msra.mxu0 %v2418
    %3273 = vmatprep.subr.bf16.mxu0 %v2435
    %3274 = vmatpush1.bf16.msra.mxu0 %v2434
    %3275 = vmatprep.subr.bf16.mxu0 %v2451
    %3276 = vmatpush1.bf16.msra.mxu0 %v2450
    %3277 = vmatprep.subr.bf16.mxu0 %v2467
    %3278 = vmatpush1.bf16.msra.mxu0 %v2466
    %3279 = vmatprep.subr.bf16.mxu0 %v2483
    %3280 = vmatpush1.bf16.msra.mxu0 %v2482
    %3281 = vmatprep.subr.bf16.mxu0 %v2499
    %3282 = vmatpush1.bf16.msra.mxu0 %v2498
    %3283 = vmatprep.subr.bf16.mxu0 %v2515
    %3284 = vmatpush1.bf16.msra.mxu0 %v2514
    %3285 = vmatprep.subr.bf16.mxu0 %v2531
    %3286 = vmatpush1.bf16.msra.mxu0 %v2530
    %3287 = vmatprep.subr.bf16.mxu0 %v2547
    %3288 = vmatpush1.bf16.msra.mxu0 %v2546
    %3289 = vmatprep.subr.bf16.mxu0 %v2563
    %3290 = vmatpush1.bf16.msra.mxu0 %v2562
    %3291 = vmatprep.subr.bf16.mxu0 %v2579
    %3292 = vmatpush1.bf16.msra.mxu0 %v2578
    %3293 = vmatprep.subr.bf16.mxu0 %v2595
    %3294 = vmatpush1.bf16.msra.mxu0 %v2594
    %3295 = vmatprep.subr.bf16.mxu0 %v2611
    %3296 = vmatpush1.bf16.msra.mxu0 %v2610
    %3297 = vmatprep.mubr.bf16.mxu0 %v571
    %3298 = vmatmul.mubr.bf16.gmra.mrb[0].mxu0 %v570
    %v3299 = vpop.f32.mrb[0].mxu0
    %v3300 = vadd.f32 %v3257, %v3299
    %v3301 = vpop.f32.mrb[0].mxu0
    %v3302 = vadd.f32 %v3259, %v3301
    %v3303 = vpop.f32.mrb[0].mxu0
    %v3304 = vadd.f32 %v3261, %v3303
    %v3305 = vpop.f32.mrb[0].mxu0
    %v3306 = vadd.f32 %v3263, %v3305
    %3307 = vdwg.mxu0
    %3308 = vmatprep.subr.bf16.mxu0 %v2117
    %3309 = vmatpush1.bf16.msra.mxu0 %v2116
    %3310 = vmatprep.subr.bf16.mxu0 %v2133
    %3311 = vmatpush1.bf16.msra.mxu0 %v2132
    %3312 = vmatprep.subr.bf16.mxu0 %v2149
    %3313 = vmatpush1.bf16.msra.mxu0 %v2148
    %3314 = vmatprep.subr.bf16.mxu0 %v2165
    %3315 = vmatpush1.bf16.msra.mxu0 %v2164
    %3316 = vmatprep.subr.bf16.mxu0 %v2181
    %3317 = vmatpush1.bf16.msra.mxu0 %v2180
    %3318 = vmatprep.subr.bf16.mxu0 %v2197
    %3319 = vmatpush1.bf16.msra.mxu0 %v2196
    %3320 = vmatprep.subr.bf16.mxu0 %v2213
    %3321 = vmatpush1.bf16.msra.mxu0 %v2212
    %3322 = vmatprep.subr.bf16.mxu0 %v2229
    %3323 = vmatpush1.bf16.msra.mxu0 %v2228
    %3324 = vmatprep.subr.bf16.mxu0 %v2245
    %3325 = vmatpush1.bf16.msra.mxu0 %v2244
    %3326 = vmatprep.subr.bf16.mxu0 %v2261
    %3327 = vmatpush1.bf16.msra.mxu0 %v2260
    %3328 = vmatprep.subr.bf16.mxu0 %v2277
    %3329 = vmatpush1.bf16.msra.mxu0 %v2276
    %3330 = vmatprep.subr.bf16.mxu0 %v2293
    %3331 = vmatpush1.bf16.msra.mxu0 %v2292
    %3332 = vmatprep.subr.bf16.mxu0 %v2309
    %3333 = vmatpush1.bf16.msra.mxu0 %v2308
    %3334 = vmatprep.subr.bf16.mxu0 %v2325
    %3335 = vmatpush1.bf16.msra.mxu0 %v2324
    %3336 = vmatprep.subr.bf16.mxu0 %v2341
    %3337 = vmatpush1.bf16.msra.mxu0 %v2340
    %3338 = vmatprep.subr.bf16.mxu0 %v2357
    %3339 = vmatpush1.bf16.msra.mxu0 %v2356
    %3340 = vmatprep.mubr.bf16.mxu0 %v569
    %3341 = vmatmul.mubr.bf16.gmra.mrb[0].mxu0 %v568
    %v3342 = vpop.f32.mrb[0].mxu0
    %v3343 = vadd.f32 0.0, %v3342
    %v3344 = vpop.f32.mrb[0].mxu0
    %v3345 = vadd.f32 0.0, %v3344
    %v3346 = vpop.f32.mrb[0].mxu0
    %v3347 = vadd.f32 0.0, %v3346
    %v3348 = vpop.f32.mrb[0].mxu0
    %v3349 = vadd.f32 0.0, %v3348
    %3350 = vdwg.mxu0
    %3351 = vmatprep.subr.bf16.mxu0 %v2373
    %3352 = vmatpush1.bf16.msra.mxu0 %v2372
    %3353 = vmatprep.subr.bf16.mxu0 %v2389
    %3354 = vmatpush1.bf16.msra.mxu0 %v2388
    %3355 = vmatprep.subr.bf16.mxu0 %v2405
    %3356 = vmatpush1.bf16.msra.mxu0 %v2404
    %3357 = vmatprep.subr.bf16.mxu0 %v2421
    %3358 = vmatpush1.bf16.msra.mxu0 %v2420
    %3359 = vmatprep.subr.bf16.mxu0 %v2437
    %3360 = vmatpush1.bf16.msra.mxu0 %v2436
    %3361 = vmatprep.subr.bf16.mxu0 %v2453
    %3362 = vmatpush1.bf16.msra.mxu0 %v2452
    %3363 = vmatprep.subr.bf16.mxu0 %v2469
    %3364 = vmatpush1.bf16.msra.mxu0 %v2468
    %3365 = vmatprep.subr.bf16.mxu0 %v2485
    %3366 = vmatpush1.bf16.msra.mxu0 %v2484
    %3367 = vmatprep.subr.bf16.mxu0 %v2501
    %3368 = vmatpush1.bf16.msra.mxu0 %v2500
    %3369 = vmatprep.subr.bf16.mxu0 %v2517
    %3370 = vmatpush1.bf16.msra.mxu0 %v2516
    %3371 = vmatprep.subr.bf16.mxu0 %v2533
    %3372 = vmatpush1.bf16.msra.mxu0 %v2532
    %3373 = vmatprep.subr.bf16.mxu0 %v2549
    %3374 = vmatpush1.bf16.msra.mxu0 %v2548
    %3375 = vmatprep.subr.bf16.mxu0 %v2565
    %3376 = vmatpush1.bf16.msra.mxu0 %v2564
    %3377 = vmatprep.subr.bf16.mxu0 %v2581
    %3378 = vmatpush1.bf16.msra.mxu0 %v2580
    %3379 = vmatprep.subr.bf16.mxu0 %v2597
    %3380 = vmatpush1.bf16.msra.mxu0 %v2596
    %3381 = vmatprep.subr.bf16.mxu0 %v2613
    %3382 = vmatpush1.bf16.msra.mxu0 %v2612
    %3383 = vmatprep.mubr.bf16.mxu0 %v571
    %3384 = vmatmul.mubr.bf16.gmra.mrb[0].mxu0 %v570
    %v3385 = vpop.f32.mrb[0].mxu0
    %v3386 = vadd.f32 %v3343, %v3385
    %v3387 = vpop.f32.mrb[0].mxu0
    %v3388 = vadd.f32 %v3345, %v3387
    %v3389 = vpop.f32.mrb[0].mxu0
    %v3390 = vadd.f32 %v3347, %v3389
    %v3391 = vpop.f32.mrb[0].mxu0
    %v3392 = vadd.f32 %v3349, %v3391
    %3393 = vdwg.mxu0
    %3394 = vmatprep.subr.bf16.mxu0 %v2119
    %3395 = vmatpush1.bf16.msra.mxu0 %v2118
    %3396 = vmatprep.subr.bf16.mxu0 %v2135
    %3397 = vmatpush1.bf16.msra.mxu0 %v2134
    %3398 = vmatprep.subr.bf16.mxu0 %v2151
    %3399 = vmatpush1.bf16.msra.mxu0 %v2150
    %3400 = vmatprep.subr.bf16.mxu0 %v2167
    %3401 = vmatpush1.bf16.msra.mxu0 %v2166
    %3402 = vmatprep.subr.bf16.mxu0 %v2183
    %3403 = vmatpush1.bf16.msra.mxu0 %v2182
    %3404 = vmatprep.subr.bf16.mxu0 %v2199
    %3405 = vmatpush1.bf16.msra.mxu0 %v2198
    %3406 = vmatprep.subr.bf16.mxu0 %v2215
    %3407 = vmatpush1.bf16.msra.mxu0 %v2214
    %3408 = vmatprep.subr.bf16.mxu0 %v2231
    %3409 = vmatpush1.bf16.msra.mxu0 %v2230
    %3410 = vmatprep.subr.bf16.mxu0 %v2247
    %3411 = vmatpush1.bf16.msra.mxu0 %v2246
    %3412 = vmatprep.subr.bf16.mxu0 %v2263
    %3413 = vmatpush1.bf16.msra.mxu0 %v2262
    %3414 = vmatprep.subr.bf16.mxu0 %v2279
    %3415 = vmatpush1.bf16.msra.mxu0 %v2278
    %3416 = vmatprep.subr.bf16.mxu0 %v2295
    %3417 = vmatpush1.bf16.msra.mxu0 %v2294
    %3418 = vmatprep.subr.bf16.mxu0 %v2311
    %3419 = vmatpush1.bf16.msra.mxu0 %v2310
    %3420 = vmatprep.subr.bf16.mxu0 %v2327
    %3421 = vmatpush1.bf16.msra.mxu0 %v2326
    %3422 = vmatprep.subr.bf16.mxu0 %v2343
    %3423 = vmatpush1.bf16.msra.mxu0 %v2342
    %3424 = vmatprep.subr.bf16.mxu0 %v2359
    %3425 = vmatpush1.bf16.msra.mxu0 %v2358
    %3426 = vmatprep.mubr.bf16.mxu0 %v569
    %3427 = vmatmul.mubr.bf16.gmra.mrb[0].mxu0 %v568
    %v3428 = vpop.f32.mrb[0].mxu0
    %v3429 = vadd.f32 0.0, %v3428
    %v3430 = vpop.f32.mrb[0].mxu0
    %v3431 = vadd.f32 0.0, %v3430
    %v3432 = vpop.f32.mrb[0].mxu0
    %v3433 = vadd.f32 0.0, %v3432
    %v3434 = vpop.f32.mrb[0].mxu0
    %v3435 = vadd.f32 0.0, %v3434
    %3436 = vdwg.mxu0
    %3437 = vmatprep.subr.bf16.mxu0 %v2375
    %3438 = vmatpush1.bf16.msra.mxu0 %v2374
    %3439 = vmatprep.subr.bf16.mxu0 %v2391
    %3440 = vmatpush1.bf16.msra.mxu0 %v2390
    %3441 = vmatprep.subr.bf16.mxu0 %v2407
    %3442 = vmatpush1.bf16.msra.mxu0 %v2406
    %3443 = vmatprep.subr.bf16.mxu0 %v2423
    %3444 = vmatpush1.bf16.msra.mxu0 %v2422
    %3445 = vmatprep.subr.bf16.mxu0 %v2439
    %3446 = vmatpush1.bf16.msra.mxu0 %v2438
    %3447 = vmatprep.subr.bf16.mxu0 %v2455
    %3448 = vmatpush1.bf16.msra.mxu0 %v2454
    %3449 = vmatprep.subr.bf16.mxu0 %v2471
    %3450 = vmatpush1.bf16.msra.mxu0 %v2470
    %3451 = vmatprep.subr.bf16.mxu0 %v2487
    %3452 = vmatpush1.bf16.msra.mxu0 %v2486
    %3453 = vmatprep.subr.bf16.mxu0 %v2503
    %3454 = vmatpush1.bf16.msra.mxu0 %v2502
    %3455 = vmatprep.subr.bf16.mxu0 %v2519
    %3456 = vmatpush1.bf16.msra.mxu0 %v2518
    %3457 = vmatprep.subr.bf16.mxu0 %v2535
    %3458 = vmatpush1.bf16.msra.mxu0 %v2534
    %3459 = vmatprep.subr.bf16.mxu0 %v2551
    %3460 = vmatpush1.bf16.msra.mxu0 %v2550
    %3461 = vmatprep.subr.bf16.mxu0 %v2567
    %3462 = vmatpush1.bf16.msra.mxu0 %v2566
    %3463 = vmatprep.subr.bf16.mxu0 %v2583
    %3464 = vmatpush1.bf16.msra.mxu0 %v2582
    %3465 = vmatprep.subr.bf16.mxu0 %v2599
    %3466 = vmatpush1.bf16.msra.mxu0 %v2598
    %3467 = vmatprep.subr.bf16.mxu0 %v2615
    %3468 = vmatpush1.bf16.msra.mxu0 %v2614
    %3469 = vmatprep.mubr.bf16.mxu0 %v571
    %3470 = vmatmul.mubr.bf16.gmra.mrb[0].mxu0 %v570
    %v3471 = vpop.f32.mrb[0].mxu0
    %v3472 = vadd.f32 %v3429, %v3471
    %v3473 = vpop.f32.mrb[0].mxu0
    %v3474 = vadd.f32 %v3431, %v3473
    %v3475 = vpop.f32.mrb[0].mxu0
    %v3476 = vadd.f32 %v3433, %v3475
    %v3477 = vpop.f32.mrb[0].mxu0
    %v3478 = vadd.f32 %v3435, %v3477
    %3479 = vdwg.mxu0
    %3480 = vmatprep.subr.bf16.mxu0 %v2121
    %3481 = vmatpush1.bf16.msra.mxu0 %v2120
    %3482 = vmatprep.subr.bf16.mxu0 %v2137
    %3483 = vmatpush1.bf16.msra.mxu0 %v2136
    %3484 = vmatprep.subr.bf16.mxu0 %v2153
    %3485 = vmatpush1.bf16.msra.mxu0 %v2152
    %3486 = vmatprep.subr.bf16.mxu0 %v2169
    %3487 = vmatpush1.bf16.msra.mxu0 %v2168
    %3488 = vmatprep.subr.bf16.mxu0 %v2185
    %3489 = vmatpush1.bf16.msra.mxu0 %v2184
    %3490 = vmatprep.subr.bf16.mxu0 %v2201
    %3491 = vmatpush1.bf16.msra.mxu0 %v2200
    %3492 = vmatprep.subr.bf16.mxu0 %v2217
    %3493 = vmatpush1.bf16.msra.mxu0 %v2216
    %3494 = vmatprep.subr.bf16.mxu0 %v2233
    %3495 = vmatpush1.bf16.msra.mxu0 %v2232
    %3496 = vmatprep.subr.bf16.mxu0 %v2249
    %3497 = vmatpush1.bf16.msra.mxu0 %v2248
    %3498 = vmatprep.subr.bf16.mxu0 %v2265
    %3499 = vmatpush1.bf16.msra.mxu0 %v2264
    %3500 = vmatprep.subr.bf16.mxu0 %v2281
    %3501 = vmatpush1.bf16.msra.mxu0 %v2280
    %3502 = vmatprep.subr.bf16.mxu0 %v2297
    %3503 = vmatpush1.bf16.msra.mxu0 %v2296
    %3504 = vmatprep.subr.bf16.mxu0 %v2313
    %3505 = vmatpush1.bf16.msra.mxu0 %v2312
    %3506 = vmatprep.subr.bf16.mxu0 %v2329
    %3507 = vmatpush1.bf16.msra.mxu0 %v2328
    %3508 = vmatprep.subr.bf16.mxu0 %v2345
    %3509 = vmatpush1.bf16.msra.mxu0 %v2344
    %3510 = vmatprep.subr.bf16.mxu0 %v2361
    %3511 = vmatpush1.bf16.msra.mxu0 %v2360
    %3512 = vmatprep.mubr.bf16.mxu0 %v569
    %3513 = vmatmul.mubr.bf16.gmra.mrb[0].mxu0 %v568
    %v3514 = vpop.f32.mrb[0].mxu0
    %v3515 = vadd.f32 0.0, %v3514
    %v3516 = vpop.f32.mrb[0].mxu0
    %v3517 = vadd.f32 0.0, %v3516
    %v3518 = vpop.f32.mrb[0].mxu0
    %v3519 = vadd.f32 0.0, %v3518
    %v3520 = vpop.f32.mrb[0].mxu0
    %v3521 = vadd.f32 0.0, %v3520
    %3522 = vdwg.mxu0
    %3523 = vmatprep.subr.bf16.mxu0 %v2377
    %3524 = vmatpush1.bf16.msra.mxu0 %v2376
    %3525 = vmatprep.subr.bf16.mxu0 %v2393
    %3526 = vmatpush1.bf16.msra.mxu0 %v2392
    %3527 = vmatprep.subr.bf16.mxu0 %v2409
    %3528 = vmatpush1.bf16.msra.mxu0 %v2408
    %3529 = vmatprep.subr.bf16.mxu0 %v2425
    %3530 = vmatpush1.bf16.msra.mxu0 %v2424
    %3531 = vmatprep.subr.bf16.mxu0 %v2441
    %3532 = vmatpush1.bf16.msra.mxu0 %v2440
    %3533 = vmatprep.subr.bf16.mxu0 %v2457
    %3534 = vmatpush1.bf16.msra.mxu0 %v2456
    %3535 = vmatprep.subr.bf16.mxu0 %v2473
    %3536 = vmatpush1.bf16.msra.mxu0 %v2472
    %3537 = vmatprep.subr.bf16.mxu0 %v2489
    %3538 = vmatpush1.bf16.msra.mxu0 %v2488
    %3539 = vmatprep.subr.bf16.mxu0 %v2505
    %3540 = vmatpush1.bf16.msra.mxu0 %v2504
    %3541 = vmatprep.subr.bf16.mxu0 %v2521
    %3542 = vmatpush1.bf16.msra.mxu0 %v2520
    %3543 = vmatprep.subr.bf16.mxu0 %v2537
    %3544 = vmatpush1.bf16.msra.mxu0 %v2536
    %3545 = vmatprep.subr.bf16.mxu0 %v2553
    %3546 = vmatpush1.bf16.msra.mxu0 %v2552
    %3547 = vmatprep.subr.bf16.mxu0 %v2569
    %3548 = vmatpush1.bf16.msra.mxu0 %v2568
    %3549 = vmatprep.subr.bf16.mxu0 %v2585
    %3550 = vmatpush1.bf16.msra.mxu0 %v2584
    %3551 = vmatprep.subr.bf16.mxu0 %v2601
    %3552 = vmatpush1.bf16.msra.mxu0 %v2600
    %3553 = vmatprep.subr.bf16.mxu0 %v2617
    %3554 = vmatpush1.bf16.msra.mxu0 %v2616
    %3555 = vmatprep.mubr.bf16.mxu0 %v571
    %3556 = vmatmul.mubr.bf16.gmra.mrb[0].mxu0 %v570
    %v3557 = vpop.f32.mrb[0].mxu0
    %v3558 = vadd.f32 %v3515, %v3557
    %v3559 = vpop.f32.mrb[0].mxu0
    %v3560 = vadd.f32 %v3517, %v3559
    %v3561 = vpop.f32.mrb[0].mxu0
    %v3562 = vadd.f32 %v3519, %v3561
    %v3563 = vpop.f32.mrb[0].mxu0
    %v3564 = vadd.f32 %v3521, %v3563
    %3565 = vdwg.mxu0
    %3566 = vmatprep.subr.bf16.mxu0 %v2123
    %3567 = vmatpush1.bf16.msra.mxu0 %v2122
    %3568 = vmatprep.subr.bf16.mxu0 %v2139
    %3569 = vmatpush1.bf16.msra.mxu0 %v2138
    %3570 = vmatprep.subr.bf16.mxu0 %v2155
    %3571 = vmatpush1.bf16.msra.mxu0 %v2154
    %3572 = vmatprep.subr.bf16.mxu0 %v2171
    %3573 = vmatpush1.bf16.msra.mxu0 %v2170
    %3574 = vmatprep.subr.bf16.mxu0 %v2187
    %3575 = vmatpush1.bf16.msra.mxu0 %v2186
    %3576 = vmatprep.subr.bf16.mxu0 %v2203
    %3577 = vmatpush1.bf16.msra.mxu0 %v2202
    %3578 = vmatprep.subr.bf16.mxu0 %v2219
    %3579 = vmatpush1.bf16.msra.mxu0 %v2218
    %3580 = vmatprep.subr.bf16.mxu0 %v2235
    %3581 = vmatpush1.bf16.msra.mxu0 %v2234
    %3582 = vmatprep.subr.bf16.mxu0 %v2251
    %3583 = vmatpush1.bf16.msra.mxu0 %v2250
    %3584 = vmatprep.subr.bf16.mxu0 %v2267
    %3585 = vmatpush1.bf16.msra.mxu0 %v2266
    %3586 = vmatprep.subr.bf16.mxu0 %v2283
    %3587 = vmatpush1.bf16.msra.mxu0 %v2282
    %3588 = vmatprep.subr.bf16.mxu0 %v2299
    %3589 = vmatpush1.bf16.msra.mxu0 %v2298
    %3590 = vmatprep.subr.bf16.mxu0 %v2315
    %3591 = vmatpush1.bf16.msra.mxu0 %v2314
    %3592 = vmatprep.subr.bf16.mxu0 %v2331
    %3593 = vmatpush1.bf16.msra.mxu0 %v2330
    %3594 = vmatprep.subr.bf16.mxu0 %v2347
    %3595 = vmatpush1.bf16.msra.mxu0 %v2346
    %3596 = vmatprep.subr.bf16.mxu0 %v2363
    %3597 = vmatpush1.bf16.msra.mxu0 %v2362
    %3598 = vmatprep.mubr.bf16.mxu0 %v569
    %3599 = vmatmul.mubr.bf16.gmra.mrb[0].mxu0 %v568
    %v3600 = vpop.f32.mrb[0].mxu0
    %v3601 = vadd.f32 0.0, %v3600
    %v3602 = vpop.f32.mrb[0].mxu0
    %v3603 = vadd.f32 0.0, %v3602
    %v3604 = vpop.f32.mrb[0].mxu0
    %v3605 = vadd.f32 0.0, %v3604
    %v3606 = vpop.f32.mrb[0].mxu0
    %v3607 = vadd.f32 0.0, %v3606
    %3608 = vdwg.mxu0
    %3609 = vmatprep.subr.bf16.mxu0 %v2379
    %3610 = vmatpush1.bf16.msra.mxu0 %v2378
    %3611 = vmatprep.subr.bf16.mxu0 %v2395
    %3612 = vmatpush1.bf16.msra.mxu0 %v2394
    %3613 = vmatprep.subr.bf16.mxu0 %v2411
    %3614 = vmatpush1.bf16.msra.mxu0 %v2410
    %3615 = vmatprep.subr.bf16.mxu0 %v2427
    %3616 = vmatpush1.bf16.msra.mxu0 %v2426
    %3617 = vmatprep.subr.bf16.mxu0 %v2443
    %3618 = vmatpush1.bf16.msra.mxu0 %v2442
    %3619 = vmatprep.subr.bf16.mxu0 %v2459
    %3620 = vmatpush1.bf16.msra.mxu0 %v2458
    %3621 = vmatprep.subr.bf16.mxu0 %v2475
    %3622 = vmatpush1.bf16.msra.mxu0 %v2474
    %3623 = vmatprep.subr.bf16.mxu0 %v2491
    %3624 = vmatpush1.bf16.msra.mxu0 %v2490
    %3625 = vmatprep.subr.bf16.mxu0 %v2507
    %3626 = vmatpush1.bf16.msra.mxu0 %v2506
    %3627 = vmatprep.subr.bf16.mxu0 %v2523
    %3628 = vmatpush1.bf16.msra.mxu0 %v2522
    %3629 = vmatprep.subr.bf16.mxu0 %v2539
    %3630 = vmatpush1.bf16.msra.mxu0 %v2538
    %3631 = vmatprep.subr.bf16.mxu0 %v2555
    %3632 = vmatpush1.bf16.msra.mxu0 %v2554
    %3633 = vmatprep.subr.bf16.mxu0 %v2571
    %3634 = vmatpush1.bf16.msra.mxu0 %v2570
    %3635 = vmatprep.subr.bf16.mxu0 %v2587
    %3636 = vmatpush1.bf16.msra.mxu0 %v2586
    %3637 = vmatprep.subr.bf16.mxu0 %v2603
    %3638 = vmatpush1.bf16.msra.mxu0 %v2602
    %3639 = vmatprep.subr.bf16.mxu0 %v2619
    %3640 = vmatpush1.bf16.msra.mxu0 %v2618
    %3641 = vmatprep.mubr.bf16.mxu0 %v571
    %3642 = vmatmul.mubr.bf16.gmra.mrb[0].mxu0 %v570
    %v3643 = vpop.f32.mrb[0].mxu0
    %v3644 = vadd.f32 %v3601, %v3643
    %v3645 = vpop.f32.mrb[0].mxu0
    %v3646 = vadd.f32 %v3603, %v3645
    %v3647 = vpop.f32.mrb[0].mxu0
    %v3648 = vadd.f32 %v3605, %v3647
    %v3649 = vpop.f32.mrb[0].mxu0
    %v3650 = vadd.f32 %v3607, %v3649
    %3651 = vdwg.mxu0
    %3652 = vmatprep.subr.bf16.mxu0 %v2125
    %3653 = vmatpush1.bf16.msra.mxu0 %v2124
    %3654 = vmatprep.subr.bf16.mxu0 %v2141
    %3655 = vmatpush1.bf16.msra.mxu0 %v2140
    %3656 = vmatprep.subr.bf16.mxu0 %v2157
    %3657 = vmatpush1.bf16.msra.mxu0 %v2156
    %3658 = vmatprep.subr.bf16.mxu0 %v2173
    %3659 = vmatpush1.bf16.msra.mxu0 %v2172
    %3660 = vmatprep.subr.bf16.mxu0 %v2189
    %3661 = vmatpush1.bf16.msra.mxu0 %v2188
    %3662 = vmatprep.subr.bf16.mxu0 %v2205
    %3663 = vmatpush1.bf16.msra.mxu0 %v2204
    %3664 = vmatprep.subr.bf16.mxu0 %v2221
    %3665 = vmatpush1.bf16.msra.mxu0 %v2220
    %3666 = vmatprep.subr.bf16.mxu0 %v2237
    %3667 = vmatpush1.bf16.msra.mxu0 %v2236
    %3668 = vmatprep.subr.bf16.mxu0 %v2253
    %3669 = vmatpush1.bf16.msra.mxu0 %v2252
    %3670 = vmatprep.subr.bf16.mxu0 %v2269
    %3671 = vmatpush1.bf16.msra.mxu0 %v2268
    %3672 = vmatprep.subr.bf16.mxu0 %v2285
    %3673 = vmatpush1.bf16.msra.mxu0 %v2284
    %3674 = vmatprep.subr.bf16.mxu0 %v2301
    %3675 = vmatpush1.bf16.msra.mxu0 %v2300
    %3676 = vmatprep.subr.bf16.mxu0 %v2317
    %3677 = vmatpush1.bf16.msra.mxu0 %v2316
    %3678 = vmatprep.subr.bf16.mxu0 %v2333
    %3679 = vmatpush1.bf16.msra.mxu0 %v2332
    %3680 = vmatprep.subr.bf16.mxu0 %v2349
    %3681 = vmatpush1.bf16.msra.mxu0 %v2348
    %3682 = vmatprep.subr.bf16.mxu0 %v2365
    %3683 = vmatpush1.bf16.msra.mxu0 %v2364
    %3684 = vmatprep.mubr.bf16.mxu0 %v569
    %3685 = vmatmul.mubr.bf16.gmra.mrb[0].mxu0 %v568
    %v3686 = vpop.f32.mrb[0].mxu0
    %v3687 = vadd.f32 0.0, %v3686
    %v3688 = vpop.f32.mrb[0].mxu0
    %v3689 = vadd.f32 0.0, %v3688
    %v3690 = vpop.f32.mrb[0].mxu0
    %v3691 = vadd.f32 0.0, %v3690
    %v3692 = vpop.f32.mrb[0].mxu0
    %v3693 = vadd.f32 0.0, %v3692
    %3694 = vdwg.mxu0
    %3695 = vmatprep.subr.bf16.mxu0 %v2381
    %3696 = vmatpush1.bf16.msra.mxu0 %v2380
    %3697 = vmatprep.subr.bf16.mxu0 %v2397
    %3698 = vmatpush1.bf16.msra.mxu0 %v2396
    %3699 = vmatprep.subr.bf16.mxu0 %v2413
    %3700 = vmatpush1.bf16.msra.mxu0 %v2412
    %3701 = vmatprep.subr.bf16.mxu0 %v2429
    %3702 = vmatpush1.bf16.msra.mxu0 %v2428
    %3703 = vmatprep.subr.bf16.mxu0 %v2445
    %3704 = vmatpush1.bf16.msra.mxu0 %v2444
    %3705 = vmatprep.subr.bf16.mxu0 %v2461
    %3706 = vmatpush1.bf16.msra.mxu0 %v2460
    %3707 = vmatprep.subr.bf16.mxu0 %v2477
    %3708 = vmatpush1.bf16.msra.mxu0 %v2476
    %3709 = vmatprep.subr.bf16.mxu0 %v2493
    %3710 = vmatpush1.bf16.msra.mxu0 %v2492
    %3711 = vmatprep.subr.bf16.mxu0 %v2509
    %3712 = vmatpush1.bf16.msra.mxu0 %v2508
    %3713 = vmatprep.subr.bf16.mxu0 %v2525
    %3714 = vmatpush1.bf16.msra.mxu0 %v2524
    %3715 = vmatprep.subr.bf16.mxu0 %v2541
    %3716 = vmatpush1.bf16.msra.mxu0 %v2540
    %3717 = vmatprep.subr.bf16.mxu0 %v2557
    %3718 = vmatpush1.bf16.msra.mxu0 %v2556
    %3719 = vmatprep.subr.bf16.mxu0 %v2573
    %3720 = vmatpush1.bf16.msra.mxu0 %v2572
    %3721 = vmatprep.subr.bf16.mxu0 %v2589
    %3722 = vmatpush1.bf16.msra.mxu0 %v2588
    %3723 = vmatprep.subr.bf16.mxu0 %v2605
    %3724 = vmatpush1.bf16.msra.mxu0 %v2604
    %3725 = vmatprep.subr.bf16.mxu0 %v2621
    %3726 = vmatpush1.bf16.msra.mxu0 %v2620
    %3727 = vmatprep.mubr.bf16.mxu0 %v571
    %3728 = vmatmul.mubr.bf16.gmra.mrb[0].mxu0 %v570
    %v3729 = vpop.f32.mrb[0].mxu0
    %v3730 = vadd.f32 %v3687, %v3729
    %v3731 = vpop.f32.mrb[0].mxu0
    %v3732 = vadd.f32 %v3689, %v3731
    %v3733 = vpop.f32.mrb[0].mxu0
    %v3734 = vadd.f32 %v3691, %v3733
    %v3735 = vpop.f32.mrb[0].mxu0
    %v3736 = vadd.f32 %v3693, %v3735
    %3737 = vdwg.mxu0
    %3738 = vmatprep.subr.bf16.mxu0 %v2127
    %3739 = vmatpush1.bf16.msra.mxu0 %v2126
    %3740 = vmatprep.subr.bf16.mxu0 %v2143
    %3741 = vmatpush1.bf16.msra.mxu0 %v2142
    %3742 = vmatprep.subr.bf16.mxu0 %v2159
    %3743 = vmatpush1.bf16.msra.mxu0 %v2158
    %3744 = vmatprep.subr.bf16.mxu0 %v2175
    %3745 = vmatpush1.bf16.msra.mxu0 %v2174
    %3746 = vmatprep.subr.bf16.mxu0 %v2191
    %3747 = vmatpush1.bf16.msra.mxu0 %v2190
    %3748 = vmatprep.subr.bf16.mxu0 %v2207
    %3749 = vmatpush1.bf16.msra.mxu0 %v2206
    %3750 = vmatprep.subr.bf16.mxu0 %v2223
    %3751 = vmatpush1.bf16.msra.mxu0 %v2222
    %3752 = vmatprep.subr.bf16.mxu0 %v2239
    %3753 = vmatpush1.bf16.msra.mxu0 %v2238
    %3754 = vmatprep.subr.bf16.mxu0 %v2255
    %3755 = vmatpush1.bf16.msra.mxu0 %v2254
    %3756 = vmatprep.subr.bf16.mxu0 %v2271
    %3757 = vmatpush1.bf16.msra.mxu0 %v2270
    %3758 = vmatprep.subr.bf16.mxu0 %v2287
    %3759 = vmatpush1.bf16.msra.mxu0 %v2286
    %3760 = vmatprep.subr.bf16.mxu0 %v2303
    %3761 = vmatpush1.bf16.msra.mxu0 %v2302
    %3762 = vmatprep.subr.bf16.mxu0 %v2319
    %3763 = vmatpush1.bf16.msra.mxu0 %v2318
    %3764 = vmatprep.subr.bf16.mxu0 %v2335
    %3765 = vmatpush1.bf16.msra.mxu0 %v2334
    %3766 = vmatprep.subr.bf16.mxu0 %v2351
    %3767 = vmatpush1.bf16.msra.mxu0 %v2350
    %3768 = vmatprep.subr.bf16.mxu0 %v2367
    %3769 = vmatpush1.bf16.msra.mxu0 %v2366
    %3770 = vmatprep.mubr.bf16.mxu0 %v569
    %3771 = vmatmul.mubr.bf16.gmra.mrb[0].mxu0 %v568
    %v3772 = vpop.f32.mrb[0].mxu0
    %v3773 = vadd.f32 0.0, %v3772
    %v3774 = vpop.f32.mrb[0].mxu0
    %v3775 = vadd.f32 0.0, %v3774
    %v3776 = vpop.f32.mrb[0].mxu0
    %v3777 = vadd.f32 0.0, %v3776
    %v3778 = vpop.f32.mrb[0].mxu0
    %v3779 = vadd.f32 0.0, %v3778
    %3780 = vdwg.mxu0
    %3781 = vmatprep.subr.bf16.mxu0 %v2383
    %3782 = vmatpush1.bf16.msra.mxu0 %v2382
    %3783 = vmatprep.subr.bf16.mxu0 %v2399
    %3784 = vmatpush1.bf16.msra.mxu0 %v2398
    %3785 = vmatprep.subr.bf16.mxu0 %v2415
    %3786 = vmatpush1.bf16.msra.mxu0 %v2414
    %3787 = vmatprep.subr.bf16.mxu0 %v2431
    %3788 = vmatpush1.bf16.msra.mxu0 %v2430
    %3789 = vmatprep.subr.bf16.mxu0 %v2447
    %3790 = vmatpush1.bf16.msra.mxu0 %v2446
    %3791 = vmatprep.subr.bf16.mxu0 %v2463
    %3792 = vmatpush1.bf16.msra.mxu0 %v2462
    %3793 = vmatprep.subr.bf16.mxu0 %v2479
    %3794 = vmatpush1.bf16.msra.mxu0 %v2478
    %3795 = vmatprep.subr.bf16.mxu0 %v2495
    %3796 = vmatpush1.bf16.msra.mxu0 %v2494
    %3797 = vmatprep.subr.bf16.mxu0 %v2511
    %3798 = vmatpush1.bf16.msra.mxu0 %v2510
    %3799 = vmatprep.subr.bf16.mxu0 %v2527
    %3800 = vmatpush1.bf16.msra.mxu0 %v2526
    %3801 = vmatprep.subr.bf16.mxu0 %v2543
    %3802 = vmatpush1.bf16.msra.mxu0 %v2542
    %3803 = vmatprep.subr.bf16.mxu0 %v2559
    %3804 = vmatpush1.bf16.msra.mxu0 %v2558
    %3805 = vmatprep.subr.bf16.mxu0 %v2575
    %3806 = vmatpush1.bf16.msra.mxu0 %v2574
    %3807 = vmatprep.subr.bf16.mxu0 %v2591
    %3808 = vmatpush1.bf16.msra.mxu0 %v2590
    %3809 = vmatprep.subr.bf16.mxu0 %v2607
    %3810 = vmatpush1.bf16.msra.mxu0 %v2606
    %3811 = vmatprep.subr.bf16.mxu0 %v2623
    %3812 = vmatpush1.bf16.msra.mxu0 %v2622
    %3813 = vmatprep.mubr.bf16.mxu0 %v571
    %3814 = vmatmul.mubr.bf16.gmra.mrb[0].mxu0 %v570
    %v3815 = vpop.f32.mrb[0].mxu0
    %v3816 = vadd.f32 %v3773, %v3815
    %v3817 = vpop.f32.mrb[0].mxu0
    %v3818 = vadd.f32 %v3775, %v3817
    %v3819 = vpop.f32.mrb[0].mxu0
    %v3820 = vadd.f32 %v3777, %v3819
    %v3821 = vpop.f32.mrb[0].mxu0
    %v3822 = vadd.f32 %v3779, %v3821
    %3823 = vdwg.mxu0
    %v3824 = vpack.c.bf16 %v3218, %v3214
    %v3825 = vpack.c.bf16 %v3220, %v3216
    %v3826 = vpack.c.bf16 %v3304, %v3300
    %v3827 = vpack.c.bf16 %v3306, %v3302
    %v3828 = vpack.c.bf16 %v3390, %v3386
    %v3829 = vpack.c.bf16 %v3392, %v3388
    %v3830 = vpack.c.bf16 %v3476, %v3472
    %v3831 = vpack.c.bf16 %v3478, %v3474
    %v3832 = vpack.c.bf16 %v3562, %v3558
    %v3833 = vpack.c.bf16 %v3564, %v3560
    %v3834 = vpack.c.bf16 %v3648, %v3644
    %v3835 = vpack.c.bf16 %v3650, %v3646
    %v3836 = vpack.c.bf16 %v3734, %v3730
    %v3837 = vpack.c.bf16 %v3736, %v3732
    %v3838 = vpack.c.bf16 %v3820, %v3816
    %v3839 = vpack.c.bf16 %v3822, %v3818
    %v3856 = vunpack.c.l.b16 %v3824
    %v3857 = vunpack.c.l.b16 %v3825
    %v3858 = vunpack.c.l.b16 %v3826
    %v3859 = vunpack.c.l.b16 %v3827
    %v3860 = vunpack.c.l.b16 %v3828
    %v3861 = vunpack.c.l.b16 %v3829
    %v3862 = vunpack.c.l.b16 %v3830
    %v3863 = vunpack.c.l.b16 %v3831
    %v3864 = vunpack.c.l.b16 %v3832
    %v3865 = vunpack.c.l.b16 %v3833
    %v3866 = vunpack.c.l.b16 %v3834
    %v3867 = vunpack.c.l.b16 %v3835
    %v3868 = vunpack.c.l.b16 %v3836
    %v3869 = vunpack.c.l.b16 %v3837
    %v3870 = vunpack.c.l.b16 %v3838
    %v3871 = vunpack.c.l.b16 %v3839
    %v3872 = vunpack.c.h.b16 %v3824
    %v3873 = vunpack.c.h.b16 %v3825
    %v3874 = vunpack.c.h.b16 %v3826
    %v3875 = vunpack.c.h.b16 %v3827
    %v3876 = vunpack.c.h.b16 %v3828
    %v3877 = vunpack.c.h.b16 %v3829
    %v3878 = vunpack.c.h.b16 %v3830
    %v3879 = vunpack.c.h.b16 %v3831
    %v3880 = vunpack.c.h.b16 %v3832
    %v3881 = vunpack.c.h.b16 %v3833
    %v3882 = vunpack.c.h.b16 %v3834
    %v3883 = vunpack.c.h.b16 %v3835
    %v3884 = vunpack.c.h.b16 %v3836
    %v3885 = vunpack.c.h.b16 %v3837
    %v3886 = vunpack.c.h.b16 %v3838
    %v3887 = vunpack.c.h.b16 %v3839
    %v3888 = vpack.c.b16 %v3857, %v3856
    %v3889 = vpack.c.b16 %v3859, %v3858
    %v3890 = vpack.c.b16 %v3861, %v3860
    %v3891 = vpack.c.b16 %v3863, %v3862
    %v3892 = vpack.c.b16 %v3865, %v3864
    %v3893 = vpack.c.b16 %v3867, %v3866
    %v3894 = vpack.c.b16 %v3869, %v3868
    %v3895 = vpack.c.b16 %v3871, %v3870
    %v3896 = vpack.c.b16 %v3873, %v3872
    %v3897 = vpack.c.b16 %v3875, %v3874
    %v3898 = vpack.c.b16 %v3877, %v3876
    %v3899 = vpack.c.b16 %v3879, %v3878
    %v3900 = vpack.c.b16 %v3881, %v3880
    %v3901 = vpack.c.b16 %v3883, %v3882
    %v3902 = vpack.c.b16 %v3885, %v3884
    %v3903 = vpack.c.b16 %v3887, %v3886
    %3920 = vst [vmem:[#allocation7] sm:$0xff] %v3888
    %3921 = vst [vmem:[#allocation7 + $0x8] sm:$0xff] %v3889
    %3922 = vst [vmem:[#allocation7 + $0x10] sm:$0xff] %v3890
    %3923 = vst [vmem:[#allocation7 + $0x18] sm:$0xff] %v3891
    %3924 = vst [vmem:[#allocation7 + $0x20] sm:$0xff] %v3892
    %3925 = vst [vmem:[#allocation7 + $0x28] sm:$0xff] %v3893
    %3926 = vst [vmem:[#allocation7 + $0x30] sm:$0xff] %v3894
    %3927 = vst [vmem:[#allocation7 + $0x38] sm:$0xff] %v3895
    %3928 = vst [vmem:[#allocation7 + $0x40] sm:$0xff] %v3896
    %3929 = vst [vmem:[#allocation7 + $0x48] sm:$0xff] %v3897
    %3930 = vst [vmem:[#allocation7 + $0x50] sm:$0xff] %v3898
    %3931 = vst [vmem:[#allocation7 + $0x58] sm:$0xff] %v3899
    %3932 = vst [vmem:[#allocation7 + $0x60] sm:$0xff] %v3900
    %3933 = vst [vmem:[#allocation7 + $0x68] sm:$0xff] %v3901
    %3934 = vst [vmem:[#allocation7 + $0x70] sm:$0xff] %v3902
    %3935 = vst [vmem:[#allocation7 + $0x78] sm:$0xff] %v3903
    // Predicated region
    $region18: #{tpu_custom_call.1} parent=1 // pred_check
      _
    $region19: #{tpu_custom_call.1} parent=1 // pred_check_branch
      %3937 = sbr.rel (0) target = $region21
    $region20: #{tpu_custom_call.1} parent=1 // pred_region
      %s3939 = ssub.s32 2048, 2048
      %3940 = vsyncadd [#allocation4], %s3939
      %s3941 = sshll.u32 [#allocation7], 4
      %s3942 = int_to_ptr.vmem [resolvable:$true] %s3941
      %3947 = dma.vmem_to_hbm [thread:$0]  %s3942, 2048, %s2, [#allocation4], 1024, 1024, 64
    $region21: #{tpu_custom_call.1} parent=1 // pred_fallthru
      _
    // Predicated region
    $region22: #{tpu_custom_call.1} parent=1 // pred_check
      _
    $region23: #{tpu_custom_call.1} parent=1 // pred_check_branch
      %3949 = sbr.rel (0) target = $region25
    $region24: #{tpu_custom_call.1} parent=1 // pred_region
      %3950 = dma.done [#allocation4], 2048
    $region25: #{tpu_custom_call.1} parent=1 // pred_fallthru
      _
    %3951 = vsyncpa [#allocation3], 1
    %3952 = vsyncpa [#allocation6], 1
    %3953 = vsyncpa [#allocation4], 1

</llo_original>
